<compile_context>
chip_gen: v6e
topology: v6e:2x2x1
jax: 0.10.0
libtpu: 0.0.40
codegen_flags: <defaults>
</compile_context>

<pallas_src>
import functools

import jax
import jax.numpy as jnp
from jax import lax
from jax.experimental import pallas as pl
from jax.experimental.pallas import tpu as pltpu

EPS = 1e-5  # nn.BatchNorm2d default eps


def _conv_block_kernel(x_ref, w1_ref, b1_ref, g1_ref, be1_ref,
                       w2_ref, b2_ref, g2_ref, be2_ref, sel_ref, bcast_ref,
                       o_ref, xp1_ref, xp2_ref, *, N, H, W, cin, cout):
    # x_ref     : (N, H, W*cin)          lane-dense input activation, f32
    # w1_ref    : (9, W*cin,  W*cout)    per-tap block-diagonal weights, bf16
    # w2_ref    : (9, W*cout, W*cout)    per-tap block-diagonal weights, bf16
    # b*_ref    : (1, W*cout)            conv bias tiled along lanes, f32
    # g*/be*_ref: (1, cout)              BN gamma / beta, f32
    # sel_ref   : (W*cout, cout)         0/1 lane->channel selector, f32
    # bcast_ref : (cout, W*cout)         0/1 channel->lane broadcaster, f32
    # o_ref     : (N, H, W*cout)         lane-dense output, f32
    # xp1_ref   : (N, H+2, (W+2)*cin)    zero-padded layer-1 input scratch
    # xp2_ref   : (N, H+2, (W+2)*cout)   zero-padded layer-2 input scratch
    f32 = jnp.float32
    inv_cnt = 1.0 / float(N * H * W)
    ones_row = jnp.ones((1, H), f32)          # row-sum done on the MXU

    b1_wc = b1_ref[...]
    b2_wc = b2_ref[...]
    sel = sel_ref[...]
    bcast = bcast_ref[...]

    def conv3x3(xp_ref, w_ref, b_wc, n, c_in):
        """3x3 conv of image n: 9 accumulated lane-dense bf16 MXU matmuls."""
        acc = jnp.zeros((H, W * cout), f32)
        for kh in range(3):
            for kw in range(3):
                # per-tap Ref slice (no whole-scratch register load)
                tap = xp_ref[n, kh:kh + H, kw * c_in:(kw + W) * c_in]
                acc += jnp.dot(tap.astype(jnp.bfloat16),
                               w_ref[kh * 3 + kw],
                               preferred_element_type=f32)
        return acc + b_wc                     # (H, W*cout), lane = w*cout + c

    # ---- zero the padded scratches (single invocation => done exactly once;
    #      only the halo actually needs to stay 0) ---------------------------
    xp1_ref[...] = jnp.zeros(xp1_ref.shape, xp1_ref.dtype)
    xp2_ref[...] = jnp.zeros(xp2_ref.shape, xp2_ref.dtype)

    # ---- layer 1: pad, conv, fused batch statistics ------------------------
    rs1 = jnp.zeros((1, W * cout), f32)
    rq1 = jnp.zeros((1, W * cout), f32)
    for n in range(N):
        xp1_ref[n, 1:H + 1, cin:(W + 1) * cin] = x_ref[n]
        y = conv3x3(xp1_ref, w1_ref, b1_wc, n, cin)
        rs1 += jnp.dot(ones_row, y, preferred_element_type=f32)
        rq1 += jnp.dot(ones_row, y * y, preferred_element_type=f32)
        # stash raw conv1 output in the interior of the layer-2 scratch
        xp2_ref[n, 1:H + 1, cout:(W + 1) * cout] = y

    s1 = jnp.dot(rs1, sel, preferred_element_type=f32)     # (1, cout)
    q1 = jnp.dot(rq1, sel, preferred_element_type=f32)
    m1 = s1 * inv_cnt
    v1 = jnp.maximum(q1 * inv_cnt - m1 * m1, 0.0)           # clamp E[x^2]-m^2
    scale1 = g1_ref[...] * lax.rsqrt(v1 + EPS)
    shift1 = be1_ref[...] - m1 * scale1
    scale1_wc = jnp.dot(scale1, bcast, preferred_element_type=f32)  # (1, W*cout)
    shift1_wc = jnp.dot(shift1, bcast, preferred_element_type=f32)

    # ---- BN1 + ReLU applied in place to the interior (halo stays 0) --------
    y1 = xp2_ref[:, 1:H + 1, cout:(W + 1) * cout]
    xp2_ref[:, 1:H + 1, cout:(W + 1) * cout] = jnp.maximum(
        y1 * scale1_wc + shift1_wc, 0.0)

    # ---- layer 2: conv, fused batch statistics, raw output into o_ref ------
    rs2 = jnp.zeros((1, W * cout), f32)
    rq2 = jnp.zeros((1, W * cout), f32)
    for n in range(N):
        y = conv3x3(xp2_ref, w2_ref, b2_wc, n, cout)
        rs2 += jnp.dot(ones_row, y, preferred_element_type=f32)
        rq2 += jnp.dot(ones_row, y * y, preferred_element_type=f32)
        o_ref[n] = y

    s2 = jnp.dot(rs2, sel, preferred_element_type=f32)
    q2 = jnp.dot(rq2, sel, preferred_element_type=f32)
    m2 = s2 * inv_cnt
    v2 = jnp.maximum(q2 * inv_cnt - m2 * m2, 0.0)
    scale2 = g2_ref[...] * lax.rsqrt(v2 + EPS)
    shift2 = be2_ref[...] - m2 * scale2
    scale2_wc = jnp.dot(scale2, bcast, preferred_element_type=f32)
    shift2_wc = jnp.dot(shift2, bcast, preferred_element_type=f32)

    # ---- BN2 + ReLU in place over the lane-dense output block --------------
    o_ref[...] = jnp.maximum(o_ref[...] * scale2_wc + shift2_wc, 0.0)


def _blockdiag_taps(w_hwio, Wdim):
    """(3,3,cin,cout) HWIO -> (9, W*cin, W*cout) bf16 per-tap block-diagonal."""
    _, _, ci, co = w_hwio.shape
    taps = w_hwio.reshape(9, ci, co)
    eye = jnp.eye(Wdim, dtype=w_hwio.dtype)
    bd = jnp.einsum('wv,tio->twivo', eye, taps)      # (9, W, ci, W, co)
    return bd.reshape(9, Wdim * ci, Wdim * co).astype(jnp.bfloat16)


@jax.jit
def conv_block_forward(x_nchw, params):
    N, Cin, H, W = x_nchw.shape
    Cout = params["w1"].shape[-1]
    f32 = jnp.float32

    # TODO(synk): at production scale accept/return NHWC directly; these
    #             relayouts are an extra HBM pass done by XLA (toy-scale here).
    x = jnp.transpose(x_nchw, (0, 2, 3, 1)).reshape(N, H, W * Cin)

    w1 = _blockdiag_taps(params["w1"], W)             # (9, W*Cin,  W*Cout)
    w2 = _blockdiag_taps(params["w2"], W)             # (9, W*Cout, W*Cout)
    b1_wc = jnp.tile(params["b1"].reshape(1, Cout), (1, W)).astype(f32)
    b2_wc = jnp.tile(params["b2"].reshape(1, Cout), (1, W)).astype(f32)
    sel = jnp.tile(jnp.eye(Cout, dtype=f32), (W, 1))   # (W*Cout, Cout)
    bcast = sel.T                                      # (Cout, W*Cout)

    kern = functools.partial(_conv_block_kernel, N=N, H=H, W=W,
                             cin=Cin, cout=Cout)
    y = pl.pallas_call(
        kern,
        out_shape=jax.ShapeDtypeStruct((N, H, W * Cout), f32),
        scratch_shapes=[
            pltpu.VMEM((N, H + 2, (W + 2) * Cin), f32),
            pltpu.VMEM((N, H + 2, (W + 2) * Cout), f32),
        ],
    )(x, w1, b1_wc,
      params["g1"].reshape(1, Cout).astype(f32),
      params["be1"].reshape(1, Cout).astype(f32),
      w2, b2_wc,
      params["g2"].reshape(1, Cout).astype(f32),
      params["be2"].reshape(1, Cout).astype(f32),
      sel, bcast)

    return jnp.transpose(y.reshape(N, H, W, Cout), (0, 3, 1, 2))


# ---------------------------------------------------------------------------
# Precision-matched pure-JAX reference (bf16 conv inputs, f32 accumulation /
# f32 batch statistics -- exactly mirroring the kernel's numerics).
# ---------------------------------------------------------------------------
def _reference(x_nchw, params):
    x = jnp.transpose(x_nchw, (0, 2, 3, 1))

    def block(x, w, b, g, be):
        y = lax.conv_general_dilated(
            x.astype(jnp.bfloat16), w.astype(jnp.bfloat16), (1, 1), "SAME",
            dimension_numbers=("NHWC", "HWIO", "NHWC"),
            preferred_element_type=jnp.float32) + b
        m = jnp.mean(y, axis=(0, 1, 2))
        v = jnp.var(y, axis=(0, 1, 2))
        y = (y - m) / jnp.sqrt(v + EPS) * g + be
        return jnp.maximum(y, 0.0)

    y = block(x, params["w1"], params["b1"], params["g1"], params["be1"])
    y = block(y, params["w2"], params["b2"], params["g2"], params["be2"])
    return jnp.transpose(y, (0, 3, 1, 2))


if __name__ == "__main__":
    N, Cin, Cout, H, W = 2, 4, 8, 16, 16
    key = jax.random.PRNGKey(0)
    k = jax.random.split(key, 5)

    x = jax.random.normal(k[0], (N, Cin, H, W), jnp.float32)

    params = {
        # Conv2d(ch_in, ch_out, 3, 1, 1, bias=True) weights, HWIO layout
        "w1": 0.1 * jax.random.normal(k[1], (3, 3, Cin, Cout), jnp.float32),
        "b1": 0.1 * jax.random.normal(k[2], (Cout,), jnp.float32),
        # BatchNorm2d defaults: gamma=1, beta=0
        "g1": jnp.ones((Cout,), jnp.float32),
        "be1": jnp.zeros((Cout,), jnp.float32),
        "w2": 0.1 * jax.random.normal(k[3], (3, 3, Cout, Cout), jnp.float32),
        "b2": 0.1 * jax.random.normal(k[4], (Cout,), jnp.float32),
        "g2": jnp.ones((Cout,), jnp.float32),
        "be2": jnp.zeros((Cout,), jnp.float32),
    }

    out = jax.block_until_ready(conv_block_forward(x, params))
    ref = jax.block_until_ready(_reference(x, params))

    assert out.shape == (N, Cout, H, W), out.shape
    max_err = float(jnp.max(jnp.abs(out - ref)))
    assert max_err < 2e-3, max_err
    print("KERNEL_OK")
</pallas_src>

<mosaic_0001>
module attributes {stable_mosaic.version = 11 : i64} {
  func.func @_conv_block_kernel(%arg0: memref<2x16x64xf32, #tpu.memory_space<vmem>>, %arg1: memref<9x64x128xbf16, #tpu.memory_space<vmem>>, %arg2: memref<1x128xf32, #tpu.memory_space<vmem>>, %arg3: memref<1x8xf32, #tpu.memory_space<vmem>>, %arg4: memref<1x8xf32, #tpu.memory_space<vmem>>, %arg5: memref<9x128x128xbf16, #tpu.memory_space<vmem>>, %arg6: memref<1x128xf32, #tpu.memory_space<vmem>>, %arg7: memref<1x8xf32, #tpu.memory_space<vmem>>, %arg8: memref<1x8xf32, #tpu.memory_space<vmem>>, %arg9: memref<128x8xf32, #tpu.memory_space<vmem>>, %arg10: memref<8x128xf32, #tpu.memory_space<vmem>>, %arg11: memref<2x16x128xf32, #tpu.memory_space<vmem>>, %arg12: memref<2x18x72xf32, #tpu.memory_space<vmem>>, %arg13: memref<2x18x144xf32, #tpu.memory_space<vmem>>) attributes {dimension_semantics = [], scalar_prefetch = 0 : i64, scratch_operands = 2 : i64, tpu.core_type = #tpu.core_type<tc>} {
    %cst = arith.constant 1.000000e+00 : f32
    %0 = vector.broadcast %cst : f32 to vector<1x16xf32>
    %c0 = arith.constant 0 : index
    %c0_0 = arith.constant 0 : index
    %1 = vector.load %arg2[%c0, %c0_0] : memref<1x128xf32, #tpu.memory_space<vmem>>, vector<1x128xf32>
    %c0_1 = arith.constant 0 : index
    %c0_2 = arith.constant 0 : index
    %2 = vector.load %arg6[%c0_1, %c0_2] : memref<1x128xf32, #tpu.memory_space<vmem>>, vector<1x128xf32>
    %c0_3 = arith.constant 0 : index
    %c0_4 = arith.constant 0 : index
    %3 = vector.load %arg9[%c0_3, %c0_4] : memref<128x8xf32, #tpu.memory_space<vmem>>, vector<128x8xf32>
    %c0_5 = arith.constant 0 : index
    %c0_6 = arith.constant 0 : index
    %4 = vector.load %arg10[%c0_5, %c0_6] : memref<8x128xf32, #tpu.memory_space<vmem>>, vector<8x128xf32>
    %cst_7 = arith.constant 0.000000e+00 : f32
    %5 = vector.broadcast %cst_7 : f32 to vector<2x18x72xf32>
    %c0_8 = arith.constant 0 : index
    %c0_9 = arith.constant 0 : index
    %c0_10 = arith.constant 0 : index
    %6 = vector.load %arg12[%c0_8, %c0_9, %c0_10] : memref<2x18x72xf32, #tpu.memory_space<vmem>>, vector<2x18x72xf32>
    tpu.vector_store %arg12[%c0_8, %c0_9, %c0_10], %5 {strides = array<i32>} : memref<2x18x72xf32, #tpu.memory_space<vmem>>, vector<2x18x72xf32>,
    %cst_11 = arith.constant 0.000000e+00 : f32
    %7 = vector.broadcast %cst_11 : f32 to vector<2x18x144xf32>
    %c0_12 = arith.constant 0 : index
    %c0_13 = arith.constant 0 : index
    %c0_14 = arith.constant 0 : index
    %8 = vector.load %arg13[%c0_12, %c0_13, %c0_14] : memref<2x18x144xf32, #tpu.memory_space<vmem>>, vector<2x18x144xf32>
    tpu.vector_store %arg13[%c0_12, %c0_13, %c0_14], %7 {strides = array<i32>} : memref<2x18x144xf32, #tpu.memory_space<vmem>>, vector<2x18x144xf32>,
    %cst_15 = arith.constant 0.000000e+00 : f32
    %9 = vector.broadcast %cst_15 : f32 to vector<1x128xf32>
    %cst_16 = arith.constant 0.000000e+00 : f32
    %10 = vector.broadcast %cst_16 : f32 to vector<1x128xf32>
    %c0_17 = arith.constant 0 : index
    %c0_18 = arith.constant 0 : index
    %c0_19 = arith.constant 0 : index
    %11 = vector.load %arg0[%c0_17, %c0_18, %c0_19] : memref<2x16x64xf32, #tpu.memory_space<vmem>>, vector<1x16x64xf32>
    %12 = vector.shape_cast %11 : vector<1x16x64xf32> to vector<16x64xf32>
    %c0_20 = arith.constant 0 : index
    %c1 = arith.constant 1 : index
    %c4 = arith.constant 4 : index
    %13 = vector.load %arg12[%c0_20, %c1, %c4] : memref<2x18x72xf32, #tpu.memory_space<vmem>>, vector<1x16x64xf32>
    %14 = vector.shape_cast %13 : vector<1x16x64xf32> to vector<16x64xf32>
    %15 = vector.shape_cast %12 : vector<16x64xf32> to vector<1x16x64xf32>
    tpu.vector_store %arg12[%c0_20, %c1, %c4], %15 {strides = array<i32>} : memref<2x18x72xf32, #tpu.memory_space<vmem>>, vector<1x16x64xf32>,
    %cst_21 = arith.constant 0.000000e+00 : f32
    %16 = vector.broadcast %cst_21 : f32 to vector<16x128xf32>
    %c0_22 = arith.constant 0 : index
    %c0_23 = arith.constant 0 : index
    %c0_24 = arith.constant 0 : index
    %17 = vector.load %arg12[%c0_22, %c0_23, %c0_24] : memref<2x18x72xf32, #tpu.memory_space<vmem>>, vector<1x16x64xf32>
    %18 = vector.shape_cast %17 : vector<1x16x64xf32> to vector<16x64xf32>
    %19 = arith.truncf %18 : vector<16x64xf32> to vector<16x64xbf16>
    %c0_25 = arith.constant 0 : index
    %c0_26 = arith.constant 0 : index
    %c0_27 = arith.constant 0 : index
    %20 = vector.load %arg1[%c0_25, %c0_26, %c0_27] : memref<9x64x128xbf16, #tpu.memory_space<vmem>>, vector<1x64x128xbf16>
    %21 = vector.shape_cast %20 : vector<1x64x128xbf16> to vector<64x128xbf16>
    %cst_28 = arith.constant dense<0.000000e+00> : vector<16x128xf32>
    %22 = tpu.matmul %19, %21, %cst_28 {dimension_numbers = #tpu.dot_dimension_numbers<[1], [0], [0], [1], [0, 0, 1, 1], [], []>} : vector<16x64xbf16>, vector<64x128xbf16>, vector<16x128xf32> -> vector<16x128xf32>
    %23 = arith.addf %16, %22 : vector<16x128xf32>
    %c0_29 = arith.constant 0 : index
    %c0_30 = arith.constant 0 : index
    %c4_31 = arith.constant 4 : index
    %24 = vector.load %arg12[%c0_29, %c0_30, %c4_31] : memref<2x18x72xf32, #tpu.memory_space<vmem>>, vector<1x16x64xf32>
    %25 = vector.shape_cast %24 : vector<1x16x64xf32> to vector<16x64xf32>
    %26 = arith.truncf %25 : vector<16x64xf32> to vector<16x64xbf16>
    %c1_32 = arith.constant 1 : index
    %c0_33 = arith.constant 0 : index
    %c0_34 = arith.constant 0 : index
    %27 = vector.load %arg1[%c1_32, %c0_33, %c0_34] : memref<9x64x128xbf16, #tpu.memory_space<vmem>>, vector<1x64x128xbf16>
    %28 = vector.shape_cast %27 : vector<1x64x128xbf16> to vector<64x128xbf16>
    %cst_35 = arith.constant dense<0.000000e+00> : vector<16x128xf32>
    %29 = tpu.matmul %26, %28, %cst_35 {dimension_numbers = #tpu.dot_dimension_numbers<[1], [0], [0], [1], [0, 0, 1, 1], [], []>} : vector<16x64xbf16>, vector<64x128xbf16>, vector<16x128xf32> -> vector<16x128xf32>
    %30 = arith.addf %23, %29 : vector<16x128xf32>
    %c0_36 = arith.constant 0 : index
    %c0_37 = arith.constant 0 : index
    %c8 = arith.constant 8 : index
    %31 = vector.load %arg12[%c0_36, %c0_37, %c8] : memref<2x18x72xf32, #tpu.memory_space<vmem>>, vector<1x16x64xf32>
    %32 = vector.shape_cast %31 : vector<1x16x64xf32> to vector<16x64xf32>
    %33 = arith.truncf %32 : vector<16x64xf32> to vector<16x64xbf16>
    %c2 = arith.constant 2 : index
    %c0_38 = arith.constant 0 : index
    %c0_39 = arith.constant 0 : index
    %34 = vector.load %arg1[%c2, %c0_38, %c0_39] : memref<9x64x128xbf16, #tpu.memory_space<vmem>>, vector<1x64x128xbf16>
    %35 = vector.shape_cast %34 : vector<1x64x128xbf16> to vector<64x128xbf16>
    %cst_40 = arith.constant dense<0.000000e+00> : vector<16x128xf32>
    %36 = tpu.matmul %33, %35, %cst_40 {dimension_numbers = #tpu.dot_dimension_numbers<[1], [0], [0], [1], [0, 0, 1, 1], [], []>} : vector<16x64xbf16>, vector<64x128xbf16>, vector<16x128xf32> -> vector<16x128xf32>
    %37 = arith.addf %30, %36 : vector<16x128xf32>
    %c0_41 = arith.constant 0 : index
    %c1_42 = arith.constant 1 : index
    %c0_43 = arith.constant 0 : index
    %38 = vector.load %arg12[%c0_41, %c1_42, %c0_43] : memref<2x18x72xf32, #tpu.memory_space<vmem>>, vector<1x16x64xf32>
    %39 = vector.shape_cast %38 : vector<1x16x64xf32> to vector<16x64xf32>
    %40 = arith.truncf %39 : vector<16x64xf32> to vector<16x64xbf16>
    %c3 = arith.constant 3 : index
    %c0_44 = arith.constant 0 : index
    %c0_45 = arith.constant 0 : index
    %41 = vector.load %arg1[%c3, %c0_44, %c0_45] : memref<9x64x128xbf16, #tpu.memory_space<vmem>>, vector<1x64x128xbf16>
    %42 = vector.shape_cast %41 : vector<1x64x128xbf16> to vector<64x128xbf16>
    %cst_46 = arith.constant dense<0.000000e+00> : vector<16x128xf32>
    %43 = tpu.matmul %40, %42, %cst_46 {dimension_numbers = #tpu.dot_dimension_numbers<[1], [0], [0], [1], [0, 0, 1, 1], [], []>} : vector<16x64xbf16>, vector<64x128xbf16>, vector<16x128xf32> -> vector<16x128xf32>
    %44 = arith.addf %37, %43 : vector<16x128xf32>
    %c0_47 = arith.constant 0 : index
    %c1_48 = arith.constant 1 : index
    %c4_49 = arith.constant 4 : index
    %45 = vector.load %arg12[%c0_47, %c1_48, %c4_49] : memref<2x18x72xf32, #tpu.memory_space<vmem>>, vector<1x16x64xf32>
    %46 = vector.shape_cast %45 : vector<1x16x64xf32> to vector<16x64xf32>
    %47 = arith.truncf %46 : vector<16x64xf32> to vector<16x64xbf16>
    %c4_50 = arith.constant 4 : index
    %c0_51 = arith.constant 0 : index
    %c0_52 = arith.constant 0 : index
    %48 = vector.load %arg1[%c4_50, %c0_51, %c0_52] : memref<9x64x128xbf16, #tpu.memory_space<vmem>>, vector<1x64x128xbf16>
    %49 = vector.shape_cast %48 : vector<1x64x128xbf16> to vector<64x128xbf16>
    %cst_53 = arith.constant dense<0.000000e+00> : vector<16x128xf32>
    %50 = tpu.matmul %47, %49, %cst_53 {dimension_numbers = #tpu.dot_dimension_numbers<[1], [0], [0], [1], [0, 0, 1, 1], [], []>} : vector<16x64xbf16>, vector<64x128xbf16>, vector<16x128xf32> -> vector<16x128xf32>
    %51 = arith.addf %44, %50 : vector<16x128xf32>
    %c0_54 = arith.constant 0 : index
    %c1_55 = arith.constant 1 : index
    %c8_56 = arith.constant 8 : index
    %52 = vector.load %arg12[%c0_54, %c1_55, %c8_56] : memref<2x18x72xf32, #tpu.memory_space<vmem>>, vector<1x16x64xf32>
    %53 = vector.shape_cast %52 : vector<1x16x64xf32> to vector<16x64xf32>
    %54 = arith.truncf %53 : vector<16x64xf32> to vector<16x64xbf16>
    %c5 = arith.constant 5 : index
    %c0_57 = arith.constant 0 : index
    %c0_58 = arith.constant 0 : index
    %55 = vector.load %arg1[%c5, %c0_57, %c0_58] : memref<9x64x128xbf16, #tpu.memory_space<vmem>>, vector<1x64x128xbf16>
    %56 = vector.shape_cast %55 : vector<1x64x128xbf16> to vector<64x128xbf16>
    %cst_59 = arith.constant dense<0.000000e+00> : vector<16x128xf32>
    %57 = tpu.matmul %54, %56, %cst_59 {dimension_numbers = #tpu.dot_dimension_numbers<[1], [0], [0], [1], [0, 0, 1, 1], [], []>} : vector<16x64xbf16>, vector<64x128xbf16>, vector<16x128xf32> -> vector<16x128xf32>
    %58 = arith.addf %51, %57 : vector<16x128xf32>
    %c0_60 = arith.constant 0 : index
    %c2_61 = arith.constant 2 : index
    %c0_62 = arith.constant 0 : index
    %59 = vector.load %arg12[%c0_60, %c2_61, %c0_62] : memref<2x18x72xf32, #tpu.memory_space<vmem>>, vector<1x16x64xf32>
    %60 = vector.shape_cast %59 : vector<1x16x64xf32> to vector<16x64xf32>
    %61 = arith.truncf %60 : vector<16x64xf32> to vector<16x64xbf16>
    %c6 = arith.constant 6 : index
    %c0_63 = arith.constant 0 : index
    %c0_64 = arith.constant 0 : index
    %62 = vector.load %arg1[%c6, %c0_63, %c0_64] : memref<9x64x128xbf16, #tpu.memory_space<vmem>>, vector<1x64x128xbf16>
    %63 = vector.shape_cast %62 : vector<1x64x128xbf16> to vector<64x128xbf16>
    %cst_65 = arith.constant dense<0.000000e+00> : vector<16x128xf32>
    %64 = tpu.matmul %61, %63, %cst_65 {dimension_numbers = #tpu.dot_dimension_numbers<[1], [0], [0], [1], [0, 0, 1, 1], [], []>} : vector<16x64xbf16>, vector<64x128xbf16>, vector<16x128xf32> -> vector<16x128xf32>
    %65 = arith.addf %58, %64 : vector<16x128xf32>
    %c0_66 = arith.constant 0 : index
    %c2_67 = arith.constant 2 : index
    %c4_68 = arith.constant 4 : index
    %66 = vector.load %arg12[%c0_66, %c2_67, %c4_68] : memref<2x18x72xf32, #tpu.memory_space<vmem>>, vector<1x16x64xf32>
    %67 = vector.shape_cast %66 : vector<1x16x64xf32> to vector<16x64xf32>
    %68 = arith.truncf %67 : vector<16x64xf32> to vector<16x64xbf16>
    %c7 = arith.constant 7 : index
    %c0_69 = arith.constant 0 : index
    %c0_70 = arith.constant 0 : index
    %69 = vector.load %arg1[%c7, %c0_69, %c0_70] : memref<9x64x128xbf16, #tpu.memory_space<vmem>>, vector<1x64x128xbf16>
    %70 = vector.shape_cast %69 : vector<1x64x128xbf16> to vector<64x128xbf16>
    %cst_71 = arith.constant dense<0.000000e+00> : vector<16x128xf32>
    %71 = tpu.matmul %68, %70, %cst_71 {dimension_numbers = #tpu.dot_dimension_numbers<[1], [0], [0], [1], [0, 0, 1, 1], [], []>} : vector<16x64xbf16>, vector<64x128xbf16>, vector<16x128xf32> -> vector<16x128xf32>
    %72 = arith.addf %65, %71 : vector<16x128xf32>
    %c0_72 = arith.constant 0 : index
    %c2_73 = arith.constant 2 : index
    %c8_74 = arith.constant 8 : index
    %73 = vector.load %arg12[%c0_72, %c2_73, %c8_74] : memref<2x18x72xf32, #tpu.memory_space<vmem>>, vector<1x16x64xf32>
    %74 = vector.shape_cast %73 : vector<1x16x64xf32> to vector<16x64xf32>
    %75 = arith.truncf %74 : vector<16x64xf32> to vector<16x64xbf16>
    %c8_75 = arith.constant 8 : index
    %c0_76 = arith.constant 0 : index
    %c0_77 = arith.constant 0 : index
    %76 = vector.load %arg1[%c8_75, %c0_76, %c0_77] : memref<9x64x128xbf16, #tpu.memory_space<vmem>>, vector<1x64x128xbf16>
    %77 = vector.shape_cast %76 : vector<1x64x128xbf16> to vector<64x128xbf16>
    %cst_78 = arith.constant dense<0.000000e+00> : vector<16x128xf32>
    %78 = tpu.matmul %75, %77, %cst_78 {dimension_numbers = #tpu.dot_dimension_numbers<[1], [0], [0], [1], [0, 0, 1, 1], [], []>} : vector<16x64xbf16>, vector<64x128xbf16>, vector<16x128xf32> -> vector<16x128xf32>
    %79 = arith.addf %72, %78 : vector<16x128xf32>
    %80 = vector.broadcast %1 : vector<1x128xf32> to vector<16x128xf32>
    %81 = arith.addf %79, %80 : vector<16x128xf32>
    %cst_79 = arith.constant dense<0.000000e+00> : vector<1x128xf32>
    %82 = tpu.matmul %0, %81, %cst_79 {dimension_numbers = #tpu.dot_dimension_numbers<[1], [0], [0], [1], [0, 0, 1, 1], [], []>} : vector<1x16xf32>, vector<16x128xf32>, vector<1x128xf32> -> vector<1x128xf32>
    %83 = arith.addf %9, %82 : vector<1x128xf32>
    %84 = arith.mulf %81, %81 : vector<16x128xf32>
    %cst_80 = arith.constant dense<0.000000e+00> : vector<1x128xf32>
    %85 = tpu.matmul %0, %84, %cst_80 {dimension_numbers = #tpu.dot_dimension_numbers<[1], [0], [0], [1], [0, 0, 1, 1], [], []>} : vector<1x16xf32>, vector<16x128xf32>, vector<1x128xf32> -> vector<1x128xf32>
    %86 = arith.addf %10, %85 : vector<1x128xf32>
    %c0_81 = arith.constant 0 : index
    %c1_82 = arith.constant 1 : index
    %c8_83 = arith.constant 8 : index
    %87 = vector.load %arg13[%c0_81, %c1_82, %c8_83] : memref<2x18x144xf32, #tpu.memory_space<vmem>>, vector<1x16x128xf32>
    %88 = vector.shape_cast %87 : vector<1x16x128xf32> to vector<16x128xf32>
    %89 = vector.shape_cast %81 : vector<16x128xf32> to vector<1x16x128xf32>
    tpu.vector_store %arg13[%c0_81, %c1_82, %c8_83], %89 {strides = array<i32>} : memref<2x18x144xf32, #tpu.memory_space<vmem>>, vector<1x16x128xf32>,
    %c1_84 = arith.constant 1 : index
    %c0_85 = arith.constant 0 : index
    %c0_86 = arith.constant 0 : index
    %90 = vector.load %arg0[%c1_84, %c0_85, %c0_86] : memref<2x16x64xf32, #tpu.memory_space<vmem>>, vector<1x16x64xf32>
    %91 = vector.shape_cast %90 : vector<1x16x64xf32> to vector<16x64xf32>
    %c1_87 = arith.constant 1 : index
    %c1_88 = arith.constant 1 : index
    %c4_89 = arith.constant 4 : index
    %92 = vector.load %arg12[%c1_87, %c1_88, %c4_89] : memref<2x18x72xf32, #tpu.memory_space<vmem>>, vector<1x16x64xf32>
    %93 = vector.shape_cast %92 : vector<1x16x64xf32> to vector<16x64xf32>
    %94 = vector.shape_cast %91 : vector<16x64xf32> to vector<1x16x64xf32>
    tpu.vector_store %arg12[%c1_87, %c1_88, %c4_89], %94 {strides = array<i32>} : memref<2x18x72xf32, #tpu.memory_space<vmem>>, vector<1x16x64xf32>,
    %cst_90 = arith.constant 0.000000e+00 : f32
    %95 = vector.broadcast %cst_90 : f32 to vector<16x128xf32>
    %c1_91 = arith.constant 1 : index
    %c0_92 = arith.constant 0 : index
    %c0_93 = arith.constant 0 : index
    %96 = vector.load %arg12[%c1_91, %c0_92, %c0_93] : memref<2x18x72xf32, #tpu.memory_space<vmem>>, vector<1x16x64xf32>
    %97 = vector.shape_cast %96 : vector<1x16x64xf32> to vector<16x64xf32>
    %98 = arith.truncf %97 : vector<16x64xf32> to vector<16x64xbf16>
    %c0_94 = arith.constant 0 : index
    %c0_95 = arith.constant 0 : index
    %c0_96 = arith.constant 0 : index
    %99 = vector.load %arg1[%c0_94, %c0_95, %c0_96] : memref<9x64x128xbf16, #tpu.memory_space<vmem>>, vector<1x64x128xbf16>
    %100 = vector.shape_cast %99 : vector<1x64x128xbf16> to vector<64x128xbf16>
    %cst_97 = arith.constant dense<0.000000e+00> : vector<16x128xf32>
    %101 = tpu.matmul %98, %100, %cst_97 {dimension_numbers = #tpu.dot_dimension_numbers<[1], [0], [0], [1], [0, 0, 1, 1], [], []>} : vector<16x64xbf16>, vector<64x128xbf16>, vector<16x128xf32> -> vector<16x128xf32>
    %102 = arith.addf %95, %101 : vector<16x128xf32>
    %c1_98 = arith.constant 1 : index
    %c0_99 = arith.constant 0 : index
    %c4_100 = arith.constant 4 : index
    %103 = vector.load %arg12[%c1_98, %c0_99, %c4_100] : memref<2x18x72xf32, #tpu.memory_space<vmem>>, vector<1x16x64xf32>
    %104 = vector.shape_cast %103 : vector<1x16x64xf32> to vector<16x64xf32>
    %105 = arith.truncf %104 : vector<16x64xf32> to vector<16x64xbf16>
    %c1_101 = arith.constant 1 : index
    %c0_102 = arith.constant 0 : index
    %c0_103 = arith.constant 0 : index
    %106 = vector.load %arg1[%c1_101, %c0_102, %c0_103] : memref<9x64x128xbf16, #tpu.memory_space<vmem>>, vector<1x64x128xbf16>
    %107 = vector.shape_cast %106 : vector<1x64x128xbf16> to vector<64x128xbf16>
    %cst_104 = arith.constant dense<0.000000e+00> : vector<16x128xf32>
    %108 = tpu.matmul %105, %107, %cst_104 {dimension_numbers = #tpu.dot_dimension_numbers<[1], [0], [0], [1], [0, 0, 1, 1], [], []>} : vector<16x64xbf16>, vector<64x128xbf16>, vector<16x128xf32> -> vector<16x128xf32>
    %109 = arith.addf %102, %108 : vector<16x128xf32>
    %c1_105 = arith.constant 1 : index
    %c0_106 = arith.constant 0 : index
    %c8_107 = arith.constant 8 : index
    %110 = vector.load %arg12[%c1_105, %c0_106, %c8_107] : memref<2x18x72xf32, #tpu.memory_space<vmem>>, vector<1x16x64xf32>
    %111 = vector.shape_cast %110 : vector<1x16x64xf32> to vector<16x64xf32>
    %112 = arith.truncf %111 : vector<16x64xf32> to vector<16x64xbf16>
    %c2_108 = arith.constant 2 : index
    %c0_109 = arith.constant 0 : index
    %c0_110 = arith.constant 0 : index
    %113 = vector.load %arg1[%c2_108, %c0_109, %c0_110] : memref<9x64x128xbf16, #tpu.memory_space<vmem>>, vector<1x64x128xbf16>
    %114 = vector.shape_cast %113 : vector<1x64x128xbf16> to vector<64x128xbf16>
    %cst_111 = arith.constant dense<0.000000e+00> : vector<16x128xf32>
    %115 = tpu.matmul %112, %114, %cst_111 {dimension_numbers = #tpu.dot_dimension_numbers<[1], [0], [0], [1], [0, 0, 1, 1], [], []>} : vector<16x64xbf16>, vector<64x128xbf16>, vector<16x128xf32> -> vector<16x128xf32>
    %116 = arith.addf %109, %115 : vector<16x128xf32>
    %c1_112 = arith.constant 1 : index
    %c1_113 = arith.constant 1 : index
    %c0_114 = arith.constant 0 : index
    %117 = vector.load %arg12[%c1_112, %c1_113, %c0_114] : memref<2x18x72xf32, #tpu.memory_space<vmem>>, vector<1x16x64xf32>
    %118 = vector.shape_cast %117 : vector<1x16x64xf32> to vector<16x64xf32>
    %119 = arith.truncf %118 : vector<16x64xf32> to vector<16x64xbf16>
    %c3_115 = arith.constant 3 : index
    %c0_116 = arith.constant 0 : index
    %c0_117 = arith.constant 0 : index
    %120 = vector.load %arg1[%c3_115, %c0_116, %c0_117] : memref<9x64x128xbf16, #tpu.memory_space<vmem>>, vector<1x64x128xbf16>
    %121 = vector.shape_cast %120 : vector<1x64x128xbf16> to vector<64x128xbf16>
    %cst_118 = arith.constant dense<0.000000e+00> : vector<16x128xf32>
    %122 = tpu.matmul %119, %121, %cst_118 {dimension_numbers = #tpu.dot_dimension_numbers<[1], [0], [0], [1], [0, 0, 1, 1], [], []>} : vector<16x64xbf16>, vector<64x128xbf16>, vector<16x128xf32> -> vector<16x128xf32>
    %123 = arith.addf %116, %122 : vector<16x128xf32>
    %c1_119 = arith.constant 1 : index
    %c1_120 = arith.constant 1 : index
    %c4_121 = arith.constant 4 : index
    %124 = vector.load %arg12[%c1_119, %c1_120, %c4_121] : memref<2x18x72xf32, #tpu.memory_space<vmem>>, vector<1x16x64xf32>
    %125 = vector.shape_cast %124 : vector<1x16x64xf32> to vector<16x64xf32>
    %126 = arith.truncf %125 : vector<16x64xf32> to vector<16x64xbf16>
    %c4_122 = arith.constant 4 : index
    %c0_123 = arith.constant 0 : index
    %c0_124 = arith.constant 0 : index
    %127 = vector.load %arg1[%c4_122, %c0_123, %c0_124] : memref<9x64x128xbf16, #tpu.memory_space<vmem>>, vector<1x64x128xbf16>
    %128 = vector.shape_cast %127 : vector<1x64x128xbf16> to vector<64x128xbf16>
    %cst_125 = arith.constant dense<0.000000e+00> : vector<16x128xf32>
    %129 = tpu.matmul %126, %128, %cst_125 {dimension_numbers = #tpu.dot_dimension_numbers<[1], [0], [0], [1], [0, 0, 1, 1], [], []>} : vector<16x64xbf16>, vector<64x128xbf16>, vector<16x128xf32> -> vector<16x128xf32>
    %130 = arith.addf %123, %129 : vector<16x128xf32>
    %c1_126 = arith.constant 1 : index
    %c1_127 = arith.constant 1 : index
    %c8_128 = arith.constant 8 : index
    %131 = vector.load %arg12[%c1_126, %c1_127, %c8_128] : memref<2x18x72xf32, #tpu.memory_space<vmem>>, vector<1x16x64xf32>
    %132 = vector.shape_cast %131 : vector<1x16x64xf32> to vector<16x64xf32>
    %133 = arith.truncf %132 : vector<16x64xf32> to vector<16x64xbf16>
    %c5_129 = arith.constant 5 : index
    %c0_130 = arith.constant 0 : index
    %c0_131 = arith.constant 0 : index
    %134 = vector.load %arg1[%c5_129, %c0_130, %c0_131] : memref<9x64x128xbf16, #tpu.memory_space<vmem>>, vector<1x64x128xbf16>
    %135 = vector.shape_cast %134 : vector<1x64x128xbf16> to vector<64x128xbf16>
    %cst_132 = arith.constant dense<0.000000e+00> : vector<16x128xf32>
    %136 = tpu.matmul %133, %135, %cst_132 {dimension_numbers = #tpu.dot_dimension_numbers<[1], [0], [0], [1], [0, 0, 1, 1], [], []>} : vector<16x64xbf16>, vector<64x128xbf16>, vector<16x128xf32> -> vector<16x128xf32>
    %137 = arith.addf %130, %136 : vector<16x128xf32>
    %c1_133 = arith.constant 1 : index
    %c2_134 = arith.constant 2 : index
    %c0_135 = arith.constant 0 : index
    %138 = vector.load %arg12[%c1_133, %c2_134, %c0_135] : memref<2x18x72xf32, #tpu.memory_space<vmem>>, vector<1x16x64xf32>
    %139 = vector.shape_cast %138 : vector<1x16x64xf32> to vector<16x64xf32>
    %140 = arith.truncf %139 : vector<16x64xf32> to vector<16x64xbf16>
    %c6_136 = arith.constant 6 : index
    %c0_137 = arith.constant 0 : index
    %c0_138 = arith.constant 0 : index
    %141 = vector.load %arg1[%c6_136, %c0_137, %c0_138] : memref<9x64x128xbf16, #tpu.memory_space<vmem>>, vector<1x64x128xbf16>
    %142 = vector.shape_cast %141 : vector<1x64x128xbf16> to vector<64x128xbf16>
    %cst_139 = arith.constant dense<0.000000e+00> : vector<16x128xf32>
    %143 = tpu.matmul %140, %142, %cst_139 {dimension_numbers = #tpu.dot_dimension_numbers<[1], [0], [0], [1], [0, 0, 1, 1], [], []>} : vector<16x64xbf16>, vector<64x128xbf16>, vector<16x128xf32> -> vector<16x128xf32>
    %144 = arith.addf %137, %143 : vector<16x128xf32>
    %c1_140 = arith.constant 1 : index
    %c2_141 = arith.constant 2 : index
    %c4_142 = arith.constant 4 : index
    %145 = vector.load %arg12[%c1_140, %c2_141, %c4_142] : memref<2x18x72xf32, #tpu.memory_space<vmem>>, vector<1x16x64xf32>
    %146 = vector.shape_cast %145 : vector<1x16x64xf32> to vector<16x64xf32>
    %147 = arith.truncf %146 : vector<16x64xf32> to vector<16x64xbf16>
    %c7_143 = arith.constant 7 : index
    %c0_144 = arith.constant 0 : index
    %c0_145 = arith.constant 0 : index
    %148 = vector.load %arg1[%c7_143, %c0_144, %c0_145] : memref<9x64x128xbf16, #tpu.memory_space<vmem>>, vector<1x64x128xbf16>
    %149 = vector.shape_cast %148 : vector<1x64x128xbf16> to vector<64x128xbf16>
    %cst_146 = arith.constant dense<0.000000e+00> : vector<16x128xf32>
    %150 = tpu.matmul %147, %149, %cst_146 {dimension_numbers = #tpu.dot_dimension_numbers<[1], [0], [0], [1], [0, 0, 1, 1], [], []>} : vector<16x64xbf16>, vector<64x128xbf16>, vector<16x128xf32> -> vector<16x128xf32>
    %151 = arith.addf %144, %150 : vector<16x128xf32>
    %c1_147 = arith.constant 1 : index
    %c2_148 = arith.constant 2 : index
    %c8_149 = arith.constant 8 : index
    %152 = vector.load %arg12[%c1_147, %c2_148, %c8_149] : memref<2x18x72xf32, #tpu.memory_space<vmem>>, vector<1x16x64xf32>
    %153 = vector.shape_cast %152 : vector<1x16x64xf32> to vector<16x64xf32>
    %154 = arith.truncf %153 : vector<16x64xf32> to vector<16x64xbf16>
    %c8_150 = arith.constant 8 : index
    %c0_151 = arith.constant 0 : index
    %c0_152 = arith.constant 0 : index
    %155 = vector.load %arg1[%c8_150, %c0_151, %c0_152] : memref<9x64x128xbf16, #tpu.memory_space<vmem>>, vector<1x64x128xbf16>
    %156 = vector.shape_cast %155 : vector<1x64x128xbf16> to vector<64x128xbf16>
    %cst_153 = arith.constant dense<0.000000e+00> : vector<16x128xf32>
    %157 = tpu.matmul %154, %156, %cst_153 {dimension_numbers = #tpu.dot_dimension_numbers<[1], [0], [0], [1], [0, 0, 1, 1], [], []>} : vector<16x64xbf16>, vector<64x128xbf16>, vector<16x128xf32> -> vector<16x128xf32>
    %158 = arith.addf %151, %157 : vector<16x128xf32>
    %159 = vector.broadcast %1 : vector<1x128xf32> to vector<16x128xf32>
    %160 = arith.addf %158, %159 : vector<16x128xf32>
    %cst_154 = arith.constant dense<0.000000e+00> : vector<1x128xf32>
    %161 = tpu.matmul %0, %160, %cst_154 {dimension_numbers = #tpu.dot_dimension_numbers<[1], [0], [0], [1], [0, 0, 1, 1], [], []>} : vector<1x16xf32>, vector<16x128xf32>, vector<1x128xf32> -> vector<1x128xf32>
    %162 = arith.addf %83, %161 : vector<1x128xf32>
    %163 = arith.mulf %160, %160 : vector<16x128xf32>
    %cst_155 = arith.constant dense<0.000000e+00> : vector<1x128xf32>
    %164 = tpu.matmul %0, %163, %cst_155 {dimension_numbers = #tpu.dot_dimension_numbers<[1], [0], [0], [1], [0, 0, 1, 1], [], []>} : vector<1x16xf32>, vector<16x128xf32>, vector<1x128xf32> -> vector<1x128xf32>
    %165 = arith.addf %86, %164 : vector<1x128xf32>
    %c1_156 = arith.constant 1 : index
    %c1_157 = arith.constant 1 : index
    %c8_158 = arith.constant 8 : index
    %166 = vector.load %arg13[%c1_156, %c1_157, %c8_158] : memref<2x18x144xf32, #tpu.memory_space<vmem>>, vector<1x16x128xf32>
    %167 = vector.shape_cast %166 : vector<1x16x128xf32> to vector<16x128xf32>
    %168 = vector.shape_cast %160 : vector<16x128xf32> to vector<1x16x128xf32>
    tpu.vector_store %arg13[%c1_156, %c1_157, %c8_158], %168 {strides = array<i32>} : memref<2x18x144xf32, #tpu.memory_space<vmem>>, vector<1x16x128xf32>,
    %cst_159 = arith.constant dense<0.000000e+00> : vector<1x8xf32>
    %169 = tpu.matmul %162, %3, %cst_159 {dimension_numbers = #tpu.dot_dimension_numbers<[1], [0], [0], [1], [0, 0, 1, 1], [], []>} : vector<1x128xf32>, vector<128x8xf32>, vector<1x8xf32> -> vector<1x8xf32>
    %cst_160 = arith.constant dense<0.000000e+00> : vector<1x8xf32>
    %170 = tpu.matmul %165, %3, %cst_160 {dimension_numbers = #tpu.dot_dimension_numbers<[1], [0], [0], [1], [0, 0, 1, 1], [], []>} : vector<1x128xf32>, vector<128x8xf32>, vector<1x8xf32> -> vector<1x8xf32>
    %cst_161 = arith.constant 0.001953125 : f32
    %171 = vector.broadcast %cst_161 : f32 to vector<1x8xf32>
    %172 = arith.mulf %169, %171 : vector<1x8xf32>
    %cst_162 = arith.constant 0.001953125 : f32
    %173 = vector.broadcast %cst_162 : f32 to vector<1x8xf32>
    %174 = arith.mulf %170, %173 : vector<1x8xf32>
    %175 = arith.mulf %172, %172 : vector<1x8xf32>
    %176 = arith.subf %174, %175 : vector<1x8xf32>
    %cst_163 = arith.constant 0.000000e+00 : f32
    %177 = vector.broadcast %cst_163 : f32 to vector<1x8xf32>
    %178 = arith.maximumf %176, %177 : vector<1x8xf32>
    %c0_164 = arith.constant 0 : index
    %c0_165 = arith.constant 0 : index
    %179 = vector.load %arg3[%c0_164, %c0_165] : memref<1x8xf32, #tpu.memory_space<vmem>>, vector<1x8xf32>
    %cst_166 = arith.constant 9.99999974E-6 : f32
    %180 = vector.broadcast %cst_166 : f32 to vector<1x8xf32>
    %181 = arith.addf %178, %180 : vector<1x8xf32>
    %182 = math.rsqrt %181 : vector<1x8xf32>
    %183 = arith.mulf %179, %182 : vector<1x8xf32>
    %c0_167 = arith.constant 0 : index
    %c0_168 = arith.constant 0 : index
    %184 = vector.load %arg4[%c0_167, %c0_168] : memref<1x8xf32, #tpu.memory_space<vmem>>, vector<1x8xf32>
    %185 = arith.mulf %172, %183 : vector<1x8xf32>
    %186 = arith.subf %184, %185 : vector<1x8xf32>
    %cst_169 = arith.constant dense<0.000000e+00> : vector<1x128xf32>
    %187 = tpu.matmul %183, %4, %cst_169 {dimension_numbers = #tpu.dot_dimension_numbers<[1], [0], [0], [1], [0, 0, 1, 1], [], []>} : vector<1x8xf32>, vector<8x128xf32>, vector<1x128xf32> -> vector<1x128xf32>
    %cst_170 = arith.constant dense<0.000000e+00> : vector<1x128xf32>
    %188 = tpu.matmul %186, %4, %cst_170 {dimension_numbers = #tpu.dot_dimension_numbers<[1], [0], [0], [1], [0, 0, 1, 1], [], []>} : vector<1x8xf32>, vector<8x128xf32>, vector<1x128xf32> -> vector<1x128xf32>
    %c0_171 = arith.constant 0 : index
    %c1_172 = arith.constant 1 : index
    %c8_173 = arith.constant 8 : index
    %189 = vector.load %arg13[%c0_171, %c1_172, %c8_173] : memref<2x18x144xf32, #tpu.memory_space<vmem>>, vector<2x16x128xf32>
    %190 = vector.shape_cast %187 : vector<1x128xf32> to vector<1x1x128xf32>
    %191 = vector.broadcast %190 : vector<1x1x128xf32> to vector<2x16x128xf32>
    %192 = arith.mulf %189, %191 : vector<2x16x128xf32>
    %193 = vector.shape_cast %188 : vector<1x128xf32> to vector<1x1x128xf32>
    %194 = vector.broadcast %193 : vector<1x1x128xf32> to vector<2x16x128xf32>
    %195 = arith.addf %192, %194 : vector<2x16x128xf32>
    %cst_174 = arith.constant 0.000000e+00 : f32
    %196 = vector.broadcast %cst_174 : f32 to vector<2x16x128xf32>
    %197 = arith.maximumf %195, %196 : vector<2x16x128xf32>
    %c0_175 = arith.constant 0 : index
    %c1_176 = arith.constant 1 : index
    %c8_177 = arith.constant 8 : index
    %198 = vector.load %arg13[%c0_175, %c1_176, %c8_177] : memref<2x18x144xf32, #tpu.memory_space<vmem>>, vector<2x16x128xf32>
    tpu.vector_store %arg13[%c0_175, %c1_176, %c8_177], %197 {strides = array<i32>} : memref<2x18x144xf32, #tpu.memory_space<vmem>>, vector<2x16x128xf32>,
    %cst_178 = arith.constant 0.000000e+00 : f32
    %199 = vector.broadcast %cst_178 : f32 to vector<1x128xf32>
    %cst_179 = arith.constant 0.000000e+00 : f32
    %200 = vector.broadcast %cst_179 : f32 to vector<1x128xf32>
    %cst_180 = arith.constant 0.000000e+00 : f32
    %201 = vector.broadcast %cst_180 : f32 to vector<16x128xf32>
    %c0_181 = arith.constant 0 : index
    %c0_182 = arith.constant 0 : index
    %c0_183 = arith.constant 0 : index
    %202 = vector.load %arg13[%c0_181, %c0_182, %c0_183] : memref<2x18x144xf32, #tpu.memory_space<vmem>>, vector<1x16x128xf32>
    %203 = vector.shape_cast %202 : vector<1x16x128xf32> to vector<16x128xf32>
    %204 = arith.truncf %203 : vector<16x128xf32> to vector<16x128xbf16>
    %c0_184 = arith.constant 0 : index
    %c0_185 = arith.constant 0 : index
    %c0_186 = arith.constant 0 : index
    %205 = vector.load %arg5[%c0_184, %c0_185, %c0_186] : memref<9x128x128xbf16, #tpu.memory_space<vmem>>, vector<1x128x128xbf16>
    %206 = vector.shape_cast %205 : vector<1x128x128xbf16> to vector<128x128xbf16>
    %cst_187 = arith.constant dense<0.000000e+00> : vector<16x128xf32>
    %207 = tpu.matmul %204, %206, %cst_187 {dimension_numbers = #tpu.dot_dimension_numbers<[1], [0], [0], [1], [0, 0, 1, 1], [], []>} : vector<16x128xbf16>, vector<128x128xbf16>, vector<16x128xf32> -> vector<16x128xf32>
    %208 = arith.addf %201, %207 : vector<16x128xf32>
    %c0_188 = arith.constant 0 : index
    %c0_189 = arith.constant 0 : index
    %c8_190 = arith.constant 8 : index
    %209 = vector.load %arg13[%c0_188, %c0_189, %c8_190] : memref<2x18x144xf32, #tpu.memory_space<vmem>>, vector<1x16x128xf32>
    %210 = vector.shape_cast %209 : vector<1x16x128xf32> to vector<16x128xf32>
    %211 = arith.truncf %210 : vector<16x128xf32> to vector<16x128xbf16>
    %c1_191 = arith.constant 1 : index
    %c0_192 = arith.constant 0 : index
    %c0_193 = arith.constant 0 : index
    %212 = vector.load %arg5[%c1_191, %c0_192, %c0_193] : memref<9x128x128xbf16, #tpu.memory_space<vmem>>, vector<1x128x128xbf16>
    %213 = vector.shape_cast %212 : vector<1x128x128xbf16> to vector<128x128xbf16>
    %cst_194 = arith.constant dense<0.000000e+00> : vector<16x128xf32>
    %214 = tpu.matmul %211, %213, %cst_194 {dimension_numbers = #tpu.dot_dimension_numbers<[1], [0], [0], [1], [0, 0, 1, 1], [], []>} : vector<16x128xbf16>, vector<128x128xbf16>, vector<16x128xf32> -> vector<16x128xf32>
    %215 = arith.addf %208, %214 : vector<16x128xf32>
    %c0_195 = arith.constant 0 : index
    %c0_196 = arith.constant 0 : index
    %c16 = arith.constant 16 : index
    %216 = vector.load %arg13[%c0_195, %c0_196, %c16] : memref<2x18x144xf32, #tpu.memory_space<vmem>>, vector<1x16x128xf32>
    %217 = vector.shape_cast %216 : vector<1x16x128xf32> to vector<16x128xf32>
    %218 = arith.truncf %217 : vector<16x128xf32> to vector<16x128xbf16>
    %c2_197 = arith.constant 2 : index
    %c0_198 = arith.constant 0 : index
    %c0_199 = arith.constant 0 : index
    %219 = vector.load %arg5[%c2_197, %c0_198, %c0_199] : memref<9x128x128xbf16, #tpu.memory_space<vmem>>, vector<1x128x128xbf16>
    %220 = vector.shape_cast %219 : vector<1x128x128xbf16> to vector<128x128xbf16>
    %cst_200 = arith.constant dense<0.000000e+00> : vector<16x128xf32>
    %221 = tpu.matmul %218, %220, %cst_200 {dimension_numbers = #tpu.dot_dimension_numbers<[1], [0], [0], [1], [0, 0, 1, 1], [], []>} : vector<16x128xbf16>, vector<128x128xbf16>, vector<16x128xf32> -> vector<16x128xf32>
    %222 = arith.addf %215, %221 : vector<16x128xf32>
    %c0_201 = arith.constant 0 : index
    %c1_202 = arith.constant 1 : index
    %c0_203 = arith.constant 0 : index
    %223 = vector.load %arg13[%c0_201, %c1_202, %c0_203] : memref<2x18x144xf32, #tpu.memory_space<vmem>>, vector<1x16x128xf32>
    %224 = vector.shape_cast %223 : vector<1x16x128xf32> to vector<16x128xf32>
    %225 = arith.truncf %224 : vector<16x128xf32> to vector<16x128xbf16>
    %c3_204 = arith.constant 3 : index
    %c0_205 = arith.constant 0 : index
    %c0_206 = arith.constant 0 : index
    %226 = vector.load %arg5[%c3_204, %c0_205, %c0_206] : memref<9x128x128xbf16, #tpu.memory_space<vmem>>, vector<1x128x128xbf16>
    %227 = vector.shape_cast %226 : vector<1x128x128xbf16> to vector<128x128xbf16>
    %cst_207 = arith.constant dense<0.000000e+00> : vector<16x128xf32>
    %228 = tpu.matmul %225, %227, %cst_207 {dimension_numbers = #tpu.dot_dimension_numbers<[1], [0], [0], [1], [0, 0, 1, 1], [], []>} : vector<16x128xbf16>, vector<128x128xbf16>, vector<16x128xf32> -> vector<16x128xf32>
    %229 = arith.addf %222, %228 : vector<16x128xf32>
    %c0_208 = arith.constant 0 : index
    %c1_209 = arith.constant 1 : index
    %c8_210 = arith.constant 8 : index
    %230 = vector.load %arg13[%c0_208, %c1_209, %c8_210] : memref<2x18x144xf32, #tpu.memory_space<vmem>>, vector<1x16x128xf32>
    %231 = vector.shape_cast %230 : vector<1x16x128xf32> to vector<16x128xf32>
    %232 = arith.truncf %231 : vector<16x128xf32> to vector<16x128xbf16>
    %c4_211 = arith.constant 4 : index
    %c0_212 = arith.constant 0 : index
    %c0_213 = arith.constant 0 : index
    %233 = vector.load %arg5[%c4_211, %c0_212, %c0_213] : memref<9x128x128xbf16, #tpu.memory_space<vmem>>, vector<1x128x128xbf16>
    %234 = vector.shape_cast %233 : vector<1x128x128xbf16> to vector<128x128xbf16>
    %cst_214 = arith.constant dense<0.000000e+00> : vector<16x128xf32>
    %235 = tpu.matmul %232, %234, %cst_214 {dimension_numbers = #tpu.dot_dimension_numbers<[1], [0], [0], [1], [0, 0, 1, 1], [], []>} : vector<16x128xbf16>, vector<128x128xbf16>, vector<16x128xf32> -> vector<16x128xf32>
    %236 = arith.addf %229, %235 : vector<16x128xf32>
    %c0_215 = arith.constant 0 : index
    %c1_216 = arith.constant 1 : index
    %c16_217 = arith.constant 16 : index
    %237 = vector.load %arg13[%c0_215, %c1_216, %c16_217] : memref<2x18x144xf32, #tpu.memory_space<vmem>>, vector<1x16x128xf32>
    %238 = vector.shape_cast %237 : vector<1x16x128xf32> to vector<16x128xf32>
    %239 = arith.truncf %238 : vector<16x128xf32> to vector<16x128xbf16>
    %c5_218 = arith.constant 5 : index
    %c0_219 = arith.constant 0 : index
    %c0_220 = arith.constant 0 : index
    %240 = vector.load %arg5[%c5_218, %c0_219, %c0_220] : memref<9x128x128xbf16, #tpu.memory_space<vmem>>, vector<1x128x128xbf16>
    %241 = vector.shape_cast %240 : vector<1x128x128xbf16> to vector<128x128xbf16>
    %cst_221 = arith.constant dense<0.000000e+00> : vector<16x128xf32>
    %242 = tpu.matmul %239, %241, %cst_221 {dimension_numbers = #tpu.dot_dimension_numbers<[1], [0], [0], [1], [0, 0, 1, 1], [], []>} : vector<16x128xbf16>, vector<128x128xbf16>, vector<16x128xf32> -> vector<16x128xf32>
    %243 = arith.addf %236, %242 : vector<16x128xf32>
    %c0_222 = arith.constant 0 : index
    %c2_223 = arith.constant 2 : index
    %c0_224 = arith.constant 0 : index
    %244 = vector.load %arg13[%c0_222, %c2_223, %c0_224] : memref<2x18x144xf32, #tpu.memory_space<vmem>>, vector<1x16x128xf32>
    %245 = vector.shape_cast %244 : vector<1x16x128xf32> to vector<16x128xf32>
    %246 = arith.truncf %245 : vector<16x128xf32> to vector<16x128xbf16>
    %c6_225 = arith.constant 6 : index
    %c0_226 = arith.constant 0 : index
    %c0_227 = arith.constant 0 : index
    %247 = vector.load %arg5[%c6_225, %c0_226, %c0_227] : memref<9x128x128xbf16, #tpu.memory_space<vmem>>, vector<1x128x128xbf16>
    %248 = vector.shape_cast %247 : vector<1x128x128xbf16> to vector<128x128xbf16>
    %cst_228 = arith.constant dense<0.000000e+00> : vector<16x128xf32>
    %249 = tpu.matmul %246, %248, %cst_228 {dimension_numbers = #tpu.dot_dimension_numbers<[1], [0], [0], [1], [0, 0, 1, 1], [], []>} : vector<16x128xbf16>, vector<128x128xbf16>, vector<16x128xf32> -> vector<16x128xf32>
    %250 = arith.addf %243, %249 : vector<16x128xf32>
    %c0_229 = arith.constant 0 : index
    %c2_230 = arith.constant 2 : index
    %c8_231 = arith.constant 8 : index
    %251 = vector.load %arg13[%c0_229, %c2_230, %c8_231] : memref<2x18x144xf32, #tpu.memory_space<vmem>>, vector<1x16x128xf32>
    %252 = vector.shape_cast %251 : vector<1x16x128xf32> to vector<16x128xf32>
    %253 = arith.truncf %252 : vector<16x128xf32> to vector<16x128xbf16>
    %c7_232 = arith.constant 7 : index
    %c0_233 = arith.constant 0 : index
    %c0_234 = arith.constant 0 : index
    %254 = vector.load %arg5[%c7_232, %c0_233, %c0_234] : memref<9x128x128xbf16, #tpu.memory_space<vmem>>, vector<1x128x128xbf16>
    %255 = vector.shape_cast %254 : vector<1x128x128xbf16> to vector<128x128xbf16>
    %cst_235 = arith.constant dense<0.000000e+00> : vector<16x128xf32>
    %256 = tpu.matmul %253, %255, %cst_235 {dimension_numbers = #tpu.dot_dimension_numbers<[1], [0], [0], [1], [0, 0, 1, 1], [], []>} : vector<16x128xbf16>, vector<128x128xbf16>, vector<16x128xf32> -> vector<16x128xf32>
    %257 = arith.addf %250, %256 : vector<16x128xf32>
    %c0_236 = arith.constant 0 : index
    %c2_237 = arith.constant 2 : index
    %c16_238 = arith.constant 16 : index
    %258 = vector.load %arg13[%c0_236, %c2_237, %c16_238] : memref<2x18x144xf32, #tpu.memory_space<vmem>>, vector<1x16x128xf32>
    %259 = vector.shape_cast %258 : vector<1x16x128xf32> to vector<16x128xf32>
    %260 = arith.truncf %259 : vector<16x128xf32> to vector<16x128xbf16>
    %c8_239 = arith.constant 8 : index
    %c0_240 = arith.constant 0 : index
    %c0_241 = arith.constant 0 : index
    %261 = vector.load %arg5[%c8_239, %c0_240, %c0_241] : memref<9x128x128xbf16, #tpu.memory_space<vmem>>, vector<1x128x128xbf16>
    %262 = vector.shape_cast %261 : vector<1x128x128xbf16> to vector<128x128xbf16>
    %cst_242 = arith.constant dense<0.000000e+00> : vector<16x128xf32>
    %263 = tpu.matmul %260, %262, %cst_242 {dimension_numbers = #tpu.dot_dimension_numbers<[1], [0], [0], [1], [0, 0, 1, 1], [], []>} : vector<16x128xbf16>, vector<128x128xbf16>, vector<16x128xf32> -> vector<16x128xf32>
    %264 = arith.addf %257, %263 : vector<16x128xf32>
    %265 = vector.broadcast %2 : vector<1x128xf32> to vector<16x128xf32>
    %266 = arith.addf %264, %265 : vector<16x128xf32>
    %cst_243 = arith.constant dense<0.000000e+00> : vector<1x128xf32>
    %267 = tpu.matmul %0, %266, %cst_243 {dimension_numbers = #tpu.dot_dimension_numbers<[1], [0], [0], [1], [0, 0, 1, 1], [], []>} : vector<1x16xf32>, vector<16x128xf32>, vector<1x128xf32> -> vector<1x128xf32>
    %268 = arith.addf %199, %267 : vector<1x128xf32>
    %269 = arith.mulf %266, %266 : vector<16x128xf32>
    %cst_244 = arith.constant dense<0.000000e+00> : vector<1x128xf32>
    %270 = tpu.matmul %0, %269, %cst_244 {dimension_numbers = #tpu.dot_dimension_numbers<[1], [0], [0], [1], [0, 0, 1, 1], [], []>} : vector<1x16xf32>, vector<16x128xf32>, vector<1x128xf32> -> vector<1x128xf32>
    %271 = arith.addf %200, %270 : vector<1x128xf32>
    %c0_245 = arith.constant 0 : index
    %c0_246 = arith.constant 0 : index
    %c0_247 = arith.constant 0 : index
    %272 = vector.load %arg11[%c0_245, %c0_246, %c0_247] : memref<2x16x128xf32, #tpu.memory_space<vmem>>, vector<1x16x128xf32>
    %273 = vector.shape_cast %272 : vector<1x16x128xf32> to vector<16x128xf32>
    %274 = vector.shape_cast %266 : vector<16x128xf32> to vector<1x16x128xf32>
    tpu.vector_store %arg11[%c0_245, %c0_246, %c0_247], %274 {strides = array<i32>} : memref<2x16x128xf32, #tpu.memory_space<vmem>>, vector<1x16x128xf32>,
    %cst_248 = arith.constant 0.000000e+00 : f32
    %275 = vector.broadcast %cst_248 : f32 to vector<16x128xf32>
    %c1_249 = arith.constant 1 : index
    %c0_250 = arith.constant 0 : index
    %c0_251 = arith.constant 0 : index
    %276 = vector.load %arg13[%c1_249, %c0_250, %c0_251] : memref<2x18x144xf32, #tpu.memory_space<vmem>>, vector<1x16x128xf32>
    %277 = vector.shape_cast %276 : vector<1x16x128xf32> to vector<16x128xf32>
    %278 = arith.truncf %277 : vector<16x128xf32> to vector<16x128xbf16>
    %c0_252 = arith.constant 0 : index
    %c0_253 = arith.constant 0 : index
    %c0_254 = arith.constant 0 : index
    %279 = vector.load %arg5[%c0_252, %c0_253, %c0_254] : memref<9x128x128xbf16, #tpu.memory_space<vmem>>, vector<1x128x128xbf16>
    %280 = vector.shape_cast %279 : vector<1x128x128xbf16> to vector<128x128xbf16>
    %cst_255 = arith.constant dense<0.000000e+00> : vector<16x128xf32>
    %281 = tpu.matmul %278, %280, %cst_255 {dimension_numbers = #tpu.dot_dimension_numbers<[1], [0], [0], [1], [0, 0, 1, 1], [], []>} : vector<16x128xbf16>, vector<128x128xbf16>, vector<16x128xf32> -> vector<16x128xf32>
    %282 = arith.addf %275, %281 : vector<16x128xf32>
    %c1_256 = arith.constant 1 : index
    %c0_257 = arith.constant 0 : index
    %c8_258 = arith.constant 8 : index
    %283 = vector.load %arg13[%c1_256, %c0_257, %c8_258] : memref<2x18x144xf32, #tpu.memory_space<vmem>>, vector<1x16x128xf32>
    %284 = vector.shape_cast %283 : vector<1x16x128xf32> to vector<16x128xf32>
    %285 = arith.truncf %284 : vector<16x128xf32> to vector<16x128xbf16>
    %c1_259 = arith.constant 1 : index
    %c0_260 = arith.constant 0 : index
    %c0_261 = arith.constant 0 : index
    %286 = vector.load %arg5[%c1_259, %c0_260, %c0_261] : memref<9x128x128xbf16, #tpu.memory_space<vmem>>, vector<1x128x128xbf16>
    %287 = vector.shape_cast %286 : vector<1x128x128xbf16> to vector<128x128xbf16>
    %cst_262 = arith.constant dense<0.000000e+00> : vector<16x128xf32>
    %288 = tpu.matmul %285, %287, %cst_262 {dimension_numbers = #tpu.dot_dimension_numbers<[1], [0], [0], [1], [0, 0, 1, 1], [], []>} : vector<16x128xbf16>, vector<128x128xbf16>, vector<16x128xf32> -> vector<16x128xf32>
    %289 = arith.addf %282, %288 : vector<16x128xf32>
    %c1_263 = arith.constant 1 : index
    %c0_264 = arith.constant 0 : index
    %c16_265 = arith.constant 16 : index
    %290 = vector.load %arg13[%c1_263, %c0_264, %c16_265] : memref<2x18x144xf32, #tpu.memory_space<vmem>>, vector<1x16x128xf32>
    %291 = vector.shape_cast %290 : vector<1x16x128xf32> to vector<16x128xf32>
    %292 = arith.truncf %291 : vector<16x128xf32> to vector<16x128xbf16>
    %c2_266 = arith.constant 2 : index
    %c0_267 = arith.constant 0 : index
    %c0_268 = arith.constant 0 : index
    %293 = vector.load %arg5[%c2_266, %c0_267, %c0_268] : memref<9x128x128xbf16, #tpu.memory_space<vmem>>, vector<1x128x128xbf16>
    %294 = vector.shape_cast %293 : vector<1x128x128xbf16> to vector<128x128xbf16>
    %cst_269 = arith.constant dense<0.000000e+00> : vector<16x128xf32>
    %295 = tpu.matmul %292, %294, %cst_269 {dimension_numbers = #tpu.dot_dimension_numbers<[1], [0], [0], [1], [0, 0, 1, 1], [], []>} : vector<16x128xbf16>, vector<128x128xbf16>, vector<16x128xf32> -> vector<16x128xf32>
    %296 = arith.addf %289, %295 : vector<16x128xf32>
    %c1_270 = arith.constant 1 : index
    %c1_271 = arith.constant 1 : index
    %c0_272 = arith.constant 0 : index
    %297 = vector.load %arg13[%c1_270, %c1_271, %c0_272] : memref<2x18x144xf32, #tpu.memory_space<vmem>>, vector<1x16x128xf32>
    %298 = vector.shape_cast %297 : vector<1x16x128xf32> to vector<16x128xf32>
    %299 = arith.truncf %298 : vector<16x128xf32> to vector<16x128xbf16>
    %c3_273 = arith.constant 3 : index
    %c0_274 = arith.constant 0 : index
    %c0_275 = arith.constant 0 : index
    %300 = vector.load %arg5[%c3_273, %c0_274, %c0_275] : memref<9x128x128xbf16, #tpu.memory_space<vmem>>, vector<1x128x128xbf16>
    %301 = vector.shape_cast %300 : vector<1x128x128xbf16> to vector<128x128xbf16>
    %cst_276 = arith.constant dense<0.000000e+00> : vector<16x128xf32>
    %302 = tpu.matmul %299, %301, %cst_276 {dimension_numbers = #tpu.dot_dimension_numbers<[1], [0], [0], [1], [0, 0, 1, 1], [], []>} : vector<16x128xbf16>, vector<128x128xbf16>, vector<16x128xf32> -> vector<16x128xf32>
    %303 = arith.addf %296, %302 : vector<16x128xf32>
    %c1_277 = arith.constant 1 : index
    %c1_278 = arith.constant 1 : index
    %c8_279 = arith.constant 8 : index
    %304 = vector.load %arg13[%c1_277, %c1_278, %c8_279] : memref<2x18x144xf32, #tpu.memory_space<vmem>>, vector<1x16x128xf32>
    %305 = vector.shape_cast %304 : vector<1x16x128xf32> to vector<16x128xf32>
    %306 = arith.truncf %305 : vector<16x128xf32> to vector<16x128xbf16>
    %c4_280 = arith.constant 4 : index
    %c0_281 = arith.constant 0 : index
    %c0_282 = arith.constant 0 : index
    %307 = vector.load %arg5[%c4_280, %c0_281, %c0_282] : memref<9x128x128xbf16, #tpu.memory_space<vmem>>, vector<1x128x128xbf16>
    %308 = vector.shape_cast %307 : vector<1x128x128xbf16> to vector<128x128xbf16>
    %cst_283 = arith.constant dense<0.000000e+00> : vector<16x128xf32>
    %309 = tpu.matmul %306, %308, %cst_283 {dimension_numbers = #tpu.dot_dimension_numbers<[1], [0], [0], [1], [0, 0, 1, 1], [], []>} : vector<16x128xbf16>, vector<128x128xbf16>, vector<16x128xf32> -> vector<16x128xf32>
    %310 = arith.addf %303, %309 : vector<16x128xf32>
    %c1_284 = arith.constant 1 : index
    %c1_285 = arith.constant 1 : index
    %c16_286 = arith.constant 16 : index
    %311 = vector.load %arg13[%c1_284, %c1_285, %c16_286] : memref<2x18x144xf32, #tpu.memory_space<vmem>>, vector<1x16x128xf32>
    %312 = vector.shape_cast %311 : vector<1x16x128xf32> to vector<16x128xf32>
    %313 = arith.truncf %312 : vector<16x128xf32> to vector<16x128xbf16>
    %c5_287 = arith.constant 5 : index
    %c0_288 = arith.constant 0 : index
    %c0_289 = arith.constant 0 : index
    %314 = vector.load %arg5[%c5_287, %c0_288, %c0_289] : memref<9x128x128xbf16, #tpu.memory_space<vmem>>, vector<1x128x128xbf16>
    %315 = vector.shape_cast %314 : vector<1x128x128xbf16> to vector<128x128xbf16>
    %cst_290 = arith.constant dense<0.000000e+00> : vector<16x128xf32>
    %316 = tpu.matmul %313, %315, %cst_290 {dimension_numbers = #tpu.dot_dimension_numbers<[1], [0], [0], [1], [0, 0, 1, 1], [], []>} : vector<16x128xbf16>, vector<128x128xbf16>, vector<16x128xf32> -> vector<16x128xf32>
    %317 = arith.addf %310, %316 : vector<16x128xf32>
    %c1_291 = arith.constant 1 : index
    %c2_292 = arith.constant 2 : index
    %c0_293 = arith.constant 0 : index
    %318 = vector.load %arg13[%c1_291, %c2_292, %c0_293] : memref<2x18x144xf32, #tpu.memory_space<vmem>>, vector<1x16x128xf32>
    %319 = vector.shape_cast %318 : vector<1x16x128xf32> to vector<16x128xf32>
    %320 = arith.truncf %319 : vector<16x128xf32> to vector<16x128xbf16>
    %c6_294 = arith.constant 6 : index
    %c0_295 = arith.constant 0 : index
    %c0_296 = arith.constant 0 : index
    %321 = vector.load %arg5[%c6_294, %c0_295, %c0_296] : memref<9x128x128xbf16, #tpu.memory_space<vmem>>, vector<1x128x128xbf16>
    %322 = vector.shape_cast %321 : vector<1x128x128xbf16> to vector<128x128xbf16>
    %cst_297 = arith.constant dense<0.000000e+00> : vector<16x128xf32>
    %323 = tpu.matmul %320, %322, %cst_297 {dimension_numbers = #tpu.dot_dimension_numbers<[1], [0], [0], [1], [0, 0, 1, 1], [], []>} : vector<16x128xbf16>, vector<128x128xbf16>, vector<16x128xf32> -> vector<16x128xf32>
    %324 = arith.addf %317, %323 : vector<16x128xf32>
    %c1_298 = arith.constant 1 : index
    %c2_299 = arith.constant 2 : index
    %c8_300 = arith.constant 8 : index
    %325 = vector.load %arg13[%c1_298, %c2_299, %c8_300] : memref<2x18x144xf32, #tpu.memory_space<vmem>>, vector<1x16x128xf32>
    %326 = vector.shape_cast %325 : vector<1x16x128xf32> to vector<16x128xf32>
    %327 = arith.truncf %326 : vector<16x128xf32> to vector<16x128xbf16>
    %c7_301 = arith.constant 7 : index
    %c0_302 = arith.constant 0 : index
    %c0_303 = arith.constant 0 : index
    %328 = vector.load %arg5[%c7_301, %c0_302, %c0_303] : memref<9x128x128xbf16, #tpu.memory_space<vmem>>, vector<1x128x128xbf16>
    %329 = vector.shape_cast %328 : vector<1x128x128xbf16> to vector<128x128xbf16>
    %cst_304 = arith.constant dense<0.000000e+00> : vector<16x128xf32>
    %330 = tpu.matmul %327, %329, %cst_304 {dimension_numbers = #tpu.dot_dimension_numbers<[1], [0], [0], [1], [0, 0, 1, 1], [], []>} : vector<16x128xbf16>, vector<128x128xbf16>, vector<16x128xf32> -> vector<16x128xf32>
    %331 = arith.addf %324, %330 : vector<16x128xf32>
    %c1_305 = arith.constant 1 : index
    %c2_306 = arith.constant 2 : index
    %c16_307 = arith.constant 16 : index
    %332 = vector.load %arg13[%c1_305, %c2_306, %c16_307] : memref<2x18x144xf32, #tpu.memory_space<vmem>>, vector<1x16x128xf32>
    %333 = vector.shape_cast %332 : vector<1x16x128xf32> to vector<16x128xf32>
    %334 = arith.truncf %333 : vector<16x128xf32> to vector<16x128xbf16>
    %c8_308 = arith.constant 8 : index
    %c0_309 = arith.constant 0 : index
    %c0_310 = arith.constant 0 : index
    %335 = vector.load %arg5[%c8_308, %c0_309, %c0_310] : memref<9x128x128xbf16, #tpu.memory_space<vmem>>, vector<1x128x128xbf16>
    %336 = vector.shape_cast %335 : vector<1x128x128xbf16> to vector<128x128xbf16>
    %cst_311 = arith.constant dense<0.000000e+00> : vector<16x128xf32>
    %337 = tpu.matmul %334, %336, %cst_311 {dimension_numbers = #tpu.dot_dimension_numbers<[1], [0], [0], [1], [0, 0, 1, 1], [], []>} : vector<16x128xbf16>, vector<128x128xbf16>, vector<16x128xf32> -> vector<16x128xf32>
    %338 = arith.addf %331, %337 : vector<16x128xf32>
    %339 = vector.broadcast %2 : vector<1x128xf32> to vector<16x128xf32>
    %340 = arith.addf %338, %339 : vector<16x128xf32>
    %cst_312 = arith.constant dense<0.000000e+00> : vector<1x128xf32>
    %341 = tpu.matmul %0, %340, %cst_312 {dimension_numbers = #tpu.dot_dimension_numbers<[1], [0], [0], [1], [0, 0, 1, 1], [], []>} : vector<1x16xf32>, vector<16x128xf32>, vector<1x128xf32> -> vector<1x128xf32>
    %342 = arith.addf %268, %341 : vector<1x128xf32>
    %343 = arith.mulf %340, %340 : vector<16x128xf32>
    %cst_313 = arith.constant dense<0.000000e+00> : vector<1x128xf32>
    %344 = tpu.matmul %0, %343, %cst_313 {dimension_numbers = #tpu.dot_dimension_numbers<[1], [0], [0], [1], [0, 0, 1, 1], [], []>} : vector<1x16xf32>, vector<16x128xf32>, vector<1x128xf32> -> vector<1x128xf32>
    %345 = arith.addf %271, %344 : vector<1x128xf32>
    %c1_314 = arith.constant 1 : index
    %c0_315 = arith.constant 0 : index
    %c0_316 = arith.constant 0 : index
    %346 = vector.load %arg11[%c1_314, %c0_315, %c0_316] : memref<2x16x128xf32, #tpu.memory_space<vmem>>, vector<1x16x128xf32>
    %347 = vector.shape_cast %346 : vector<1x16x128xf32> to vector<16x128xf32>
    %348 = vector.shape_cast %340 : vector<16x128xf32> to vector<1x16x128xf32>
    tpu.vector_store %arg11[%c1_314, %c0_315, %c0_316], %348 {strides = array<i32>} : memref<2x16x128xf32, #tpu.memory_space<vmem>>, vector<1x16x128xf32>,
    %cst_317 = arith.constant dense<0.000000e+00> : vector<1x8xf32>
    %349 = tpu.matmul %342, %3, %cst_317 {dimension_numbers = #tpu.dot_dimension_numbers<[1], [0], [0], [1], [0, 0, 1, 1], [], []>} : vector<1x128xf32>, vector<128x8xf32>, vector<1x8xf32> -> vector<1x8xf32>
    %cst_318 = arith.constant dense<0.000000e+00> : vector<1x8xf32>
    %350 = tpu.matmul %345, %3, %cst_318 {dimension_numbers = #tpu.dot_dimension_numbers<[1], [0], [0], [1], [0, 0, 1, 1], [], []>} : vector<1x128xf32>, vector<128x8xf32>, vector<1x8xf32> -> vector<1x8xf32>
    %cst_319 = arith.constant 0.001953125 : f32
    %351 = vector.broadcast %cst_319 : f32 to vector<1x8xf32>
    %352 = arith.mulf %349, %351 : vector<1x8xf32>
    %cst_320 = arith.constant 0.001953125 : f32
    %353 = vector.broadcast %cst_320 : f32 to vector<1x8xf32>
    %354 = arith.mulf %350, %353 : vector<1x8xf32>
    %355 = arith.mulf %352, %352 : vector<1x8xf32>
    %356 = arith.subf %354, %355 : vector<1x8xf32>
    %cst_321 = arith.constant 0.000000e+00 : f32
    %357 = vector.broadcast %cst_321 : f32 to vector<1x8xf32>
    %358 = arith.maximumf %356, %357 : vector<1x8xf32>
    %c0_322 = arith.constant 0 : index
    %c0_323 = arith.constant 0 : index
    %359 = vector.load %arg7[%c0_322, %c0_323] : memref<1x8xf32, #tpu.memory_space<vmem>>, vector<1x8xf32>
    %cst_324 = arith.constant 9.99999974E-6 : f32
    %360 = vector.broadcast %cst_324 : f32 to vector<1x8xf32>
    %361 = arith.addf %358, %360 : vector<1x8xf32>
    %362 = math.rsqrt %361 : vector<1x8xf32>
    %363 = arith.mulf %359, %362 : vector<1x8xf32>
    %c0_325 = arith.constant 0 : index
    %c0_326 = arith.constant 0 : index
    %364 = vector.load %arg8[%c0_325, %c0_326] : memref<1x8xf32, #tpu.memory_space<vmem>>, vector<1x8xf32>
    %365 = arith.mulf %352, %363 : vector<1x8xf32>
    %366 = arith.subf %364, %365 : vector<1x8xf32>
    %cst_327 = arith.constant dense<0.000000e+00> : vector<1x128xf32>
    %367 = tpu.matmul %363, %4, %cst_327 {dimension_numbers = #tpu.dot_dimension_numbers<[1], [0], [0], [1], [0, 0, 1, 1], [], []>} : vector<1x8xf32>, vector<8x128xf32>, vector<1x128xf32> -> vector<1x128xf32>
    %cst_328 = arith.constant dense<0.000000e+00> : vector<1x128xf32>
    %368 = tpu.matmul %366, %4, %cst_328 {dimension_numbers = #tpu.dot_dimension_numbers<[1], [0], [0], [1], [0, 0, 1, 1], [], []>} : vector<1x8xf32>, vector<8x128xf32>, vector<1x128xf32> -> vector<1x128xf32>
    %c0_329 = arith.constant 0 : index
    %c0_330 = arith.constant 0 : index
    %c0_331 = arith.constant 0 : index
    %369 = vector.load %arg11[%c0_329, %c0_330, %c0_331] : memref<2x16x128xf32, #tpu.memory_space<vmem>>, vector<2x16x128xf32>
    %370 = vector.shape_cast %367 : vector<1x128xf32> to vector<1x1x128xf32>
    %371 = vector.broadcast %370 : vector<1x1x128xf32> to vector<2x16x128xf32>
    %372 = arith.mulf %369, %371 : vector<2x16x128xf32>
    %373 = vector.shape_cast %368 : vector<1x128xf32> to vector<1x1x128xf32>
    %374 = vector.broadcast %373 : vector<1x1x128xf32> to vector<2x16x128xf32>
    %375 = arith.addf %372, %374 : vector<2x16x128xf32>
    %cst_332 = arith.constant 0.000000e+00 : f32
    %376 = vector.broadcast %cst_332 : f32 to vector<2x16x128xf32>
    %377 = arith.maximumf %375, %376 : vector<2x16x128xf32>
    %c0_333 = arith.constant 0 : index
    %c0_334 = arith.constant 0 : index
    %c0_335 = arith.constant 0 : index
    %378 = vector.load %arg11[%c0_333, %c0_334, %c0_335] : memref<2x16x128xf32, #tpu.memory_space<vmem>>, vector<2x16x128xf32>
    tpu.vector_store %arg11[%c0_333, %c0_334, %c0_335], %377 {strides = array<i32>} : memref<2x16x128xf32, #tpu.memory_space<vmem>>, vector<2x16x128xf32>,
    return
  }
}

</mosaic_0001>

<llo_original>
// kernel: tile.25
$region0: #{tile.25}
  %s0 = inlined_call_operand.vmem [shape: f32[16,8,8], index: 0, kind: input, shape index: {}]
  %s1 = inlined_call_operand.vmem [shape: f32[128,8], index: 1, kind: output, shape index: {}]
  %s2 = smov 3
  %v3 = vld [vmem:[%s0] ss:$16 sm:%s2]
  %s4 = smov 12
  %v5 = vld [vmem:[%s0] ss:$16 sm:%s4]
  %vm6 = vcmask 1043458
  %v7 = vsel %vm6, %v5, %v3
  %s8 = smov 48
  %v9 = vld [vmem:[%s0] ss:$16 sm:%s8]
  %vm10 = vcmask 1045508
  %v11 = vsel %vm10, %v9, %v7
  %s12 = smov 192
  %v13 = vld [vmem:[%s0] ss:$16 sm:%s12]
  %vm14 = vcmask 1047558
  %v15 = vsel %vm14, %v13, %v11
  %vm16 = vcmask 64512
  %17 = vst.msk [vmem:[%s1] sm:$0xff] %vm16, %v15
  %s18 = scalar_lea.vmem %s0, 15
  %s19 = smov 3
  %v20 = vld [vmem:[%s18] ss:$16 sm:%s19]
  %s21 = scalar_lea.vmem %s0, 15
  %s22 = smov 12
  %v23 = vld [vmem:[%s21] ss:$16 sm:%s22]
  %vm24 = vcmask 1043458
  %v25 = vsel %vm24, %v23, %v20
  %s26 = scalar_lea.vmem %s0, 15
  %s27 = smov 48
  %v28 = vld [vmem:[%s26] ss:$16 sm:%s27]
  %vm29 = vcmask 1045508
  %v30 = vsel %vm29, %v28, %v25
  %s31 = scalar_lea.vmem %s0, 15
  %s32 = smov 192
  %v33 = vld [vmem:[%s31] ss:$16 sm:%s32]
  %vm34 = vcmask 1047558
  %v35 = vsel %vm34, %v33, %v30
  %36 = vrot.lane.b32.xlu0 %v35, 120
  %v37 = vpop.permute.xlu0 %36
  %vm38 = vcmask 1048512
  %39 = vst.msk [vmem:[%s1] sm:$0xff] %vm38, %v37
  %s40 = scalar_lea.vmem %s0, 14
  %s41 = smov 3
  %v42 = vld [vmem:[%s40] ss:$16 sm:%s41]
  %s43 = scalar_lea.vmem %s0, 14
  %s44 = smov 12
  %v45 = vld [vmem:[%s43] ss:$16 sm:%s44]
  %vm46 = vcmask 1043458
  %v47 = vsel %vm46, %v45, %v42
  %s48 = scalar_lea.vmem %s0, 14
  %s49 = smov 48
  %v50 = vld [vmem:[%s48] ss:$16 sm:%s49]
  %vm51 = vcmask 1045508
  %v52 = vsel %vm51, %v50, %v47
  %s53 = scalar_lea.vmem %s0, 14
  %s54 = smov 192
  %v55 = vld [vmem:[%s53] ss:$16 sm:%s54]
  %vm56 = vcmask 1047558
  %v57 = vsel %vm56, %v55, %v52
  %58 = vrot.lane.b32.xlu0 %v57, 112
  %v59 = vpop.permute.xlu0 %58
  %vm60 = vcmask 982912
  %61 = vst.msk [vmem:[%s1] sm:$0xff] %vm60, %v59
  %s62 = scalar_lea.vmem %s0, 13
  %s63 = smov 3
  %v64 = vld [vmem:[%s62] ss:$16 sm:%s63]
  %s65 = scalar_lea.vmem %s0, 13
  %s66 = smov 12
  %v67 = vld [vmem:[%s65] ss:$16 sm:%s66]
  %vm68 = vcmask 1043458
  %v69 = vsel %vm68, %v67, %v64
  %s70 = scalar_lea.vmem %s0, 13
  %s71 = smov 48
  %v72 = vld [vmem:[%s70] ss:$16 sm:%s71]
  %vm73 = vcmask 1045508
  %v74 = vsel %vm73, %v72, %v69
  %s75 = scalar_lea.vmem %s0, 13
  %s76 = smov 192
  %v77 = vld [vmem:[%s75] ss:$16 sm:%s76]
  %vm78 = vcmask 1047558
  %v79 = vsel %vm78, %v77, %v74
  %80 = vrot.lane.b32.xlu0 %v79, 104
  %v81 = vpop.permute.xlu0 %80
  %vm82 = vcmask 917312
  %83 = vst.msk [vmem:[%s1] sm:$0xff] %vm82, %v81
  %s84 = scalar_lea.vmem %s0, 12
  %s85 = smov 3
  %v86 = vld [vmem:[%s84] ss:$16 sm:%s85]
  %s87 = scalar_lea.vmem %s0, 12
  %s88 = smov 12
  %v89 = vld [vmem:[%s87] ss:$16 sm:%s88]
  %vm90 = vcmask 1043458
  %v91 = vsel %vm90, %v89, %v86
  %s92 = scalar_lea.vmem %s0, 12
  %s93 = smov 48
  %v94 = vld [vmem:[%s92] ss:$16 sm:%s93]
  %vm95 = vcmask 1045508
  %v96 = vsel %vm95, %v94, %v91
  %s97 = scalar_lea.vmem %s0, 12
  %s98 = smov 192
  %v99 = vld [vmem:[%s97] ss:$16 sm:%s98]
  %vm100 = vcmask 1047558
  %v101 = vsel %vm100, %v99, %v96
  %102 = vrot.lane.b32.xlu0 %v101, 96
  %v103 = vpop.permute.xlu0 %102
  %vm104 = vcmask 851712
  %105 = vst.msk [vmem:[%s1] sm:$0xff] %vm104, %v103
  %s106 = scalar_lea.vmem %s0, 11
  %s107 = smov 3
  %v108 = vld [vmem:[%s106] ss:$16 sm:%s107]
  %s109 = scalar_lea.vmem %s0, 11
  %s110 = smov 12
  %v111 = vld [vmem:[%s109] ss:$16 sm:%s110]
  %vm112 = vcmask 1043458
  %v113 = vsel %vm112, %v111, %v108
  %s114 = scalar_lea.vmem %s0, 11
  %s115 = smov 48
  %v116 = vld [vmem:[%s114] ss:$16 sm:%s115]
  %vm117 = vcmask 1045508
  %v118 = vsel %vm117, %v116, %v113
  %s119 = scalar_lea.vmem %s0, 11
  %s120 = smov 192
  %v121 = vld [vmem:[%s119] ss:$16 sm:%s120]
  %vm122 = vcmask 1047558
  %v123 = vsel %vm122, %v121, %v118
  %124 = vrot.lane.b32.xlu0 %v123, 88
  %v125 = vpop.permute.xlu0 %124
  %vm126 = vcmask 786112
  %127 = vst.msk [vmem:[%s1] sm:$0xff] %vm126, %v125
  %s128 = scalar_lea.vmem %s0, 10
  %s129 = smov 3
  %v130 = vld [vmem:[%s128] ss:$16 sm:%s129]
  %s131 = scalar_lea.vmem %s0, 10
  %s132 = smov 12
  %v133 = vld [vmem:[%s131] ss:$16 sm:%s132]
  %vm134 = vcmask 1043458
  %v135 = vsel %vm134, %v133, %v130
  %s136 = scalar_lea.vmem %s0, 10
  %s137 = smov 48
  %v138 = vld [vmem:[%s136] ss:$16 sm:%s137]
  %vm139 = vcmask 1045508
  %v140 = vsel %vm139, %v138, %v135
  %s141 = scalar_lea.vmem %s0, 10
  %s142 = smov 192
  %v143 = vld [vmem:[%s141] ss:$16 sm:%s142]
  %vm144 = vcmask 1047558
  %v145 = vsel %vm144, %v143, %v140
  %146 = vrot.lane.b32.xlu0 %v145, 80
  %v147 = vpop.permute.xlu0 %146
  %vm148 = vcmask 720512
  %149 = vst.msk [vmem:[%s1] sm:$0xff] %vm148, %v147
  %s150 = scalar_lea.vmem %s0, 9
  %s151 = smov 3
  %v152 = vld [vmem:[%s150] ss:$16 sm:%s151]
  %s153 = scalar_lea.vmem %s0, 9
  %s154 = smov 12
  %v155 = vld [vmem:[%s153] ss:$16 sm:%s154]
  %vm156 = vcmask 1043458
  %v157 = vsel %vm156, %v155, %v152
  %s158 = scalar_lea.vmem %s0, 9
  %s159 = smov 48
  %v160 = vld [vmem:[%s158] ss:$16 sm:%s159]
  %vm161 = vcmask 1045508
  %v162 = vsel %vm161, %v160, %v157
  %s163 = scalar_lea.vmem %s0, 9
  %s164 = smov 192
  %v165 = vld [vmem:[%s163] ss:$16 sm:%s164]
  %vm166 = vcmask 1047558
  %v167 = vsel %vm166, %v165, %v162
  %168 = vrot.lane.b32.xlu0 %v167, 72
  %v169 = vpop.permute.xlu0 %168
  %vm170 = vcmask 654912
  %171 = vst.msk [vmem:[%s1] sm:$0xff] %vm170, %v169
  %s172 = scalar_lea.vmem %s0, 8
  %s173 = smov 3
  %v174 = vld [vmem:[%s172] ss:$16 sm:%s173]
  %s175 = scalar_lea.vmem %s0, 8
  %s176 = smov 12
  %v177 = vld [vmem:[%s175] ss:$16 sm:%s176]
  %vm178 = vcmask 1043458
  %v179 = vsel %vm178, %v177, %v174
  %s180 = scalar_lea.vmem %s0, 8
  %s181 = smov 48
  %v182 = vld [vmem:[%s180] ss:$16 sm:%s181]
  %vm183 = vcmask 1045508
  %v184 = vsel %vm183, %v182, %v179
  %s185 = scalar_lea.vmem %s0, 8
  %s186 = smov 192
  %v187 = vld [vmem:[%s185] ss:$16 sm:%s186]
  %vm188 = vcmask 1047558
  %v189 = vsel %vm188, %v187, %v184
  %190 = vrot.lane.b32.xlu0 %v189, 64
  %v191 = vpop.permute.xlu0 %190
  %vm192 = vcmask 589312
  %193 = vst.msk [vmem:[%s1] sm:$0xff] %vm192, %v191
  %s194 = scalar_lea.vmem %s0, 7
  %s195 = smov 3
  %v196 = vld [vmem:[%s194] ss:$16 sm:%s195]
  %s197 = scalar_lea.vmem %s0, 7
  %s198 = smov 12
  %v199 = vld [vmem:[%s197] ss:$16 sm:%s198]
  %vm200 = vcmask 1043458
  %v201 = vsel %vm200, %v199, %v196
  %s202 = scalar_lea.vmem %s0, 7
  %s203 = smov 48
  %v204 = vld [vmem:[%s202] ss:$16 sm:%s203]
  %vm205 = vcmask 1045508
  %v206 = vsel %vm205, %v204, %v201
  %s207 = scalar_lea.vmem %s0, 7
  %s208 = smov 192
  %v209 = vld [vmem:[%s207] ss:$16 sm:%s208]
  %vm210 = vcmask 1047558
  %v211 = vsel %vm210, %v209, %v206
  %212 = vrot.lane.b32.xlu0 %v211, 56
  %v213 = vpop.permute.xlu0 %212
  %vm214 = vcmask 523712
  %215 = vst.msk [vmem:[%s1] sm:$0xff] %vm214, %v213
  %s216 = scalar_lea.vmem %s0, 6
  %s217 = smov 3
  %v218 = vld [vmem:[%s216] ss:$16 sm:%s217]
  %s219 = scalar_lea.vmem %s0, 6
  %s220 = smov 12
  %v221 = vld [vmem:[%s219] ss:$16 sm:%s220]
  %vm222 = vcmask 1043458
  %v223 = vsel %vm222, %v221, %v218
  %s224 = scalar_lea.vmem %s0, 6
  %s225 = smov 48
  %v226 = vld [vmem:[%s224] ss:$16 sm:%s225]
  %vm227 = vcmask 1045508
  %v228 = vsel %vm227, %v226, %v223
  %s229 = scalar_lea.vmem %s0, 6
  %s230 = smov 192
  %v231 = vld [vmem:[%s229] ss:$16 sm:%s230]
  %vm232 = vcmask 1047558
  %v233 = vsel %vm232, %v231, %v228
  %234 = vrot.lane.b32.xlu0 %v233, 48
  %v235 = vpop.permute.xlu0 %234
  %vm236 = vcmask 458112
  %237 = vst.msk [vmem:[%s1] sm:$0xff] %vm236, %v235
  %s238 = scalar_lea.vmem %s0, 5
  %s239 = smov 3
  %v240 = vld [vmem:[%s238] ss:$16 sm:%s239]
  %s241 = scalar_lea.vmem %s0, 5
  %s242 = smov 12
  %v243 = vld [vmem:[%s241] ss:$16 sm:%s242]
  %vm244 = vcmask 1043458
  %v245 = vsel %vm244, %v243, %v240
  %s246 = scalar_lea.vmem %s0, 5
  %s247 = smov 48
  %v248 = vld [vmem:[%s246] ss:$16 sm:%s247]
  %vm249 = vcmask 1045508
  %v250 = vsel %vm249, %v248, %v245
  %s251 = scalar_lea.vmem %s0, 5
  %s252 = smov 192
  %v253 = vld [vmem:[%s251] ss:$16 sm:%s252]
  %vm254 = vcmask 1047558
  %v255 = vsel %vm254, %v253, %v250
  %256 = vrot.lane.b32.xlu0 %v255, 40
  %v257 = vpop.permute.xlu0 %256
  %vm258 = vcmask 392512
  %259 = vst.msk [vmem:[%s1] sm:$0xff] %vm258, %v257
  %s260 = scalar_lea.vmem %s0, 4
  %s261 = smov 3
  %v262 = vld [vmem:[%s260] ss:$16 sm:%s261]
  %s263 = scalar_lea.vmem %s0, 4
  %s264 = smov 12
  %v265 = vld [vmem:[%s263] ss:$16 sm:%s264]
  %vm266 = vcmask 1043458
  %v267 = vsel %vm266, %v265, %v262
  %s268 = scalar_lea.vmem %s0, 4
  %s269 = smov 48
  %v270 = vld [vmem:[%s268] ss:$16 sm:%s269]
  %vm271 = vcmask 1045508
  %v272 = vsel %vm271, %v270, %v267
  %s273 = scalar_lea.vmem %s0, 4
  %s274 = smov 192
  %v275 = vld [vmem:[%s273] ss:$16 sm:%s274]
  %vm276 = vcmask 1047558
  %v277 = vsel %vm276, %v275, %v272
  %278 = vrot.lane.b32.xlu0 %v277, 32
  %v279 = vpop.permute.xlu0 %278
  %vm280 = vcmask 326912
  %281 = vst.msk [vmem:[%s1] sm:$0xff] %vm280, %v279
  %s282 = scalar_lea.vmem %s0, 3
  %s283 = smov 3
  %v284 = vld [vmem:[%s282] ss:$16 sm:%s283]
  %s285 = scalar_lea.vmem %s0, 3
  %s286 = smov 12
  %v287 = vld [vmem:[%s285] ss:$16 sm:%s286]
  %vm288 = vcmask 1043458
  %v289 = vsel %vm288, %v287, %v284
  %s290 = scalar_lea.vmem %s0, 3
  %s291 = smov 48
  %v292 = vld [vmem:[%s290] ss:$16 sm:%s291]
  %vm293 = vcmask 1045508
  %v294 = vsel %vm293, %v292, %v289
  %s295 = scalar_lea.vmem %s0, 3
  %s296 = smov 192
  %v297 = vld [vmem:[%s295] ss:$16 sm:%s296]
  %vm298 = vcmask 1047558
  %v299 = vsel %vm298, %v297, %v294
  %300 = vrot.lane.b32.xlu0 %v299, 24
  %v301 = vpop.permute.xlu0 %300
  %vm302 = vcmask 261312
  %303 = vst.msk [vmem:[%s1] sm:$0xff] %vm302, %v301
  %s304 = scalar_lea.vmem %s0, 2
  %s305 = smov 3
  %v306 = vld [vmem:[%s304] ss:$16 sm:%s305]
  %s307 = scalar_lea.vmem %s0, 2
  %s308 = smov 12
  %v309 = vld [vmem:[%s307] ss:$16 sm:%s308]
  %vm310 = vcmask 1043458
  %v311 = vsel %vm310, %v309, %v306
  %s312 = scalar_lea.vmem %s0, 2
  %s313 = smov 48
  %v314 = vld [vmem:[%s312] ss:$16 sm:%s313]
  %vm315 = vcmask 1045508
  %v316 = vsel %vm315, %v314, %v311
  %s317 = scalar_lea.vmem %s0, 2
  %s318 = smov 192
  %v319 = vld [vmem:[%s317] ss:$16 sm:%s318]
  %vm320 = vcmask 1047558
  %v321 = vsel %vm320, %v319, %v316
  %322 = vrot.lane.b32.xlu0 %v321, 16
  %v323 = vpop.permute.xlu0 %322
  %vm324 = vcmask 195712
  %325 = vst.msk [vmem:[%s1] sm:$0xff] %vm324, %v323
  %s326 = scalar_lea.vmem %s0, 1
  %s327 = smov 3
  %v328 = vld [vmem:[%s326] ss:$16 sm:%s327]
  %s329 = scalar_lea.vmem %s0, 1
  %s330 = smov 12
  %v331 = vld [vmem:[%s329] ss:$16 sm:%s330]
  %vm332 = vcmask 1043458
  %v333 = vsel %vm332, %v331, %v328
  %s334 = scalar_lea.vmem %s0, 1
  %s335 = smov 48
  %v336 = vld [vmem:[%s334] ss:$16 sm:%s335]
  %vm337 = vcmask 1045508
  %v338 = vsel %vm337, %v336, %v333
  %s339 = scalar_lea.vmem %s0, 1
  %s340 = smov 192
  %v341 = vld [vmem:[%s339] ss:$16 sm:%s340]
  %vm342 = vcmask 1047558
  %v343 = vsel %vm342, %v341, %v338
  %344 = vrot.lane.b32.xlu0 %v343, 8
  %v345 = vpop.permute.xlu0 %344
  %vm346 = vcmask 130112
  %347 = vst.msk [vmem:[%s1] sm:$0xff] %vm346, %v345

// kernel: conv_block_forward.1
$region0: #{conv_block_forward.1}
  #allocation0 [shape = 'u32[]', space=smem, size = 0x4, offset = 0x4, fixed_abs, tag = 'smem constant byte address 0x4 - core index']
  #allocation1 [shape = 'u32[144,128]{1,0:T(1,128)}', space=vmem, size = 0x12000, scoped, tag = 'internal scratch']
  #allocation2 [shape = 'f32[2,18,72]{2,1,0:T(8,128)}', space=vmem, size = 0x6000, scoped, tag = 'scratch operand']
  #allocation3 [shape = 'f32[2,18,144]{2,1,0:T(8,128)}', space=vmem, size = 0xc000, scoped, tag = 'scratch operand']
  %s0 = inlined_call_operand.vmem [shape: f32[2,16,64], index: 0, kind: input, shape index: {}]
  %s1 = inlined_call_operand.vmem [shape: bf16[9,64,128], index: 1, kind: input, shape index: {}]
  %s2 = inlined_call_operand.vmem [shape: f32[1,128], index: 2, kind: input, shape index: {}]
  %s3 = inlined_call_operand.vmem [shape: f32[1,8], index: 3, kind: input, shape index: {}]
  %s4 = inlined_call_operand.vmem [shape: f32[1,8], index: 4, kind: input, shape index: {}]
  %s5 = inlined_call_operand.vmem [shape: bf16[9,128,128], index: 5, kind: input, shape index: {}]
  %s6 = inlined_call_operand.vmem [shape: f32[1,128], index: 6, kind: input, shape index: {}]
  %s7 = inlined_call_operand.vmem [shape: f32[1,8], index: 7, kind: input, shape index: {}]
  %s8 = inlined_call_operand.vmem [shape: f32[1,8], index: 8, kind: input, shape index: {}]
  %s9 = inlined_call_operand.vmem [shape: f32[128,8], index: 9, kind: input, shape index: {}]
  %s10 = inlined_call_operand.vmem [shape: f32[8,128], index: 10, kind: input, shape index: {}]
  %s11 = inlined_call_operand.vmem [shape: f32[2,16,128], index: 11, kind: output, shape index: {}]
  %s12 = sld [smem:[#allocation0]]
  $region54: #{conv_block_forward.1} parent=0
    _
  %s14 = ssub.s32 1, %s12
  %s15 = scalar_select 0, %s14, %s12
  // Predicated region
  $region2: #{conv_block_forward.1} parent=0 // pred_check
    _
  $region3: #{conv_block_forward.1} parent=0 // pred_check_branch
    %17 = sbr.rel (0) target = $region5
  $region4: #{conv_block_forward.1} parent=0 // pred_region
    _
  $region5: #{conv_block_forward.1} parent=0 // pred_fallthru
    _
  // Predicated region
  $region6: #{conv_block_forward.1} parent=0 // pred_check
    _
  $region7: #{conv_block_forward.1} parent=0 // pred_check_branch
    %19 = sbr.rel (0) target = $region9
  $region8: #{conv_block_forward.1} parent=0 // pred_region
    _
  $region9: #{conv_block_forward.1} parent=0 // pred_fallthru
    _
  // Predicated region
  $region10: #{conv_block_forward.1} parent=0 // pred_check
    _
  $region11: #{conv_block_forward.1} parent=0 // pred_check_branch
    %21 = sbr.rel (0) target = $region13
  $region12: #{conv_block_forward.1} parent=0 // pred_region
    _
  $region13: #{conv_block_forward.1} parent=0 // pred_fallthru
    _
  // Predicated region
  $region14: #{conv_block_forward.1} parent=0 // pred_check
    _
  $region15: #{conv_block_forward.1} parent=0 // pred_check_branch
    %23 = sbr.rel (0) target = $region17
  $region16: #{conv_block_forward.1} parent=0 // pred_region
    _
  $region17: #{conv_block_forward.1} parent=0 // pred_fallthru
    _
  // Predicated region
  $region18: #{conv_block_forward.1} parent=0 // pred_check
    _
  $region19: #{conv_block_forward.1} parent=0 // pred_check_branch
    %25 = sbr.rel (0) target = $region21
  $region20: #{conv_block_forward.1} parent=0 // pred_region
    _
  $region21: #{conv_block_forward.1} parent=0 // pred_fallthru
    _
  // Predicated region
  $region22: #{conv_block_forward.1} parent=0 // pred_check
    _
  $region23: #{conv_block_forward.1} parent=0 // pred_check_branch
    %27 = sbr.rel (0) target = $region25
  $region24: #{conv_block_forward.1} parent=0 // pred_region
    _
  $region25: #{conv_block_forward.1} parent=0 // pred_fallthru
    _
  // Predicated region
  $region26: #{conv_block_forward.1} parent=0 // pred_check
    _
  $region27: #{conv_block_forward.1} parent=0 // pred_check_branch
    %29 = sbr.rel (0) target = $region29
  $region28: #{conv_block_forward.1} parent=0 // pred_region
    _
  $region29: #{conv_block_forward.1} parent=0 // pred_fallthru
    _
  // Predicated region
  $region30: #{conv_block_forward.1} parent=0 // pred_check
    _
  $region31: #{conv_block_forward.1} parent=0 // pred_check_branch
    %31 = sbr.rel (0) target = $region33
  $region32: #{conv_block_forward.1} parent=0 // pred_region
    _
  $region33: #{conv_block_forward.1} parent=0 // pred_fallthru
    _
  // Predicated region
  $region34: #{conv_block_forward.1} parent=0 // pred_check
    _
  $region35: #{conv_block_forward.1} parent=0 // pred_check_branch
    %33 = sbr.rel (0) target = $region37
  $region36: #{conv_block_forward.1} parent=0 // pred_region
    _
  $region37: #{conv_block_forward.1} parent=0 // pred_fallthru
    _
  // Predicated region
  $region38: #{conv_block_forward.1} parent=0 // pred_check
    _
  $region39: #{conv_block_forward.1} parent=0 // pred_check_branch
    %35 = sbr.rel (0) target = $region41
  $region40: #{conv_block_forward.1} parent=0 // pred_region
    _
  $region41: #{conv_block_forward.1} parent=0 // pred_fallthru
    _
  // Predicated region
  $region42: #{conv_block_forward.1} parent=0 // pred_check
    _
  $region43: #{conv_block_forward.1} parent=0 // pred_check_branch
    %37 = sbr.rel (0) target = $region45
  $region44: #{conv_block_forward.1} parent=0 // pred_region
    _
  $region45: #{conv_block_forward.1} parent=0 // pred_fallthru
    _
  %v39 = vld [vmem:[%s2] sm:$0x1]
  %v40 = vld [vmem:[%s6] sm:$0x1]
  %v41 = vld [vmem:[%s9] sm:$0xff]
  %v42 = vld [vmem:[%s9 + $0x8] sm:$0xff]
  %v43 = vld [vmem:[%s9 + $0x10] sm:$0xff]
  %v44 = vld [vmem:[%s9 + $0x18] sm:$0xff]
  %v45 = vld [vmem:[%s9 + $0x20] sm:$0xff]
  %v46 = vld [vmem:[%s9 + $0x28] sm:$0xff]
  %v47 = vld [vmem:[%s9 + $0x30] sm:$0xff]
  %v48 = vld [vmem:[%s9 + $0x38] sm:$0xff]
  %v49 = vld [vmem:[%s9 + $0x40] sm:$0xff]
  %v50 = vld [vmem:[%s9 + $0x48] sm:$0xff]
  %v51 = vld [vmem:[%s9 + $0x50] sm:$0xff]
  %v52 = vld [vmem:[%s9 + $0x58] sm:$0xff]
  %v53 = vld [vmem:[%s9 + $0x60] sm:$0xff]
  %v54 = vld [vmem:[%s9 + $0x68] sm:$0xff]
  %v55 = vld [vmem:[%s9 + $0x70] sm:$0xff]
  %v56 = vld [vmem:[%s9 + $0x78] sm:$0xff]
  %v57 = vld [vmem:[%s10] sm:$0xff]
  %vm58 = vcmask 588800
  %59 = vst.msk [vmem:[#allocation2] sm:$0xff] %vm58, 0.0
  %60 = vst.msk [vmem:[#allocation2 + $0x8] sm:$0xff] %vm58, 0.0
  %vm61 = vcmask 582656
  %62 = vst.msk [vmem:[#allocation2 + $0x10] sm:$0x3] %vm61, 0.0
  %63 = vst.msk [vmem:[#allocation2 + $0x18] sm:$0xff] %vm58, 0.0
  %64 = vst.msk [vmem:[#allocation2 + $0x20] sm:$0xff] %vm58, 0.0
  %65 = vst.msk [vmem:[#allocation2 + $0x28] sm:$0x3] %vm61, 0.0
  %66 = vst [vmem:[#allocation3] sm:$0xff] 0.0
  %vm67 = vcmask 130048
  %68 = vst.msk [vmem:[#allocation3 + $0x8] sm:$0xff] %vm67, 0.0
  %69 = vst [vmem:[#allocation3 + $0x10] sm:$0xff] 0.0
  %70 = vst.msk [vmem:[#allocation3 + $0x18] sm:$0xff] %vm67, 0.0
  %71 = vst [vmem:[#allocation3 + $0x20] sm:$0x3] 0.0
  %vm72 = vcmask 123904
  %73 = vst.msk [vmem:[#allocation3 + $0x28] sm:$0x3] %vm72, 0.0
  %74 = vst [vmem:[#allocation3 + $0x30] sm:$0xff] 0.0
  %75 = vst.msk [vmem:[#allocation3 + $0x38] sm:$0xff] %vm67, 0.0
  %76 = vst [vmem:[#allocation3 + $0x40] sm:$0xff] 0.0
  %77 = vst.msk [vmem:[#allocation3 + $0x48] sm:$0xff] %vm67, 0.0
  %78 = vst [vmem:[#allocation3 + $0x50] sm:$0x3] 0.0
  %79 = vst.msk [vmem:[#allocation3 + $0x58] sm:$0x3] %vm72, 0.0
  %v80 = vld [vmem:[%s0] sm:$0xff]
  %v81 = vld [vmem:[%s0 + $0x8] sm:$0xff]
  %84 = vrot.lane.b32.xlu0 %v80, 4
  %v85 = vpop.permute.xlu0 %84
  %86 = vrot.lane.b32.xlu0 %v81, 4
  %v87 = vpop.permute.xlu0 %86
  %vm90 = vcmask 556064
  %91 = vst.msk [vmem:[#allocation2 + $0x1] sm:$0xff] %vm90, %v85
  %92 = vst.msk [vmem:[#allocation2 + $0x9] sm:$0xff] %vm90, %v87
  %v93 = vld [vmem:[#allocation2] sm:$0xff]
  %v94 = vld [vmem:[#allocation2 + $0x8] sm:$0xff]
  %v95 = vpack.c.bf16 %v94, %v93
  %v96 = vld [vmem:[%s1] sm:$0xf]
  %v97 = vld [vmem:[%s1 + $0x4] sm:$0xf]
  %v98 = vld [vmem:[%s1 + $0x8] sm:$0xf]
  %v99 = vld [vmem:[%s1 + $0xc] sm:$0xf]
  %v100 = vld [vmem:[%s1 + $0x10] sm:$0xf]
  %v101 = vld [vmem:[%s1 + $0x14] sm:$0xf]
  %v102 = vld [vmem:[%s1 + $0x18] sm:$0xf]
  %v103 = vld [vmem:[%s1 + $0x1c] sm:$0xf]
  %s104 = scalar_lea.vmem %s1, 32
  %v105 = vld [vmem:[%s104] sm:$0xf]
  %v106 = vld [vmem:[%s104 + $0x4] sm:$0xf]
  %v107 = vld [vmem:[%s104 + $0x8] sm:$0xf]
  %v108 = vld [vmem:[%s104 + $0xc] sm:$0xf]
  %v109 = vld [vmem:[%s104 + $0x10] sm:$0xf]
  %v110 = vld [vmem:[%s104 + $0x14] sm:$0xf]
  %v111 = vld [vmem:[%s104 + $0x18] sm:$0xf]
  %v112 = vld [vmem:[%s104 + $0x1c] sm:$0xf]
  %114 = vrot.lane.b32.xlu0 %v95, 124
  %v115 = vpop.permute.xlu0 %114
  %v124 = vunpack.c.l.b16 %v105
  %v125 = vunpack.c.l.b16 %v106
  %v126 = vunpack.c.l.b16 %v107
  %v127 = vunpack.c.l.b16 %v108
  %v128 = vunpack.c.l.b16 %v109
  %v129 = vunpack.c.l.b16 %v110
  %v130 = vunpack.c.l.b16 %v111
  %v131 = vunpack.c.l.b16 %v112
  %v132 = vpack.c.b16 %v125, %v124
  %v133 = vpack.c.b16 %v127, %v126
  %v134 = vpack.c.b16 %v129, %v128
  %v135 = vpack.c.b16 %v131, %v130
  %vm140 = vcmask 523264
  %v142 = vsel %vm140, %v115, 0
  %144 = vmatprep.subr.bf16.mxu0 0
  %145 = vmatpush1.bf16.msra.mxu0 0
  %146 = vmatprep.subr.bf16.mxu0 0
  %147 = vmatpush1.bf16.msra.mxu0 0
  %148 = vmatprep.subr.bf16.mxu0 0
  %149 = vmatpush1.bf16.msra.mxu0 0
  %150 = vmatprep.subr.bf16.mxu0 0
  %151 = vmatpush1.bf16.msra.mxu0 0
  %152 = vmatprep.subr.bf16.mxu0 0
  %153 = vmatpush1.bf16.msra.mxu0 %v135
  %154 = vmatprep.subr.bf16.mxu0 0
  %155 = vmatpush1.bf16.msra.mxu0 %v134
  %156 = vmatprep.subr.bf16.mxu0 0
  %157 = vmatpush1.bf16.msra.mxu0 %v133
  %158 = vmatprep.subr.bf16.mxu0 0
  %159 = vmatpush1.bf16.msra.mxu0 %v132
  %160 = vmatprep.subr.bf16.mxu0 0
  %161 = vmatpush2.bf16.msra.mxu0 0
  %162 = vmatprep.subr.bf16.mxu0 0
  %163 = vmatpush2.bf16.msra.mxu0 0
  %164 = vmatprep.subr.bf16.mxu0 0
  %165 = vmatpush2.bf16.msra.mxu0 0
  %166 = vmatprep.subr.bf16.mxu0 0
  %167 = vmatpush2.bf16.msra.mxu0 0
  %168 = vmatprep.subr.bf16.mxu0 0
  %169 = vmatpush2.bf16.msra.mxu0 0
  %170 = vmatprep.subr.bf16.mxu0 0
  %171 = vmatpush2.bf16.msra.mxu0 0
  %172 = vmatprep.subr.bf16.mxu0 0
  %173 = vmatpush2.bf16.msra.mxu0 0
  %174 = vmatprep.subr.bf16.mxu0 0
  %175 = vmatpush2.bf16.msra.mxu0 0
  %176 = vmatprep.mubr.bf16.mxu0 0
  %177 = vmatmul.mubr.bf16.gmra.mxu0 %v142
  %v178 = vpop.f32.mrf.mxu0
  %v179 = vadd.f32 0.0, %v178
  %v180 = vpop.f32.mrf.mxu0
  %v181 = vpop.f32.mrf.mxu0
  %v182 = vadd.f32 0.0, %v181
  %v183 = vpop.f32.mrf.mxu0
  %184 = vdwg.mxu0
  %v193 = vunpack.c.l.b16 %v96
  %v194 = vunpack.c.l.b16 %v97
  %v195 = vunpack.c.l.b16 %v98
  %v196 = vunpack.c.l.b16 %v99
  %v197 = vunpack.c.l.b16 %v100
  %v198 = vunpack.c.l.b16 %v101
  %v199 = vunpack.c.l.b16 %v102
  %v200 = vunpack.c.l.b16 %v103
  %v201 = vpack.c.b16 %v194, %v193
  %v202 = vpack.c.b16 %v196, %v195
  %v203 = vpack.c.b16 %v198, %v197
  %v204 = vpack.c.b16 %v200, %v199
  %v210 = vsel %vm140, %v95, 0
  %212 = vmatprep.subr.bf16.mxu0 0
  %213 = vmatpush1.bf16.msra.mxu0 0
  %214 = vmatprep.subr.bf16.mxu0 0
  %215 = vmatpush1.bf16.msra.mxu0 0
  %216 = vmatprep.subr.bf16.mxu0 0
  %217 = vmatpush1.bf16.msra.mxu0 0
  %218 = vmatprep.subr.bf16.mxu0 0
  %219 = vmatpush1.bf16.msra.mxu0 0
  %220 = vmatprep.subr.bf16.mxu0 0
  %221 = vmatpush1.bf16.msra.mxu0 %v204
  %222 = vmatprep.subr.bf16.mxu0 0
  %223 = vmatpush1.bf16.msra.mxu0 %v203
  %224 = vmatprep.subr.bf16.mxu0 0
  %225 = vmatpush1.bf16.msra.mxu0 %v202
  %226 = vmatprep.subr.bf16.mxu0 0
  %227 = vmatpush1.bf16.msra.mxu0 %v201
  %228 = vmatprep.subr.bf16.mxu0 0
  %229 = vmatpush2.bf16.msra.mxu0 0
  %230 = vmatprep.subr.bf16.mxu0 0
  %231 = vmatpush2.bf16.msra.mxu0 0
  %232 = vmatprep.subr.bf16.mxu0 0
  %233 = vmatpush2.bf16.msra.mxu0 0
  %234 = vmatprep.subr.bf16.mxu0 0
  %235 = vmatpush2.bf16.msra.mxu0 0
  %236 = vmatprep.subr.bf16.mxu0 0
  %237 = vmatpush2.bf16.msra.mxu0 0
  %238 = vmatprep.subr.bf16.mxu0 0
  %239 = vmatpush2.bf16.msra.mxu0 0
  %240 = vmatprep.subr.bf16.mxu0 0
  %241 = vmatpush2.bf16.msra.mxu0 0
  %242 = vmatprep.subr.bf16.mxu0 0
  %243 = vmatpush2.bf16.msra.mxu0 0
  %244 = vmatprep.mubr.bf16.mxu0 0
  %245 = vmatmul.mubr.bf16.gmra.mxu0 %v210
  %v246 = vpop.f32.mrf.mxu0
  %v247 = vadd.f32 %v179, %v246
  %v248 = vpop.f32.mrf.mxu0
  %v249 = vpop.f32.mrf.mxu0
  %v250 = vadd.f32 %v182, %v249
  %v251 = vpop.f32.mrf.mxu0
  %252 = vdwg.mxu0
  %s253 = scalar_lea.vmem %s1, 64
  %v254 = vld [vmem:[%s253] sm:$0xf]
  %v255 = vld [vmem:[%s253 + $0x4] sm:$0xf]
  %v256 = vld [vmem:[%s253 + $0x8] sm:$0xf]
  %v257 = vld [vmem:[%s253 + $0xc] sm:$0xf]
  %v258 = vld [vmem:[%s253 + $0x10] sm:$0xf]
  %v259 = vld [vmem:[%s253 + $0x14] sm:$0xf]
  %v260 = vld [vmem:[%s253 + $0x18] sm:$0xf]
  %v261 = vld [vmem:[%s253 + $0x1c] sm:$0xf]
  %262 = vrot.lane.b32.xlu0 %v95, 120
  %v263 = vpop.permute.xlu0 %262
  %v272 = vunpack.c.l.b16 %v254
  %v273 = vunpack.c.l.b16 %v255
  %v274 = vunpack.c.l.b16 %v256
  %v275 = vunpack.c.l.b16 %v257
  %v276 = vunpack.c.l.b16 %v258
  %v277 = vunpack.c.l.b16 %v259
  %v278 = vunpack.c.l.b16 %v260
  %v279 = vunpack.c.l.b16 %v261
  %v280 = vpack.c.b16 %v273, %v272
  %v281 = vpack.c.b16 %v275, %v274
  %v282 = vpack.c.b16 %v277, %v276
  %v283 = vpack.c.b16 %v279, %v278
  %v289 = vsel %vm140, %v263, 0
  %291 = vmatprep.subr.bf16.mxu0 0
  %292 = vmatpush1.bf16.msra.mxu0 0
  %293 = vmatprep.subr.bf16.mxu0 0
  %294 = vmatpush1.bf16.msra.mxu0 0
  %295 = vmatprep.subr.bf16.mxu0 0
  %296 = vmatpush1.bf16.msra.mxu0 0
  %297 = vmatprep.subr.bf16.mxu0 0
  %298 = vmatpush1.bf16.msra.mxu0 0
  %299 = vmatprep.subr.bf16.mxu0 0
  %300 = vmatpush1.bf16.msra.mxu0 %v283
  %301 = vmatprep.subr.bf16.mxu0 0
  %302 = vmatpush1.bf16.msra.mxu0 %v282
  %303 = vmatprep.subr.bf16.mxu0 0
  %304 = vmatpush1.bf16.msra.mxu0 %v281
  %305 = vmatprep.subr.bf16.mxu0 0
  %306 = vmatpush1.bf16.msra.mxu0 %v280
  %307 = vmatprep.subr.bf16.mxu0 0
  %308 = vmatpush2.bf16.msra.mxu0 0
  %309 = vmatprep.subr.bf16.mxu0 0
  %310 = vmatpush2.bf16.msra.mxu0 0
  %311 = vmatprep.subr.bf16.mxu0 0
  %312 = vmatpush2.bf16.msra.mxu0 0
  %313 = vmatprep.subr.bf16.mxu0 0
  %314 = vmatpush2.bf16.msra.mxu0 0
  %315 = vmatprep.subr.bf16.mxu0 0
  %316 = vmatpush2.bf16.msra.mxu0 0
  %317 = vmatprep.subr.bf16.mxu0 0
  %318 = vmatpush2.bf16.msra.mxu0 0
  %319 = vmatprep.subr.bf16.mxu0 0
  %320 = vmatpush2.bf16.msra.mxu0 0
  %321 = vmatprep.subr.bf16.mxu0 0
  %322 = vmatpush2.bf16.msra.mxu0 0
  %323 = vmatprep.mubr.bf16.mxu0 0
  %324 = vmatmul.mubr.bf16.gmra.mxu0 %v289
  %v325 = vpop.f32.mrf.mxu0
  %v326 = vadd.f32 0.0, %v325
  %v327 = vpop.f32.mrf.mxu0
  %v328 = vpop.f32.mrf.mxu0
  %v329 = vadd.f32 0.0, %v328
  %v330 = vpop.f32.mrf.mxu0
  %331 = vdwg.mxu0
  %v332 = vadd.f32 %v247, %v326
  %v333 = vadd.f32 %v250, %v329
  %v334 = vld [vmem:[#allocation2 + $0x1] sm:$0xff]
  %v335 = vld [vmem:[#allocation2 + $0x9] sm:$0xff]
  %v336 = vpack.c.bf16 %v335, %v334
  %s337 = scalar_lea.vmem %s1, 96
  %v338 = vld [vmem:[%s337] sm:$0xf]
  %v339 = vld [vmem:[%s337 + $0x4] sm:$0xf]
  %v340 = vld [vmem:[%s337 + $0x8] sm:$0xf]
  %v341 = vld [vmem:[%s337 + $0xc] sm:$0xf]
  %v342 = vld [vmem:[%s337 + $0x10] sm:$0xf]
  %v343 = vld [vmem:[%s337 + $0x14] sm:$0xf]
  %v344 = vld [vmem:[%s337 + $0x18] sm:$0xf]
  %v345 = vld [vmem:[%s337 + $0x1c] sm:$0xf]
  %v354 = vunpack.c.l.b16 %v338
  %v355 = vunpack.c.l.b16 %v339
  %v356 = vunpack.c.l.b16 %v340
  %v357 = vunpack.c.l.b16 %v341
  %v358 = vunpack.c.l.b16 %v342
  %v359 = vunpack.c.l.b16 %v343
  %v360 = vunpack.c.l.b16 %v344
  %v361 = vunpack.c.l.b16 %v345
  %v362 = vpack.c.b16 %v355, %v354
  %v363 = vpack.c.b16 %v357, %v356
  %v364 = vpack.c.b16 %v359, %v358
  %v365 = vpack.c.b16 %v361, %v360
  %v371 = vsel %vm140, %v336, 0
  %373 = vmatprep.subr.bf16.mxu0 0
  %374 = vmatpush1.bf16.msra.mxu0 0
  %375 = vmatprep.subr.bf16.mxu0 0
  %376 = vmatpush1.bf16.msra.mxu0 0
  %377 = vmatprep.subr.bf16.mxu0 0
  %378 = vmatpush1.bf16.msra.mxu0 0
  %379 = vmatprep.subr.bf16.mxu0 0
  %380 = vmatpush1.bf16.msra.mxu0 0
  %381 = vmatprep.subr.bf16.mxu0 0
  %382 = vmatpush1.bf16.msra.mxu0 %v365
  %383 = vmatprep.subr.bf16.mxu0 0
  %384 = vmatpush1.bf16.msra.mxu0 %v364
  %385 = vmatprep.subr.bf16.mxu0 0
  %386 = vmatpush1.bf16.msra.mxu0 %v363
  %387 = vmatprep.subr.bf16.mxu0 0
  %388 = vmatpush1.bf16.msra.mxu0 %v362
  %389 = vmatprep.subr.bf16.mxu0 0
  %390 = vmatpush2.bf16.msra.mxu0 0
  %391 = vmatprep.subr.bf16.mxu0 0
  %392 = vmatpush2.bf16.msra.mxu0 0
  %393 = vmatprep.subr.bf16.mxu0 0
  %394 = vmatpush2.bf16.msra.mxu0 0
  %395 = vmatprep.subr.bf16.mxu0 0
  %396 = vmatpush2.bf16.msra.mxu0 0
  %397 = vmatprep.subr.bf16.mxu0 0
  %398 = vmatpush2.bf16.msra.mxu0 0
  %399 = vmatprep.subr.bf16.mxu0 0
  %400 = vmatpush2.bf16.msra.mxu0 0
  %401 = vmatprep.subr.bf16.mxu0 0
  %402 = vmatpush2.bf16.msra.mxu0 0
  %403 = vmatprep.subr.bf16.mxu0 0
  %404 = vmatpush2.bf16.msra.mxu0 0
  %405 = vmatprep.mubr.bf16.mxu0 0
  %406 = vmatmul.mubr.bf16.gmra.mxu0 %v371
  %v407 = vpop.f32.mrf.mxu0
  %v408 = vadd.f32 0.0, %v407
  %v409 = vpop.f32.mrf.mxu0
  %v410 = vpop.f32.mrf.mxu0
  %v411 = vadd.f32 0.0, %v410
  %v412 = vpop.f32.mrf.mxu0
  %413 = vdwg.mxu0
  %v414 = vadd.f32 %v332, %v408
  %v415 = vadd.f32 %v333, %v411
  %s416 = scalar_lea.vmem %s1, 128
  %v417 = vld [vmem:[%s416] sm:$0xf]
  %v418 = vld [vmem:[%s416 + $0x4] sm:$0xf]
  %v419 = vld [vmem:[%s416 + $0x8] sm:$0xf]
  %v420 = vld [vmem:[%s416 + $0xc] sm:$0xf]
  %v421 = vld [vmem:[%s416 + $0x10] sm:$0xf]
  %v422 = vld [vmem:[%s416 + $0x14] sm:$0xf]
  %v423 = vld [vmem:[%s416 + $0x18] sm:$0xf]
  %v424 = vld [vmem:[%s416 + $0x1c] sm:$0xf]
  %426 = vrot.lane.b32.xlu0 %v336, 124
  %v427 = vpop.permute.xlu0 %426
  %v436 = vunpack.c.l.b16 %v417
  %v437 = vunpack.c.l.b16 %v418
  %v438 = vunpack.c.l.b16 %v419
  %v439 = vunpack.c.l.b16 %v420
  %v440 = vunpack.c.l.b16 %v421
  %v441 = vunpack.c.l.b16 %v422
  %v442 = vunpack.c.l.b16 %v423
  %v443 = vunpack.c.l.b16 %v424
  %v444 = vpack.c.b16 %v437, %v436
  %v445 = vpack.c.b16 %v439, %v438
  %v446 = vpack.c.b16 %v441, %v440
  %v447 = vpack.c.b16 %v443, %v442
  %v453 = vsel %vm140, %v427, 0
  %455 = vmatprep.subr.bf16.mxu0 0
  %456 = vmatpush1.bf16.msra.mxu0 0
  %457 = vmatprep.subr.bf16.mxu0 0
  %458 = vmatpush1.bf16.msra.mxu0 0
  %459 = vmatprep.subr.bf16.mxu0 0
  %460 = vmatpush1.bf16.msra.mxu0 0
  %461 = vmatprep.subr.bf16.mxu0 0
  %462 = vmatpush1.bf16.msra.mxu0 0
  %463 = vmatprep.subr.bf16.mxu0 0
  %464 = vmatpush1.bf16.msra.mxu0 %v447
  %465 = vmatprep.subr.bf16.mxu0 0
  %466 = vmatpush1.bf16.msra.mxu0 %v446
  %467 = vmatprep.subr.bf16.mxu0 0
  %468 = vmatpush1.bf16.msra.mxu0 %v445
  %469 = vmatprep.subr.bf16.mxu0 0
  %470 = vmatpush1.bf16.msra.mxu0 %v444
  %471 = vmatprep.subr.bf16.mxu0 0
  %472 = vmatpush2.bf16.msra.mxu0 0
  %473 = vmatprep.subr.bf16.mxu0 0
  %474 = vmatpush2.bf16.msra.mxu0 0
  %475 = vmatprep.subr.bf16.mxu0 0
  %476 = vmatpush2.bf16.msra.mxu0 0
  %477 = vmatprep.subr.bf16.mxu0 0
  %478 = vmatpush2.bf16.msra.mxu0 0
  %479 = vmatprep.subr.bf16.mxu0 0
  %480 = vmatpush2.bf16.msra.mxu0 0
  %481 = vmatprep.subr.bf16.mxu0 0
  %482 = vmatpush2.bf16.msra.mxu0 0
  %483 = vmatprep.subr.bf16.mxu0 0
  %484 = vmatpush2.bf16.msra.mxu0 0
  %485 = vmatprep.subr.bf16.mxu0 0
  %486 = vmatpush2.bf16.msra.mxu0 0
  %487 = vmatprep.mubr.bf16.mxu0 0
  %488 = vmatmul.mubr.bf16.gmra.mxu0 %v453
  %v489 = vpop.f32.mrf.mxu0
  %v490 = vadd.f32 0.0, %v489
  %v491 = vpop.f32.mrf.mxu0
  %v492 = vpop.f32.mrf.mxu0
  %v493 = vadd.f32 0.0, %v492
  %v494 = vpop.f32.mrf.mxu0
  %495 = vdwg.mxu0
  %v496 = vadd.f32 %v414, %v490
  %v497 = vadd.f32 %v415, %v493
  %s498 = scalar_lea.vmem %s1, 160
  %v499 = vld [vmem:[%s498] sm:$0xf]
  %v500 = vld [vmem:[%s498 + $0x4] sm:$0xf]
  %v501 = vld [vmem:[%s498 + $0x8] sm:$0xf]
  %v502 = vld [vmem:[%s498 + $0xc] sm:$0xf]
  %v503 = vld [vmem:[%s498 + $0x10] sm:$0xf]
  %v504 = vld [vmem:[%s498 + $0x14] sm:$0xf]
  %v505 = vld [vmem:[%s498 + $0x18] sm:$0xf]
  %v506 = vld [vmem:[%s498 + $0x1c] sm:$0xf]
  %507 = vrot.lane.b32.xlu0 %v336, 120
  %v508 = vpop.permute.xlu0 %507
  %v517 = vunpack.c.l.b16 %v499
  %v518 = vunpack.c.l.b16 %v500
  %v519 = vunpack.c.l.b16 %v501
  %v520 = vunpack.c.l.b16 %v502
  %v521 = vunpack.c.l.b16 %v503
  %v522 = vunpack.c.l.b16 %v504
  %v523 = vunpack.c.l.b16 %v505
  %v524 = vunpack.c.l.b16 %v506
  %v525 = vpack.c.b16 %v518, %v517
  %v526 = vpack.c.b16 %v520, %v519
  %v527 = vpack.c.b16 %v522, %v521
  %v528 = vpack.c.b16 %v524, %v523
  %v534 = vsel %vm140, %v508, 0
  %536 = vmatprep.subr.bf16.mxu0 0
  %537 = vmatpush1.bf16.msra.mxu0 0
  %538 = vmatprep.subr.bf16.mxu0 0
  %539 = vmatpush1.bf16.msra.mxu0 0
  %540 = vmatprep.subr.bf16.mxu0 0
  %541 = vmatpush1.bf16.msra.mxu0 0
  %542 = vmatprep.subr.bf16.mxu0 0
  %543 = vmatpush1.bf16.msra.mxu0 0
  %544 = vmatprep.subr.bf16.mxu0 0
  %545 = vmatpush1.bf16.msra.mxu0 %v528
  %546 = vmatprep.subr.bf16.mxu0 0
  %547 = vmatpush1.bf16.msra.mxu0 %v527
  %548 = vmatprep.subr.bf16.mxu0 0
  %549 = vmatpush1.bf16.msra.mxu0 %v526
  %550 = vmatprep.subr.bf16.mxu0 0
  %551 = vmatpush1.bf16.msra.mxu0 %v525
  %552 = vmatprep.subr.bf16.mxu0 0
  %553 = vmatpush2.bf16.msra.mxu0 0
  %554 = vmatprep.subr.bf16.mxu0 0
  %555 = vmatpush2.bf16.msra.mxu0 0
  %556 = vmatprep.subr.bf16.mxu0 0
  %557 = vmatpush2.bf16.msra.mxu0 0
  %558 = vmatprep.subr.bf16.mxu0 0
  %559 = vmatpush2.bf16.msra.mxu0 0
  %560 = vmatprep.subr.bf16.mxu0 0
  %561 = vmatpush2.bf16.msra.mxu0 0
  %562 = vmatprep.subr.bf16.mxu0 0
  %563 = vmatpush2.bf16.msra.mxu0 0
  %564 = vmatprep.subr.bf16.mxu0 0
  %565 = vmatpush2.bf16.msra.mxu0 0
  %566 = vmatprep.subr.bf16.mxu0 0
  %567 = vmatpush2.bf16.msra.mxu0 0
  %568 = vmatprep.mubr.bf16.mxu0 0
  %569 = vmatmul.mubr.bf16.gmra.mxu0 %v534
  %v570 = vpop.f32.mrf.mxu0
  %v571 = vadd.f32 0.0, %v570
  %v572 = vpop.f32.mrf.mxu0
  %v573 = vpop.f32.mrf.mxu0
  %v574 = vadd.f32 0.0, %v573
  %v575 = vpop.f32.mrf.mxu0
  %576 = vdwg.mxu0
  %v577 = vadd.f32 %v496, %v571
  %v578 = vadd.f32 %v497, %v574
  %v579 = vld [vmem:[#allocation2 + $0x2] sm:$0xff]
  %v580 = vld [vmem:[#allocation2 + $0xa] sm:$0xff]
  %v581 = vpack.c.bf16 %v580, %v579
  %s582 = scalar_lea.vmem %s1, 192
  %v583 = vld [vmem:[%s582] sm:$0xf]
  %v584 = vld [vmem:[%s582 + $0x4] sm:$0xf]
  %v585 = vld [vmem:[%s582 + $0x8] sm:$0xf]
  %v586 = vld [vmem:[%s582 + $0xc] sm:$0xf]
  %v587 = vld [vmem:[%s582 + $0x10] sm:$0xf]
  %v588 = vld [vmem:[%s582 + $0x14] sm:$0xf]
  %v589 = vld [vmem:[%s582 + $0x18] sm:$0xf]
  %v590 = vld [vmem:[%s582 + $0x1c] sm:$0xf]
  %v599 = vunpack.c.l.b16 %v583
  %v600 = vunpack.c.l.b16 %v584
  %v601 = vunpack.c.l.b16 %v585
  %v602 = vunpack.c.l.b16 %v586
  %v603 = vunpack.c.l.b16 %v587
  %v604 = vunpack.c.l.b16 %v588
  %v605 = vunpack.c.l.b16 %v589
  %v606 = vunpack.c.l.b16 %v590
  %v607 = vpack.c.b16 %v600, %v599
  %v608 = vpack.c.b16 %v602, %v601
  %v609 = vpack.c.b16 %v604, %v603
  %v610 = vpack.c.b16 %v606, %v605
  %v616 = vsel %vm140, %v581, 0
  %618 = vmatprep.subr.bf16.mxu0 0
  %619 = vmatpush1.bf16.msra.mxu0 0
  %620 = vmatprep.subr.bf16.mxu0 0
  %621 = vmatpush1.bf16.msra.mxu0 0
  %622 = vmatprep.subr.bf16.mxu0 0
  %623 = vmatpush1.bf16.msra.mxu0 0
  %624 = vmatprep.subr.bf16.mxu0 0
  %625 = vmatpush1.bf16.msra.mxu0 0
  %626 = vmatprep.subr.bf16.mxu0 0
  %627 = vmatpush1.bf16.msra.mxu0 %v610
  %628 = vmatprep.subr.bf16.mxu0 0
  %629 = vmatpush1.bf16.msra.mxu0 %v609
  %630 = vmatprep.subr.bf16.mxu0 0
  %631 = vmatpush1.bf16.msra.mxu0 %v608
  %632 = vmatprep.subr.bf16.mxu0 0
  %633 = vmatpush1.bf16.msra.mxu0 %v607
  %634 = vmatprep.subr.bf16.mxu0 0
  %635 = vmatpush2.bf16.msra.mxu0 0
  %636 = vmatprep.subr.bf16.mxu0 0
  %637 = vmatpush2.bf16.msra.mxu0 0
  %638 = vmatprep.subr.bf16.mxu0 0
  %639 = vmatpush2.bf16.msra.mxu0 0
  %640 = vmatprep.subr.bf16.mxu0 0
  %641 = vmatpush2.bf16.msra.mxu0 0
  %642 = vmatprep.subr.bf16.mxu0 0
  %643 = vmatpush2.bf16.msra.mxu0 0
  %644 = vmatprep.subr.bf16.mxu0 0
  %645 = vmatpush2.bf16.msra.mxu0 0
  %646 = vmatprep.subr.bf16.mxu0 0
  %647 = vmatpush2.bf16.msra.mxu0 0
  %648 = vmatprep.subr.bf16.mxu0 0
  %649 = vmatpush2.bf16.msra.mxu0 0
  %650 = vmatprep.mubr.bf16.mxu0 0
  %651 = vmatmul.mubr.bf16.gmra.mxu0 %v616
  %v652 = vpop.f32.mrf.mxu0
  %v653 = vadd.f32 0.0, %v652
  %v654 = vpop.f32.mrf.mxu0
  %v655 = vpop.f32.mrf.mxu0
  %v656 = vadd.f32 0.0, %v655
  %v657 = vpop.f32.mrf.mxu0
  %658 = vdwg.mxu0
  %v659 = vadd.f32 %v577, %v653
  %v660 = vadd.f32 %v578, %v656
  %s661 = scalar_lea.vmem %s1, 224
  %v662 = vld [vmem:[%s661] sm:$0xf]
  %v663 = vld [vmem:[%s661 + $0x4] sm:$0xf]
  %v664 = vld [vmem:[%s661 + $0x8] sm:$0xf]
  %v665 = vld [vmem:[%s661 + $0xc] sm:$0xf]
  %v666 = vld [vmem:[%s661 + $0x10] sm:$0xf]
  %v667 = vld [vmem:[%s661 + $0x14] sm:$0xf]
  %v668 = vld [vmem:[%s661 + $0x18] sm:$0xf]
  %v669 = vld [vmem:[%s661 + $0x1c] sm:$0xf]
  %671 = vrot.lane.b32.xlu0 %v581, 124
  %v672 = vpop.permute.xlu0 %671
  %v681 = vunpack.c.l.b16 %v662
  %v682 = vunpack.c.l.b16 %v663
  %v683 = vunpack.c.l.b16 %v664
  %v684 = vunpack.c.l.b16 %v665
  %v685 = vunpack.c.l.b16 %v666
  %v686 = vunpack.c.l.b16 %v667
  %v687 = vunpack.c.l.b16 %v668
  %v688 = vunpack.c.l.b16 %v669
  %v689 = vpack.c.b16 %v682, %v681
  %v690 = vpack.c.b16 %v684, %v683
  %v691 = vpack.c.b16 %v686, %v685
  %v692 = vpack.c.b16 %v688, %v687
  %v698 = vsel %vm140, %v672, 0
  %700 = vmatprep.subr.bf16.mxu0 0
  %701 = vmatpush1.bf16.msra.mxu0 0
  %702 = vmatprep.subr.bf16.mxu0 0
  %703 = vmatpush1.bf16.msra.mxu0 0
  %704 = vmatprep.subr.bf16.mxu0 0
  %705 = vmatpush1.bf16.msra.mxu0 0
  %706 = vmatprep.subr.bf16.mxu0 0
  %707 = vmatpush1.bf16.msra.mxu0 0
  %708 = vmatprep.subr.bf16.mxu0 0
  %709 = vmatpush1.bf16.msra.mxu0 %v692
  %710 = vmatprep.subr.bf16.mxu0 0
  %711 = vmatpush1.bf16.msra.mxu0 %v691
  %712 = vmatprep.subr.bf16.mxu0 0
  %713 = vmatpush1.bf16.msra.mxu0 %v690
  %714 = vmatprep.subr.bf16.mxu0 0
  %715 = vmatpush1.bf16.msra.mxu0 %v689
  %716 = vmatprep.subr.bf16.mxu0 0
  %717 = vmatpush2.bf16.msra.mxu0 0
  %718 = vmatprep.subr.bf16.mxu0 0
  %719 = vmatpush2.bf16.msra.mxu0 0
  %720 = vmatprep.subr.bf16.mxu0 0
  %721 = vmatpush2.bf16.msra.mxu0 0
  %722 = vmatprep.subr.bf16.mxu0 0
  %723 = vmatpush2.bf16.msra.mxu0 0
  %724 = vmatprep.subr.bf16.mxu0 0
  %725 = vmatpush2.bf16.msra.mxu0 0
  %726 = vmatprep.subr.bf16.mxu0 0
  %727 = vmatpush2.bf16.msra.mxu0 0
  %728 = vmatprep.subr.bf16.mxu0 0
  %729 = vmatpush2.bf16.msra.mxu0 0
  %730 = vmatprep.subr.bf16.mxu0 0
  %731 = vmatpush2.bf16.msra.mxu0 0
  %732 = vmatprep.mubr.bf16.mxu0 0
  %733 = vmatmul.mubr.bf16.gmra.mxu0 %v698
  %v734 = vpop.f32.mrf.mxu0
  %v735 = vadd.f32 0.0, %v734
  %v736 = vpop.f32.mrf.mxu0
  %v737 = vpop.f32.mrf.mxu0
  %v738 = vadd.f32 0.0, %v737
  %v739 = vpop.f32.mrf.mxu0
  %740 = vdwg.mxu0
  %v741 = vadd.f32 %v659, %v735
  %v742 = vadd.f32 %v660, %v738
  %s743 = scalar_lea.vmem %s1, 256
  %v744 = vld [vmem:[%s743] sm:$0xf]
  %v745 = vld [vmem:[%s743 + $0x4] sm:$0xf]
  %v746 = vld [vmem:[%s743 + $0x8] sm:$0xf]
  %v747 = vld [vmem:[%s743 + $0xc] sm:$0xf]
  %v748 = vld [vmem:[%s743 + $0x10] sm:$0xf]
  %v749 = vld [vmem:[%s743 + $0x14] sm:$0xf]
  %v750 = vld [vmem:[%s743 + $0x18] sm:$0xf]
  %v751 = vld [vmem:[%s743 + $0x1c] sm:$0xf]
  %752 = vrot.lane.b32.xlu0 %v581, 120
  %v753 = vpop.permute.xlu0 %752
  %v762 = vunpack.c.l.b16 %v744
  %v763 = vunpack.c.l.b16 %v745
  %v764 = vunpack.c.l.b16 %v746
  %v765 = vunpack.c.l.b16 %v747
  %v766 = vunpack.c.l.b16 %v748
  %v767 = vunpack.c.l.b16 %v749
  %v768 = vunpack.c.l.b16 %v750
  %v769 = vunpack.c.l.b16 %v751
  %v770 = vpack.c.b16 %v763, %v762
  %v771 = vpack.c.b16 %v765, %v764
  %v772 = vpack.c.b16 %v767, %v766
  %v773 = vpack.c.b16 %v769, %v768
  %v779 = vsel %vm140, %v753, 0
  %781 = vmatprep.subr.bf16.mxu0 0
  %782 = vmatpush1.bf16.msra.mxu0 0
  %783 = vmatprep.subr.bf16.mxu0 0
  %784 = vmatpush1.bf16.msra.mxu0 0
  %785 = vmatprep.subr.bf16.mxu0 0
  %786 = vmatpush1.bf16.msra.mxu0 0
  %787 = vmatprep.subr.bf16.mxu0 0
  %788 = vmatpush1.bf16.msra.mxu0 0
  %789 = vmatprep.subr.bf16.mxu0 0
  %790 = vmatpush1.bf16.msra.mxu0 %v773
  %791 = vmatprep.subr.bf16.mxu0 0
  %792 = vmatpush1.bf16.msra.mxu0 %v772
  %793 = vmatprep.subr.bf16.mxu0 0
  %794 = vmatpush1.bf16.msra.mxu0 %v771
  %795 = vmatprep.subr.bf16.mxu0 0
  %796 = vmatpush1.bf16.msra.mxu0 %v770
  %797 = vmatprep.subr.bf16.mxu0 0
  %798 = vmatpush2.bf16.msra.mxu0 0
  %799 = vmatprep.subr.bf16.mxu0 0
  %800 = vmatpush2.bf16.msra.mxu0 0
  %801 = vmatprep.subr.bf16.mxu0 0
  %802 = vmatpush2.bf16.msra.mxu0 0
  %803 = vmatprep.subr.bf16.mxu0 0
  %804 = vmatpush2.bf16.msra.mxu0 0
  %805 = vmatprep.subr.bf16.mxu0 0
  %806 = vmatpush2.bf16.msra.mxu0 0
  %807 = vmatprep.subr.bf16.mxu0 0
  %808 = vmatpush2.bf16.msra.mxu0 0
  %809 = vmatprep.subr.bf16.mxu0 0
  %810 = vmatpush2.bf16.msra.mxu0 0
  %811 = vmatprep.subr.bf16.mxu0 0
  %812 = vmatpush2.bf16.msra.mxu0 0
  %813 = vmatprep.mubr.bf16.mxu0 0
  %814 = vmatmul.mubr.bf16.gmra.mxu0 %v779
  %v815 = vpop.f32.mrf.mxu0
  %v816 = vadd.f32 0.0, %v815
  %v817 = vpop.f32.mrf.mxu0
  %v818 = vpop.f32.mrf.mxu0
  %v819 = vadd.f32 0.0, %v818
  %v820 = vpop.f32.mrf.mxu0
  %821 = vdwg.mxu0
  %v822 = vadd.f32 %v741, %v816
  %v823 = vadd.f32 %v742, %v819
  %v825 = vlaneseq
  %v826 = vshrl.u32 %v825, 7
  %v827 = vsub.s32 0, %v826
  %v828 = vrot.slane %v39, %v827
  %v830 = vadd.f32 %v822, %v828
  %v831 = vadd.f32 %v823, %v828
  %v832 = vmul.f32 %v830, %v830
  %v833 = vmul.f32 %v831, %v831
  %vm836 = vcmask 1040384
  %v837 = vrot.slane %v830, 7
  %v838 = vrot.slane %v831, 7
  %v839 = vsel %vm836, %v837, %v838
  %840 = vrot.lane.b32.xlu0 %v837, 8
  %v841 = vpop.permute.xlu0 %840
  %842 = vrot.lane.b32.xlu0 %v839, 8
  %v843 = vpop.permute.xlu0 %842
  %844 = vrot.lane.b32.xlu0 %v838, 8
  %v845 = vpop.permute.xlu0 %844
  %vm849 = vcmask 1047617
  %850 = vst.msk [vmem:[#allocation3] sm:$0xfe] %vm849, %v841
  %vm851 = vcmask 64513
  %852 = vst.msk [vmem:[#allocation3 + $0x8] sm:$0xfe] %vm851, %v841
  %vm853 = vcmask 1047616
  %854 = vst.msk [vmem:[#allocation3 + $0x10] sm:$0xff] %vm853, %v843
  %vm855 = vcmask 64512
  %856 = vst.msk [vmem:[#allocation3 + $0x18] sm:$0xff] %vm855, %v843
  %vm857 = vcmask 1040448
  %858 = vst.msk [vmem:[#allocation3 + $0x20] sm:$0x1] %vm857, %v845
  %vm859 = vcmask 57344
  %860 = vst.msk [vmem:[#allocation3 + $0x28] sm:$0x1] %vm859, %v845
  %s861 = scalar_lea.vmem %s0, 16
  %v862 = vld [vmem:[%s861] sm:$0xff]
  %v863 = vld [vmem:[%s861 + $0x8] sm:$0xff]
  %866 = vrot.lane.b32.xlu0 %v862, 4
  %v867 = vpop.permute.xlu0 %866
  %868 = vrot.lane.b32.xlu0 %v863, 4
  %v869 = vpop.permute.xlu0 %868
  %s872 = scalar_lea.vmem [#allocation2], 24
  %873 = vst.msk [vmem:[%s872 + $0x1] sm:$0xff] %vm90, %v867
  %874 = vst.msk [vmem:[%s872 + $0x9] sm:$0xff] %vm90, %v869
  %v875 = vld [vmem:[%s872] sm:$0xff]
  %v876 = vld [vmem:[%s872 + $0x8] sm:$0xff]
  %v877 = vpack.c.bf16 %v876, %v875
  %v878 = vld [vmem:[%s1] sm:$0xf]
  %v879 = vld [vmem:[%s1 + $0x4] sm:$0xf]
  %v880 = vld [vmem:[%s1 + $0x8] sm:$0xf]
  %v881 = vld [vmem:[%s1 + $0xc] sm:$0xf]
  %v882 = vld [vmem:[%s1 + $0x10] sm:$0xf]
  %v883 = vld [vmem:[%s1 + $0x14] sm:$0xf]
  %v884 = vld [vmem:[%s1 + $0x18] sm:$0xf]
  %v885 = vld [vmem:[%s1 + $0x1c] sm:$0xf]
  %v886 = vld [vmem:[%s104] sm:$0xf]
  %v887 = vld [vmem:[%s104 + $0x4] sm:$0xf]
  %v888 = vld [vmem:[%s104 + $0x8] sm:$0xf]
  %v889 = vld [vmem:[%s104 + $0xc] sm:$0xf]
  %v890 = vld [vmem:[%s104 + $0x10] sm:$0xf]
  %v891 = vld [vmem:[%s104 + $0x14] sm:$0xf]
  %v892 = vld [vmem:[%s104 + $0x18] sm:$0xf]
  %v893 = vld [vmem:[%s104 + $0x1c] sm:$0xf]
  %895 = vrot.lane.b32.xlu0 %v877, 124
  %v896 = vpop.permute.xlu0 %895
  %v905 = vunpack.c.l.b16 %v886
  %v906 = vunpack.c.l.b16 %v887
  %v907 = vunpack.c.l.b16 %v888
  %v908 = vunpack.c.l.b16 %v889
  %v909 = vunpack.c.l.b16 %v890
  %v910 = vunpack.c.l.b16 %v891
  %v911 = vunpack.c.l.b16 %v892
  %v912 = vunpack.c.l.b16 %v893
  %v913 = vpack.c.b16 %v906, %v905
  %v914 = vpack.c.b16 %v908, %v907
  %v915 = vpack.c.b16 %v910, %v909
  %v916 = vpack.c.b16 %v912, %v911
  %v922 = vsel %vm140, %v896, 0
  %924 = vmatprep.subr.bf16.mxu0 0
  %925 = vmatpush1.bf16.msra.mxu0 0
  %926 = vmatprep.subr.bf16.mxu0 0
  %927 = vmatpush1.bf16.msra.mxu0 0
  %928 = vmatprep.subr.bf16.mxu0 0
  %929 = vmatpush1.bf16.msra.mxu0 0
  %930 = vmatprep.subr.bf16.mxu0 0
  %931 = vmatpush1.bf16.msra.mxu0 0
  %932 = vmatprep.subr.bf16.mxu0 0
  %933 = vmatpush1.bf16.msra.mxu0 %v916
  %934 = vmatprep.subr.bf16.mxu0 0
  %935 = vmatpush1.bf16.msra.mxu0 %v915
  %936 = vmatprep.subr.bf16.mxu0 0
  %937 = vmatpush1.bf16.msra.mxu0 %v914
  %938 = vmatprep.subr.bf16.mxu0 0
  %939 = vmatpush1.bf16.msra.mxu0 %v913
  %940 = vmatprep.subr.bf16.mxu0 0
  %941 = vmatpush2.bf16.msra.mxu0 0
  %942 = vmatprep.subr.bf16.mxu0 0
  %943 = vmatpush2.bf16.msra.mxu0 0
  %944 = vmatprep.subr.bf16.mxu0 0
  %945 = vmatpush2.bf16.msra.mxu0 0
  %946 = vmatprep.subr.bf16.mxu0 0
  %947 = vmatpush2.bf16.msra.mxu0 0
  %948 = vmatprep.subr.bf16.mxu0 0
  %949 = vmatpush2.bf16.msra.mxu0 0
  %950 = vmatprep.subr.bf16.mxu0 0
  %951 = vmatpush2.bf16.msra.mxu0 0
  %952 = vmatprep.subr.bf16.mxu0 0
  %953 = vmatpush2.bf16.msra.mxu0 0
  %954 = vmatprep.subr.bf16.mxu0 0
  %955 = vmatpush2.bf16.msra.mxu0 0
  %956 = vmatprep.mubr.bf16.mxu0 0
  %957 = vmatmul.mubr.bf16.gmra.mxu0 %v922
  %v958 = vpop.f32.mrf.mxu0
  %v959 = vadd.f32 0.0, %v958
  %v960 = vpop.f32.mrf.mxu0
  %v961 = vpop.f32.mrf.mxu0
  %v962 = vadd.f32 0.0, %v961
  %v963 = vpop.f32.mrf.mxu0
  %964 = vdwg.mxu0
  %v973 = vunpack.c.l.b16 %v878
  %v974 = vunpack.c.l.b16 %v879
  %v975 = vunpack.c.l.b16 %v880
  %v976 = vunpack.c.l.b16 %v881
  %v977 = vunpack.c.l.b16 %v882
  %v978 = vunpack.c.l.b16 %v883
  %v979 = vunpack.c.l.b16 %v884
  %v980 = vunpack.c.l.b16 %v885
  %v981 = vpack.c.b16 %v974, %v973
  %v982 = vpack.c.b16 %v976, %v975
  %v983 = vpack.c.b16 %v978, %v977
  %v984 = vpack.c.b16 %v980, %v979
  %v990 = vsel %vm140, %v877, 0
  %992 = vmatprep.subr.bf16.mxu0 0
  %993 = vmatpush1.bf16.msra.mxu0 0
  %994 = vmatprep.subr.bf16.mxu0 0
  %995 = vmatpush1.bf16.msra.mxu0 0
  %996 = vmatprep.subr.bf16.mxu0 0
  %997 = vmatpush1.bf16.msra.mxu0 0
  %998 = vmatprep.subr.bf16.mxu0 0
  %999 = vmatpush1.bf16.msra.mxu0 0
  %1000 = vmatprep.subr.bf16.mxu0 0
  %1001 = vmatpush1.bf16.msra.mxu0 %v984
  %1002 = vmatprep.subr.bf16.mxu0 0
  %1003 = vmatpush1.bf16.msra.mxu0 %v983
  %1004 = vmatprep.subr.bf16.mxu0 0
  %1005 = vmatpush1.bf16.msra.mxu0 %v982
  %1006 = vmatprep.subr.bf16.mxu0 0
  %1007 = vmatpush1.bf16.msra.mxu0 %v981
  %1008 = vmatprep.subr.bf16.mxu0 0
  %1009 = vmatpush2.bf16.msra.mxu0 0
  %1010 = vmatprep.subr.bf16.mxu0 0
  %1011 = vmatpush2.bf16.msra.mxu0 0
  %1012 = vmatprep.subr.bf16.mxu0 0
  %1013 = vmatpush2.bf16.msra.mxu0 0
  %1014 = vmatprep.subr.bf16.mxu0 0
  %1015 = vmatpush2.bf16.msra.mxu0 0
  %1016 = vmatprep.subr.bf16.mxu0 0
  %1017 = vmatpush2.bf16.msra.mxu0 0
  %1018 = vmatprep.subr.bf16.mxu0 0
  %1019 = vmatpush2.bf16.msra.mxu0 0
  %1020 = vmatprep.subr.bf16.mxu0 0
  %1021 = vmatpush2.bf16.msra.mxu0 0
  %1022 = vmatprep.subr.bf16.mxu0 0
  %1023 = vmatpush2.bf16.msra.mxu0 0
  %1024 = vmatprep.mubr.bf16.mxu0 0
  %1025 = vmatmul.mubr.bf16.gmra.mxu0 %v990
  %v1026 = vpop.f32.mrf.mxu0
  %v1027 = vadd.f32 %v959, %v1026
  %v1028 = vpop.f32.mrf.mxu0
  %v1029 = vpop.f32.mrf.mxu0
  %v1030 = vadd.f32 %v962, %v1029
  %v1031 = vpop.f32.mrf.mxu0
  %1032 = vdwg.mxu0
  %v1033 = vld [vmem:[%s253] sm:$0xf]
  %v1034 = vld [vmem:[%s253 + $0x4] sm:$0xf]
  %v1035 = vld [vmem:[%s253 + $0x8] sm:$0xf]
  %v1036 = vld [vmem:[%s253 + $0xc] sm:$0xf]
  %v1037 = vld [vmem:[%s253 + $0x10] sm:$0xf]
  %v1038 = vld [vmem:[%s253 + $0x14] sm:$0xf]
  %v1039 = vld [vmem:[%s253 + $0x18] sm:$0xf]
  %v1040 = vld [vmem:[%s253 + $0x1c] sm:$0xf]
  %1041 = vrot.lane.b32.xlu0 %v877, 120
  %v1042 = vpop.permute.xlu0 %1041
  %v1051 = vunpack.c.l.b16 %v1033
  %v1052 = vunpack.c.l.b16 %v1034
  %v1053 = vunpack.c.l.b16 %v1035
  %v1054 = vunpack.c.l.b16 %v1036
  %v1055 = vunpack.c.l.b16 %v1037
  %v1056 = vunpack.c.l.b16 %v1038
  %v1057 = vunpack.c.l.b16 %v1039
  %v1058 = vunpack.c.l.b16 %v1040
  %v1059 = vpack.c.b16 %v1052, %v1051
  %v1060 = vpack.c.b16 %v1054, %v1053
  %v1061 = vpack.c.b16 %v1056, %v1055
  %v1062 = vpack.c.b16 %v1058, %v1057
  %v1068 = vsel %vm140, %v1042, 0
  %1070 = vmatprep.subr.bf16.mxu0 0
  %1071 = vmatpush1.bf16.msra.mxu0 0
  %1072 = vmatprep.subr.bf16.mxu0 0
  %1073 = vmatpush1.bf16.msra.mxu0 0
  %1074 = vmatprep.subr.bf16.mxu0 0
  %1075 = vmatpush1.bf16.msra.mxu0 0
  %1076 = vmatprep.subr.bf16.mxu0 0
  %1077 = vmatpush1.bf16.msra.mxu0 0
  %1078 = vmatprep.subr.bf16.mxu0 0
  %1079 = vmatpush1.bf16.msra.mxu0 %v1062
  %1080 = vmatprep.subr.bf16.mxu0 0
  %1081 = vmatpush1.bf16.msra.mxu0 %v1061
  %1082 = vmatprep.subr.bf16.mxu0 0
  %1083 = vmatpush1.bf16.msra.mxu0 %v1060
  %1084 = vmatprep.subr.bf16.mxu0 0
  %1085 = vmatpush1.bf16.msra.mxu0 %v1059
  %1086 = vmatprep.subr.bf16.mxu0 0
  %1087 = vmatpush2.bf16.msra.mxu0 0
  %1088 = vmatprep.subr.bf16.mxu0 0
  %1089 = vmatpush2.bf16.msra.mxu0 0
  %1090 = vmatprep.subr.bf16.mxu0 0
  %1091 = vmatpush2.bf16.msra.mxu0 0
  %1092 = vmatprep.subr.bf16.mxu0 0
  %1093 = vmatpush2.bf16.msra.mxu0 0
  %1094 = vmatprep.subr.bf16.mxu0 0
  %1095 = vmatpush2.bf16.msra.mxu0 0
  %1096 = vmatprep.subr.bf16.mxu0 0
  %1097 = vmatpush2.bf16.msra.mxu0 0
  %1098 = vmatprep.subr.bf16.mxu0 0
  %1099 = vmatpush2.bf16.msra.mxu0 0
  %1100 = vmatprep.subr.bf16.mxu0 0
  %1101 = vmatpush2.bf16.msra.mxu0 0
  %1102 = vmatprep.mubr.bf16.mxu0 0
  %1103 = vmatmul.mubr.bf16.gmra.mxu0 %v1068
  %v1104 = vpop.f32.mrf.mxu0
  %v1105 = vadd.f32 0.0, %v1104
  %v1106 = vpop.f32.mrf.mxu0
  %v1107 = vpop.f32.mrf.mxu0
  %v1108 = vadd.f32 0.0, %v1107
  %v1109 = vpop.f32.mrf.mxu0
  %1110 = vdwg.mxu0
  %v1111 = vadd.f32 %v1027, %v1105
  %v1112 = vadd.f32 %v1030, %v1108
  %v1113 = vld [vmem:[%s872 + $0x1] sm:$0xff]
  %v1114 = vld [vmem:[%s872 + $0x9] sm:$0xff]
  %v1115 = vpack.c.bf16 %v1114, %v1113
  %v1116 = vld [vmem:[%s337] sm:$0xf]
  %v1117 = vld [vmem:[%s337 + $0x4] sm:$0xf]
  %v1118 = vld [vmem:[%s337 + $0x8] sm:$0xf]
  %v1119 = vld [vmem:[%s337 + $0xc] sm:$0xf]
  %v1120 = vld [vmem:[%s337 + $0x10] sm:$0xf]
  %v1121 = vld [vmem:[%s337 + $0x14] sm:$0xf]
  %v1122 = vld [vmem:[%s337 + $0x18] sm:$0xf]
  %v1123 = vld [vmem:[%s337 + $0x1c] sm:$0xf]
  %v1132 = vunpack.c.l.b16 %v1116
  %v1133 = vunpack.c.l.b16 %v1117
  %v1134 = vunpack.c.l.b16 %v1118
  %v1135 = vunpack.c.l.b16 %v1119
  %v1136 = vunpack.c.l.b16 %v1120
  %v1137 = vunpack.c.l.b16 %v1121
  %v1138 = vunpack.c.l.b16 %v1122
  %v1139 = vunpack.c.l.b16 %v1123
  %v1140 = vpack.c.b16 %v1133, %v1132
  %v1141 = vpack.c.b16 %v1135, %v1134
  %v1142 = vpack.c.b16 %v1137, %v1136
  %v1143 = vpack.c.b16 %v1139, %v1138
  %v1149 = vsel %vm140, %v1115, 0
  %1151 = vmatprep.subr.bf16.mxu0 0
  %1152 = vmatpush1.bf16.msra.mxu0 0
  %1153 = vmatprep.subr.bf16.mxu0 0
  %1154 = vmatpush1.bf16.msra.mxu0 0
  %1155 = vmatprep.subr.bf16.mxu0 0
  %1156 = vmatpush1.bf16.msra.mxu0 0
  %1157 = vmatprep.subr.bf16.mxu0 0
  %1158 = vmatpush1.bf16.msra.mxu0 0
  %1159 = vmatprep.subr.bf16.mxu0 0
  %1160 = vmatpush1.bf16.msra.mxu0 %v1143
  %1161 = vmatprep.subr.bf16.mxu0 0
  %1162 = vmatpush1.bf16.msra.mxu0 %v1142
  %1163 = vmatprep.subr.bf16.mxu0 0
  %1164 = vmatpush1.bf16.msra.mxu0 %v1141
  %1165 = vmatprep.subr.bf16.mxu0 0
  %1166 = vmatpush1.bf16.msra.mxu0 %v1140
  %1167 = vmatprep.subr.bf16.mxu0 0
  %1168 = vmatpush2.bf16.msra.mxu0 0
  %1169 = vmatprep.subr.bf16.mxu0 0
  %1170 = vmatpush2.bf16.msra.mxu0 0
  %1171 = vmatprep.subr.bf16.mxu0 0
  %1172 = vmatpush2.bf16.msra.mxu0 0
  %1173 = vmatprep.subr.bf16.mxu0 0
  %1174 = vmatpush2.bf16.msra.mxu0 0
  %1175 = vmatprep.subr.bf16.mxu0 0
  %1176 = vmatpush2.bf16.msra.mxu0 0
  %1177 = vmatprep.subr.bf16.mxu0 0
  %1178 = vmatpush2.bf16.msra.mxu0 0
  %1179 = vmatprep.subr.bf16.mxu0 0
  %1180 = vmatpush2.bf16.msra.mxu0 0
  %1181 = vmatprep.subr.bf16.mxu0 0
  %1182 = vmatpush2.bf16.msra.mxu0 0
  %1183 = vmatprep.mubr.bf16.mxu0 0
  %1184 = vmatmul.mubr.bf16.gmra.mxu0 %v1149
  %v1185 = vpop.f32.mrf.mxu0
  %v1186 = vadd.f32 0.0, %v1185
  %v1187 = vpop.f32.mrf.mxu0
  %v1188 = vpop.f32.mrf.mxu0
  %v1189 = vadd.f32 0.0, %v1188
  %v1190 = vpop.f32.mrf.mxu0
  %1191 = vdwg.mxu0
  %v1192 = vadd.f32 %v1111, %v1186
  %v1193 = vadd.f32 %v1112, %v1189
  %v1194 = vld [vmem:[%s416] sm:$0xf]
  %v1195 = vld [vmem:[%s416 + $0x4] sm:$0xf]
  %v1196 = vld [vmem:[%s416 + $0x8] sm:$0xf]
  %v1197 = vld [vmem:[%s416 + $0xc] sm:$0xf]
  %v1198 = vld [vmem:[%s416 + $0x10] sm:$0xf]
  %v1199 = vld [vmem:[%s416 + $0x14] sm:$0xf]
  %v1200 = vld [vmem:[%s416 + $0x18] sm:$0xf]
  %v1201 = vld [vmem:[%s416 + $0x1c] sm:$0xf]
  %1203 = vrot.lane.b32.xlu0 %v1115, 124
  %v1204 = vpop.permute.xlu0 %1203
  %v1213 = vunpack.c.l.b16 %v1194
  %v1214 = vunpack.c.l.b16 %v1195
  %v1215 = vunpack.c.l.b16 %v1196
  %v1216 = vunpack.c.l.b16 %v1197
  %v1217 = vunpack.c.l.b16 %v1198
  %v1218 = vunpack.c.l.b16 %v1199
  %v1219 = vunpack.c.l.b16 %v1200
  %v1220 = vunpack.c.l.b16 %v1201
  %v1221 = vpack.c.b16 %v1214, %v1213
  %v1222 = vpack.c.b16 %v1216, %v1215
  %v1223 = vpack.c.b16 %v1218, %v1217
  %v1224 = vpack.c.b16 %v1220, %v1219
  %v1230 = vsel %vm140, %v1204, 0
  %1232 = vmatprep.subr.bf16.mxu0 0
  %1233 = vmatpush1.bf16.msra.mxu0 0
  %1234 = vmatprep.subr.bf16.mxu0 0
  %1235 = vmatpush1.bf16.msra.mxu0 0
  %1236 = vmatprep.subr.bf16.mxu0 0
  %1237 = vmatpush1.bf16.msra.mxu0 0
  %1238 = vmatprep.subr.bf16.mxu0 0
  %1239 = vmatpush1.bf16.msra.mxu0 0
  %1240 = vmatprep.subr.bf16.mxu0 0
  %1241 = vmatpush1.bf16.msra.mxu0 %v1224
  %1242 = vmatprep.subr.bf16.mxu0 0
  %1243 = vmatpush1.bf16.msra.mxu0 %v1223
  %1244 = vmatprep.subr.bf16.mxu0 0
  %1245 = vmatpush1.bf16.msra.mxu0 %v1222
  %1246 = vmatprep.subr.bf16.mxu0 0
  %1247 = vmatpush1.bf16.msra.mxu0 %v1221
  %1248 = vmatprep.subr.bf16.mxu0 0
  %1249 = vmatpush2.bf16.msra.mxu0 0
  %1250 = vmatprep.subr.bf16.mxu0 0
  %1251 = vmatpush2.bf16.msra.mxu0 0
  %1252 = vmatprep.subr.bf16.mxu0 0
  %1253 = vmatpush2.bf16.msra.mxu0 0
  %1254 = vmatprep.subr.bf16.mxu0 0
  %1255 = vmatpush2.bf16.msra.mxu0 0
  %1256 = vmatprep.subr.bf16.mxu0 0
  %1257 = vmatpush2.bf16.msra.mxu0 0
  %1258 = vmatprep.subr.bf16.mxu0 0
  %1259 = vmatpush2.bf16.msra.mxu0 0
  %1260 = vmatprep.subr.bf16.mxu0 0
  %1261 = vmatpush2.bf16.msra.mxu0 0
  %1262 = vmatprep.subr.bf16.mxu0 0
  %1263 = vmatpush2.bf16.msra.mxu0 0
  %1264 = vmatprep.mubr.bf16.mxu0 0
  %1265 = vmatmul.mubr.bf16.gmra.mxu0 %v1230
  %v1266 = vpop.f32.mrf.mxu0
  %v1267 = vadd.f32 0.0, %v1266
  %v1268 = vpop.f32.mrf.mxu0
  %v1269 = vpop.f32.mrf.mxu0
  %v1270 = vadd.f32 0.0, %v1269
  %v1271 = vpop.f32.mrf.mxu0
  %1272 = vdwg.mxu0
  %v1273 = vadd.f32 %v1192, %v1267
  %v1274 = vadd.f32 %v1193, %v1270
  %v1275 = vld [vmem:[%s498] sm:$0xf]
  %v1276 = vld [vmem:[%s498 + $0x4] sm:$0xf]
  %v1277 = vld [vmem:[%s498 + $0x8] sm:$0xf]
  %v1278 = vld [vmem:[%s498 + $0xc] sm:$0xf]
  %v1279 = vld [vmem:[%s498 + $0x10] sm:$0xf]
  %v1280 = vld [vmem:[%s498 + $0x14] sm:$0xf]
  %v1281 = vld [vmem:[%s498 + $0x18] sm:$0xf]
  %v1282 = vld [vmem:[%s498 + $0x1c] sm:$0xf]
  %1283 = vrot.lane.b32.xlu0 %v1115, 120
  %v1284 = vpop.permute.xlu0 %1283
  %v1293 = vunpack.c.l.b16 %v1275
  %v1294 = vunpack.c.l.b16 %v1276
  %v1295 = vunpack.c.l.b16 %v1277
  %v1296 = vunpack.c.l.b16 %v1278
  %v1297 = vunpack.c.l.b16 %v1279
  %v1298 = vunpack.c.l.b16 %v1280
  %v1299 = vunpack.c.l.b16 %v1281
  %v1300 = vunpack.c.l.b16 %v1282
  %v1301 = vpack.c.b16 %v1294, %v1293
  %v1302 = vpack.c.b16 %v1296, %v1295
  %v1303 = vpack.c.b16 %v1298, %v1297
  %v1304 = vpack.c.b16 %v1300, %v1299
  %v1310 = vsel %vm140, %v1284, 0
  %1312 = vmatprep.subr.bf16.mxu0 0
  %1313 = vmatpush1.bf16.msra.mxu0 0
  %1314 = vmatprep.subr.bf16.mxu0 0
  %1315 = vmatpush1.bf16.msra.mxu0 0
  %1316 = vmatprep.subr.bf16.mxu0 0
  %1317 = vmatpush1.bf16.msra.mxu0 0
  %1318 = vmatprep.subr.bf16.mxu0 0
  %1319 = vmatpush1.bf16.msra.mxu0 0
  %1320 = vmatprep.subr.bf16.mxu0 0
  %1321 = vmatpush1.bf16.msra.mxu0 %v1304
  %1322 = vmatprep.subr.bf16.mxu0 0
  %1323 = vmatpush1.bf16.msra.mxu0 %v1303
  %1324 = vmatprep.subr.bf16.mxu0 0
  %1325 = vmatpush1.bf16.msra.mxu0 %v1302
  %1326 = vmatprep.subr.bf16.mxu0 0
  %1327 = vmatpush1.bf16.msra.mxu0 %v1301
  %1328 = vmatprep.subr.bf16.mxu0 0
  %1329 = vmatpush2.bf16.msra.mxu0 0
  %1330 = vmatprep.subr.bf16.mxu0 0
  %1331 = vmatpush2.bf16.msra.mxu0 0
  %1332 = vmatprep.subr.bf16.mxu0 0
  %1333 = vmatpush2.bf16.msra.mxu0 0
  %1334 = vmatprep.subr.bf16.mxu0 0
  %1335 = vmatpush2.bf16.msra.mxu0 0
  %1336 = vmatprep.subr.bf16.mxu0 0
  %1337 = vmatpush2.bf16.msra.mxu0 0
  %1338 = vmatprep.subr.bf16.mxu0 0
  %1339 = vmatpush2.bf16.msra.mxu0 0
  %1340 = vmatprep.subr.bf16.mxu0 0
  %1341 = vmatpush2.bf16.msra.mxu0 0
  %1342 = vmatprep.subr.bf16.mxu0 0
  %1343 = vmatpush2.bf16.msra.mxu0 0
  %1344 = vmatprep.mubr.bf16.mxu0 0
  %1345 = vmatmul.mubr.bf16.gmra.mxu0 %v1310
  %v1346 = vpop.f32.mrf.mxu0
  %v1347 = vadd.f32 0.0, %v1346
  %v1348 = vpop.f32.mrf.mxu0
  %v1349 = vpop.f32.mrf.mxu0
  %v1350 = vadd.f32 0.0, %v1349
  %v1351 = vpop.f32.mrf.mxu0
  %1352 = vdwg.mxu0
  %v1353 = vadd.f32 %v1273, %v1347
  %v1354 = vadd.f32 %v1274, %v1350
  %v1355 = vld [vmem:[%s872 + $0x2] sm:$0xff]
  %v1356 = vld [vmem:[%s872 + $0xa] sm:$0xff]
  %v1357 = vpack.c.bf16 %v1356, %v1355
  %v1358 = vld [vmem:[%s582] sm:$0xf]
  %v1359 = vld [vmem:[%s582 + $0x4] sm:$0xf]
  %v1360 = vld [vmem:[%s582 + $0x8] sm:$0xf]
  %v1361 = vld [vmem:[%s582 + $0xc] sm:$0xf]
  %v1362 = vld [vmem:[%s582 + $0x10] sm:$0xf]
  %v1363 = vld [vmem:[%s582 + $0x14] sm:$0xf]
  %v1364 = vld [vmem:[%s582 + $0x18] sm:$0xf]
  %v1365 = vld [vmem:[%s582 + $0x1c] sm:$0xf]
  %v1374 = vunpack.c.l.b16 %v1358
  %v1375 = vunpack.c.l.b16 %v1359
  %v1376 = vunpack.c.l.b16 %v1360
  %v1377 = vunpack.c.l.b16 %v1361
  %v1378 = vunpack.c.l.b16 %v1362
  %v1379 = vunpack.c.l.b16 %v1363
  %v1380 = vunpack.c.l.b16 %v1364
  %v1381 = vunpack.c.l.b16 %v1365
  %v1382 = vpack.c.b16 %v1375, %v1374
  %v1383 = vpack.c.b16 %v1377, %v1376
  %v1384 = vpack.c.b16 %v1379, %v1378
  %v1385 = vpack.c.b16 %v1381, %v1380
  %v1391 = vsel %vm140, %v1357, 0
  %1393 = vmatprep.subr.bf16.mxu0 0
  %1394 = vmatpush1.bf16.msra.mxu0 0
  %1395 = vmatprep.subr.bf16.mxu0 0
  %1396 = vmatpush1.bf16.msra.mxu0 0
  %1397 = vmatprep.subr.bf16.mxu0 0
  %1398 = vmatpush1.bf16.msra.mxu0 0
  %1399 = vmatprep.subr.bf16.mxu0 0
  %1400 = vmatpush1.bf16.msra.mxu0 0
  %1401 = vmatprep.subr.bf16.mxu0 0
  %1402 = vmatpush1.bf16.msra.mxu0 %v1385
  %1403 = vmatprep.subr.bf16.mxu0 0
  %1404 = vmatpush1.bf16.msra.mxu0 %v1384
  %1405 = vmatprep.subr.bf16.mxu0 0
  %1406 = vmatpush1.bf16.msra.mxu0 %v1383
  %1407 = vmatprep.subr.bf16.mxu0 0
  %1408 = vmatpush1.bf16.msra.mxu0 %v1382
  %1409 = vmatprep.subr.bf16.mxu0 0
  %1410 = vmatpush2.bf16.msra.mxu0 0
  %1411 = vmatprep.subr.bf16.mxu0 0
  %1412 = vmatpush2.bf16.msra.mxu0 0
  %1413 = vmatprep.subr.bf16.mxu0 0
  %1414 = vmatpush2.bf16.msra.mxu0 0
  %1415 = vmatprep.subr.bf16.mxu0 0
  %1416 = vmatpush2.bf16.msra.mxu0 0
  %1417 = vmatprep.subr.bf16.mxu0 0
  %1418 = vmatpush2.bf16.msra.mxu0 0
  %1419 = vmatprep.subr.bf16.mxu0 0
  %1420 = vmatpush2.bf16.msra.mxu0 0
  %1421 = vmatprep.subr.bf16.mxu0 0
  %1422 = vmatpush2.bf16.msra.mxu0 0
  %1423 = vmatprep.subr.bf16.mxu0 0
  %1424 = vmatpush2.bf16.msra.mxu0 0
  %1425 = vmatprep.mubr.bf16.mxu0 0
  %1426 = vmatmul.mubr.bf16.gmra.mxu0 %v1391
  %v1427 = vpop.f32.mrf.mxu0
  %v1428 = vadd.f32 0.0, %v1427
  %v1429 = vpop.f32.mrf.mxu0
  %v1430 = vpop.f32.mrf.mxu0
  %v1431 = vadd.f32 0.0, %v1430
  %v1432 = vpop.f32.mrf.mxu0
  %1433 = vdwg.mxu0
  %v1434 = vadd.f32 %v1353, %v1428
  %v1435 = vadd.f32 %v1354, %v1431
  %v1436 = vld [vmem:[%s661] sm:$0xf]
  %v1437 = vld [vmem:[%s661 + $0x4] sm:$0xf]
  %v1438 = vld [vmem:[%s661 + $0x8] sm:$0xf]
  %v1439 = vld [vmem:[%s661 + $0xc] sm:$0xf]
  %v1440 = vld [vmem:[%s661 + $0x10] sm:$0xf]
  %v1441 = vld [vmem:[%s661 + $0x14] sm:$0xf]
  %v1442 = vld [vmem:[%s661 + $0x18] sm:$0xf]
  %v1443 = vld [vmem:[%s661 + $0x1c] sm:$0xf]
  %1445 = vrot.lane.b32.xlu0 %v1357, 124
  %v1446 = vpop.permute.xlu0 %1445
  %v1455 = vunpack.c.l.b16 %v1436
  %v1456 = vunpack.c.l.b16 %v1437
  %v1457 = vunpack.c.l.b16 %v1438
  %v1458 = vunpack.c.l.b16 %v1439
  %v1459 = vunpack.c.l.b16 %v1440
  %v1460 = vunpack.c.l.b16 %v1441
  %v1461 = vunpack.c.l.b16 %v1442
  %v1462 = vunpack.c.l.b16 %v1443
  %v1463 = vpack.c.b16 %v1456, %v1455
  %v1464 = vpack.c.b16 %v1458, %v1457
  %v1465 = vpack.c.b16 %v1460, %v1459
  %v1466 = vpack.c.b16 %v1462, %v1461
  %v1472 = vsel %vm140, %v1446, 0
  %1474 = vmatprep.subr.bf16.mxu0 0
  %1475 = vmatpush1.bf16.msra.mxu0 0
  %1476 = vmatprep.subr.bf16.mxu0 0
  %1477 = vmatpush1.bf16.msra.mxu0 0
  %1478 = vmatprep.subr.bf16.mxu0 0
  %1479 = vmatpush1.bf16.msra.mxu0 0
  %1480 = vmatprep.subr.bf16.mxu0 0
  %1481 = vmatpush1.bf16.msra.mxu0 0
  %1482 = vmatprep.subr.bf16.mxu0 0
  %1483 = vmatpush1.bf16.msra.mxu0 %v1466
  %1484 = vmatprep.subr.bf16.mxu0 0
  %1485 = vmatpush1.bf16.msra.mxu0 %v1465
  %1486 = vmatprep.subr.bf16.mxu0 0
  %1487 = vmatpush1.bf16.msra.mxu0 %v1464
  %1488 = vmatprep.subr.bf16.mxu0 0
  %1489 = vmatpush1.bf16.msra.mxu0 %v1463
  %1490 = vmatprep.subr.bf16.mxu0 0
  %1491 = vmatpush2.bf16.msra.mxu0 0
  %1492 = vmatprep.subr.bf16.mxu0 0
  %1493 = vmatpush2.bf16.msra.mxu0 0
  %1494 = vmatprep.subr.bf16.mxu0 0
  %1495 = vmatpush2.bf16.msra.mxu0 0
  %1496 = vmatprep.subr.bf16.mxu0 0
  %1497 = vmatpush2.bf16.msra.mxu0 0
  %1498 = vmatprep.subr.bf16.mxu0 0
  %1499 = vmatpush2.bf16.msra.mxu0 0
  %1500 = vmatprep.subr.bf16.mxu0 0
  %1501 = vmatpush2.bf16.msra.mxu0 0
  %1502 = vmatprep.subr.bf16.mxu0 0
  %1503 = vmatpush2.bf16.msra.mxu0 0
  %1504 = vmatprep.subr.bf16.mxu0 0
  %1505 = vmatpush2.bf16.msra.mxu0 0
  %1506 = vmatprep.mubr.bf16.mxu0 0
  %1507 = vmatmul.mubr.bf16.gmra.mxu0 %v1472
  %v1508 = vpop.f32.mrf.mxu0
  %v1509 = vadd.f32 0.0, %v1508
  %v1510 = vpop.f32.mrf.mxu0
  %v1511 = vpop.f32.mrf.mxu0
  %v1512 = vadd.f32 0.0, %v1511
  %v1513 = vpop.f32.mrf.mxu0
  %1514 = vdwg.mxu0
  %v1515 = vadd.f32 %v1434, %v1509
  %v1516 = vadd.f32 %v1435, %v1512
  %v1517 = vld [vmem:[%s743] sm:$0xf]
  %v1518 = vld [vmem:[%s743 + $0x4] sm:$0xf]
  %v1519 = vld [vmem:[%s743 + $0x8] sm:$0xf]
  %v1520 = vld [vmem:[%s743 + $0xc] sm:$0xf]
  %v1521 = vld [vmem:[%s743 + $0x10] sm:$0xf]
  %v1522 = vld [vmem:[%s743 + $0x14] sm:$0xf]
  %v1523 = vld [vmem:[%s743 + $0x18] sm:$0xf]
  %v1524 = vld [vmem:[%s743 + $0x1c] sm:$0xf]
  %1525 = vrot.lane.b32.xlu0 %v1357, 120
  %v1526 = vpop.permute.xlu0 %1525
  %v1535 = vunpack.c.l.b16 %v1517
  %v1536 = vunpack.c.l.b16 %v1518
  %v1537 = vunpack.c.l.b16 %v1519
  %v1538 = vunpack.c.l.b16 %v1520
  %v1539 = vunpack.c.l.b16 %v1521
  %v1540 = vunpack.c.l.b16 %v1522
  %v1541 = vunpack.c.l.b16 %v1523
  %v1542 = vunpack.c.l.b16 %v1524
  %v1543 = vpack.c.b16 %v1536, %v1535
  %v1544 = vpack.c.b16 %v1538, %v1537
  %v1545 = vpack.c.b16 %v1540, %v1539
  %v1546 = vpack.c.b16 %v1542, %v1541
  %v1552 = vsel %vm140, %v1526, 0
  %1554 = vmatprep.subr.bf16.mxu0 0
  %1555 = vmatpush1.bf16.msra.mxu0 0
  %1556 = vmatprep.subr.bf16.mxu0 0
  %1557 = vmatpush1.bf16.msra.mxu0 0
  %1558 = vmatprep.subr.bf16.mxu0 0
  %1559 = vmatpush1.bf16.msra.mxu0 0
  %1560 = vmatprep.subr.bf16.mxu0 0
  %1561 = vmatpush1.bf16.msra.mxu0 0
  %1562 = vmatprep.subr.bf16.mxu0 0
  %1563 = vmatpush1.bf16.msra.mxu0 %v1546
  %1564 = vmatprep.subr.bf16.mxu0 0
  %1565 = vmatpush1.bf16.msra.mxu0 %v1545
  %1566 = vmatprep.subr.bf16.mxu0 0
  %1567 = vmatpush1.bf16.msra.mxu0 %v1544
  %1568 = vmatprep.subr.bf16.mxu0 0
  %1569 = vmatpush1.bf16.msra.mxu0 %v1543
  %1570 = vmatprep.subr.bf16.mxu0 0
  %1571 = vmatpush2.bf16.msra.mxu0 0
  %1572 = vmatprep.subr.bf16.mxu0 0
  %1573 = vmatpush2.bf16.msra.mxu0 0
  %1574 = vmatprep.subr.bf16.mxu0 0
  %1575 = vmatpush2.bf16.msra.mxu0 0
  %1576 = vmatprep.subr.bf16.mxu0 0
  %1577 = vmatpush2.bf16.msra.mxu0 0
  %1578 = vmatprep.subr.bf16.mxu0 0
  %1579 = vmatpush2.bf16.msra.mxu0 0
  %1580 = vmatprep.subr.bf16.mxu0 0
  %1581 = vmatpush2.bf16.msra.mxu0 0
  %1582 = vmatprep.subr.bf16.mxu0 0
  %1583 = vmatpush2.bf16.msra.mxu0 0
  %1584 = vmatprep.subr.bf16.mxu0 0
  %1585 = vmatpush2.bf16.msra.mxu0 0
  %1586 = vmatprep.mubr.bf16.mxu0 0
  %1587 = vmatmul.mubr.bf16.gmra.mxu0 %v1552
  %v1588 = vpop.f32.mrf.mxu0
  %v1589 = vadd.f32 0.0, %v1588
  %v1590 = vpop.f32.mrf.mxu0
  %v1591 = vpop.f32.mrf.mxu0
  %v1592 = vadd.f32 0.0, %v1591
  %v1593 = vpop.f32.mrf.mxu0
  %1594 = vdwg.mxu0
  %v1595 = vadd.f32 %v1515, %v1589
  %v1596 = vadd.f32 %v1516, %v1592
  %v1597 = vadd.f32 %v1595, %v828
  %v1598 = vadd.f32 %v1596, %v828
  %v1600 = vsel %vm67, 1.0, 0
  %1602 = vmatprep.subr.mxu0 0.0
  %1603 = vmatpush1.msra.mxu0 0.0
  %1604 = vmatprep.subr.mxu0 0.0
  %1605 = vmatpush1.msra.mxu0 0.0
  %1606 = vmatprep.subr.mxu0 0.0
  %1607 = vmatpush1.msra.mxu0 0.0
  %1608 = vmatprep.subr.mxu0 0.0
  %1609 = vmatpush1.msra.mxu0 0.0
  %1610 = vmatprep.subr.mxu0 0.0
  %1611 = vmatpush1.msra.mxu0 0.0
  %1612 = vmatprep.subr.mxu0 0.0
  %1613 = vmatpush1.msra.mxu0 0.0
  %1614 = vmatprep.subr.mxu0 0.0
  %1615 = vmatpush1.msra.mxu0 0.0
  %1616 = vmatprep.subr.mxu0 0.0
  %1617 = vmatpush1.msra.mxu0 0.0
  %1618 = vmatprep.subr.mxu0 0.0
  %1619 = vmatpush1.msra.mxu0 0.0
  %1620 = vmatprep.subr.mxu0 0.0
  %1621 = vmatpush1.msra.mxu0 0.0
  %1622 = vmatprep.subr.mxu0 0.0
  %1623 = vmatpush1.msra.mxu0 0.0
  %1624 = vmatprep.subr.mxu0 0.0
  %1625 = vmatpush1.msra.mxu0 0.0
  %1626 = vmatprep.subr.mxu0 0.0
  %1627 = vmatpush1.msra.mxu0 0.0
  %1628 = vmatprep.subr.mxu0 0.0
  %1629 = vmatpush1.msra.mxu0 0.0
  %1630 = vmatprep.subr.mxu0 0.0
  %1631 = vmatpush1.msra.mxu0 %v1598
  %1632 = vmatprep.subr.mxu0 0.0
  %1633 = vmatpush1.msra.mxu0 %v1597
  %1634 = vmatprep.subr.mxu0 0.0
  %1635 = vmatpush2.msra.mxu0 0.0
  %1636 = vmatprep.subr.mxu0 0.0
  %1637 = vmatpush2.msra.mxu0 0.0
  %1638 = vmatprep.subr.mxu0 0.0
  %1639 = vmatpush2.msra.mxu0 0.0
  %1640 = vmatprep.subr.mxu0 0.0
  %1641 = vmatpush2.msra.mxu0 0.0
  %1642 = vmatprep.subr.mxu0 0.0
  %1643 = vmatpush2.msra.mxu0 0.0
  %1644 = vmatprep.subr.mxu0 0.0
  %1645 = vmatpush2.msra.mxu0 0.0
  %1646 = vmatprep.subr.mxu0 0.0
  %1647 = vmatpush2.msra.mxu0 0.0
  %1648 = vmatprep.subr.mxu0 0.0
  %1649 = vmatpush2.msra.mxu0 0.0
  %1650 = vmatprep.subr.mxu0 0.0
  %1651 = vmatpush2.msra.mxu0 0.0
  %1652 = vmatprep.subr.mxu0 0.0
  %1653 = vmatpush2.msra.mxu0 0.0
  %1654 = vmatprep.subr.mxu0 0.0
  %1655 = vmatpush2.msra.mxu0 0.0
  %1656 = vmatprep.subr.mxu0 0.0
  %1657 = vmatpush2.msra.mxu0 0.0
  %1658 = vmatprep.subr.mxu0 0.0
  %1659 = vmatpush2.msra.mxu0 0.0
  %1660 = vmatprep.subr.mxu0 0.0
  %1661 = vmatpush2.msra.mxu0 0.0
  %1662 = vmatprep.subr.mxu0 0.0
  %1663 = vmatpush2.msra.mxu0 0.0
  %1664 = vmatprep.subr.mxu0 0.0
  %1665 = vmatpush2.msra.mxu0 0.0
  %1666 = vmatprep.mubr.f32.mxu0 0.0
  %1667 = vmatmul.mubr.f32.gmra.mxu0 %v1600
  %v1668 = vpop.f32.mrf.mxu0
  %v1669 = vadd.f32 0.0, %v1668
  %v1670 = vpop.f32.mrf.mxu0
  %1671 = vdwg.mxu0
  %1672 = vmatprep.subr.mxu0 0.0
  %1673 = vmatpush1.msra.mxu0 0.0
  %1674 = vmatprep.subr.mxu0 0.0
  %1675 = vmatpush1.msra.mxu0 0.0
  %1676 = vmatprep.subr.mxu0 0.0
  %1677 = vmatpush1.msra.mxu0 0.0
  %1678 = vmatprep.subr.mxu0 0.0
  %1679 = vmatpush1.msra.mxu0 0.0
  %1680 = vmatprep.subr.mxu0 0.0
  %1681 = vmatpush1.msra.mxu0 0.0
  %1682 = vmatprep.subr.mxu0 0.0
  %1683 = vmatpush1.msra.mxu0 0.0
  %1684 = vmatprep.subr.mxu0 0.0
  %1685 = vmatpush1.msra.mxu0 0.0
  %1686 = vmatprep.subr.mxu0 0.0
  %1687 = vmatpush1.msra.mxu0 0.0
  %1688 = vmatprep.subr.mxu0 0.0
  %1689 = vmatpush1.msra.mxu0 0.0
  %1690 = vmatprep.subr.mxu0 0.0
  %1691 = vmatpush1.msra.mxu0 0.0
  %1692 = vmatprep.subr.mxu0 0.0
  %1693 = vmatpush1.msra.mxu0 0.0
  %1694 = vmatprep.subr.mxu0 0.0
  %1695 = vmatpush1.msra.mxu0 0.0
  %1696 = vmatprep.subr.mxu0 0.0
  %1697 = vmatpush1.msra.mxu0 0.0
  %1698 = vmatprep.subr.mxu0 0.0
  %1699 = vmatpush1.msra.mxu0 0.0
  %1700 = vmatprep.subr.mxu0 0.0
  %1701 = vmatpush1.msra.mxu0 %v831
  %1702 = vmatprep.subr.mxu0 0.0
  %1703 = vmatpush1.msra.mxu0 %v830
  %1704 = vmatprep.subr.mxu0 0.0
  %1705 = vmatpush2.msra.mxu0 0.0
  %1706 = vmatprep.subr.mxu0 0.0
  %1707 = vmatpush2.msra.mxu0 0.0
  %1708 = vmatprep.subr.mxu0 0.0
  %1709 = vmatpush2.msra.mxu0 0.0
  %1710 = vmatprep.subr.mxu0 0.0
  %1711 = vmatpush2.msra.mxu0 0.0
  %1712 = vmatprep.subr.mxu0 0.0
  %1713 = vmatpush2.msra.mxu0 0.0
  %1714 = vmatprep.subr.mxu0 0.0
  %1715 = vmatpush2.msra.mxu0 0.0
  %1716 = vmatprep.subr.mxu0 0.0
  %1717 = vmatpush2.msra.mxu0 0.0
  %1718 = vmatprep.subr.mxu0 0.0
  %1719 = vmatpush2.msra.mxu0 0.0
  %1720 = vmatprep.subr.mxu0 0.0
  %1721 = vmatpush2.msra.mxu0 0.0
  %1722 = vmatprep.subr.mxu0 0.0
  %1723 = vmatpush2.msra.mxu0 0.0
  %1724 = vmatprep.subr.mxu0 0.0
  %1725 = vmatpush2.msra.mxu0 0.0
  %1726 = vmatprep.subr.mxu0 0.0
  %1727 = vmatpush2.msra.mxu0 0.0
  %1728 = vmatprep.subr.mxu0 0.0
  %1729 = vmatpush2.msra.mxu0 0.0
  %1730 = vmatprep.subr.mxu0 0.0
  %1731 = vmatpush2.msra.mxu0 0.0
  %1732 = vmatprep.subr.mxu0 0.0
  %1733 = vmatpush2.msra.mxu0 0.0
  %1734 = vmatprep.subr.mxu0 0.0
  %1735 = vmatpush2.msra.mxu0 0.0
  %1736 = vmatprep.mubr.f32.mxu0 0.0
  %1737 = vmatmul.mubr.f32.gmra.mxu0 %v1600
  %v1738 = vpop.f32.mrf.mxu0
  %v1739 = vadd.f32 %v1669, %v1738
  %v1740 = vpop.f32.mrf.mxu0
  %1741 = vdwg.mxu0
  %v1742 = vmul.f32 %v1597, %v1597
  %v1743 = vmul.f32 %v1598, %v1598
  %1744 = vmatprep.subr.mxu0 0.0
  %1745 = vmatpush1.msra.mxu0 0.0
  %1746 = vmatprep.subr.mxu0 0.0
  %1747 = vmatpush1.msra.mxu0 0.0
  %1748 = vmatprep.subr.mxu0 0.0
  %1749 = vmatpush1.msra.mxu0 0.0
  %1750 = vmatprep.subr.mxu0 0.0
  %1751 = vmatpush1.msra.mxu0 0.0
  %1752 = vmatprep.subr.mxu0 0.0
  %1753 = vmatpush1.msra.mxu0 0.0
  %1754 = vmatprep.subr.mxu0 0.0
  %1755 = vmatpush1.msra.mxu0 0.0
  %1756 = vmatprep.subr.mxu0 0.0
  %1757 = vmatpush1.msra.mxu0 0.0
  %1758 = vmatprep.subr.mxu0 0.0
  %1759 = vmatpush1.msra.mxu0 0.0
  %1760 = vmatprep.subr.mxu0 0.0
  %1761 = vmatpush1.msra.mxu0 0.0
  %1762 = vmatprep.subr.mxu0 0.0
  %1763 = vmatpush1.msra.mxu0 0.0
  %1764 = vmatprep.subr.mxu0 0.0
  %1765 = vmatpush1.msra.mxu0 0.0
  %1766 = vmatprep.subr.mxu0 0.0
  %1767 = vmatpush1.msra.mxu0 0.0
  %1768 = vmatprep.subr.mxu0 0.0
  %1769 = vmatpush1.msra.mxu0 0.0
  %1770 = vmatprep.subr.mxu0 0.0
  %1771 = vmatpush1.msra.mxu0 0.0
  %1772 = vmatprep.subr.mxu0 0.0
  %1773 = vmatpush1.msra.mxu0 %v1743
  %1774 = vmatprep.subr.mxu0 0.0
  %1775 = vmatpush1.msra.mxu0 %v1742
  %1776 = vmatprep.subr.mxu0 0.0
  %1777 = vmatpush2.msra.mxu0 0.0
  %1778 = vmatprep.subr.mxu0 0.0
  %1779 = vmatpush2.msra.mxu0 0.0
  %1780 = vmatprep.subr.mxu0 0.0
  %1781 = vmatpush2.msra.mxu0 0.0
  %1782 = vmatprep.subr.mxu0 0.0
  %1783 = vmatpush2.msra.mxu0 0.0
  %1784 = vmatprep.subr.mxu0 0.0
  %1785 = vmatpush2.msra.mxu0 0.0
  %1786 = vmatprep.subr.mxu0 0.0
  %1787 = vmatpush2.msra.mxu0 0.0
  %1788 = vmatprep.subr.mxu0 0.0
  %1789 = vmatpush2.msra.mxu0 0.0
  %1790 = vmatprep.subr.mxu0 0.0
  %1791 = vmatpush2.msra.mxu0 0.0
  %1792 = vmatprep.subr.mxu0 0.0
  %1793 = vmatpush2.msra.mxu0 0.0
  %1794 = vmatprep.subr.mxu0 0.0
  %1795 = vmatpush2.msra.mxu0 0.0
  %1796 = vmatprep.subr.mxu0 0.0
  %1797 = vmatpush2.msra.mxu0 0.0
  %1798 = vmatprep.subr.mxu0 0.0
  %1799 = vmatpush2.msra.mxu0 0.0
  %1800 = vmatprep.subr.mxu0 0.0
  %1801 = vmatpush2.msra.mxu0 0.0
  %1802 = vmatprep.subr.mxu0 0.0
  %1803 = vmatpush2.msra.mxu0 0.0
  %1804 = vmatprep.subr.mxu0 0.0
  %1805 = vmatpush2.msra.mxu0 0.0
  %1806 = vmatprep.subr.mxu0 0.0
  %1807 = vmatpush2.msra.mxu0 0.0
  %1808 = vmatprep.mubr.f32.mxu0 0.0
  %1809 = vmatmul.mubr.f32.gmra.mxu0 %v1600
  %v1810 = vpop.f32.mrf.mxu0
  %v1811 = vadd.f32 0.0, %v1810
  %v1812 = vpop.f32.mrf.mxu0
  %1813 = vdwg.mxu0
  %1814 = vmatprep.subr.mxu0 0.0
  %1815 = vmatpush1.msra.mxu0 0.0
  %1816 = vmatprep.subr.mxu0 0.0
  %1817 = vmatpush1.msra.mxu0 0.0
  %1818 = vmatprep.subr.mxu0 0.0
  %1819 = vmatpush1.msra.mxu0 0.0
  %1820 = vmatprep.subr.mxu0 0.0
  %1821 = vmatpush1.msra.mxu0 0.0
  %1822 = vmatprep.subr.mxu0 0.0
  %1823 = vmatpush1.msra.mxu0 0.0
  %1824 = vmatprep.subr.mxu0 0.0
  %1825 = vmatpush1.msra.mxu0 0.0
  %1826 = vmatprep.subr.mxu0 0.0
  %1827 = vmatpush1.msra.mxu0 0.0
  %1828 = vmatprep.subr.mxu0 0.0
  %1829 = vmatpush1.msra.mxu0 0.0
  %1830 = vmatprep.subr.mxu0 0.0
  %1831 = vmatpush1.msra.mxu0 0.0
  %1832 = vmatprep.subr.mxu0 0.0
  %1833 = vmatpush1.msra.mxu0 0.0
  %1834 = vmatprep.subr.mxu0 0.0
  %1835 = vmatpush1.msra.mxu0 0.0
  %1836 = vmatprep.subr.mxu0 0.0
  %1837 = vmatpush1.msra.mxu0 0.0
  %1838 = vmatprep.subr.mxu0 0.0
  %1839 = vmatpush1.msra.mxu0 0.0
  %1840 = vmatprep.subr.mxu0 0.0
  %1841 = vmatpush1.msra.mxu0 0.0
  %1842 = vmatprep.subr.mxu0 0.0
  %1843 = vmatpush1.msra.mxu0 %v833
  %1844 = vmatprep.subr.mxu0 0.0
  %1845 = vmatpush1.msra.mxu0 %v832
  %1846 = vmatprep.subr.mxu0 0.0
  %1847 = vmatpush2.msra.mxu0 0.0
  %1848 = vmatprep.subr.mxu0 0.0
  %1849 = vmatpush2.msra.mxu0 0.0
  %1850 = vmatprep.subr.mxu0 0.0
  %1851 = vmatpush2.msra.mxu0 0.0
  %1852 = vmatprep.subr.mxu0 0.0
  %1853 = vmatpush2.msra.mxu0 0.0
  %1854 = vmatprep.subr.mxu0 0.0
  %1855 = vmatpush2.msra.mxu0 0.0
  %1856 = vmatprep.subr.mxu0 0.0
  %1857 = vmatpush2.msra.mxu0 0.0
  %1858 = vmatprep.subr.mxu0 0.0
  %1859 = vmatpush2.msra.mxu0 0.0
  %1860 = vmatprep.subr.mxu0 0.0
  %1861 = vmatpush2.msra.mxu0 0.0
  %1862 = vmatprep.subr.mxu0 0.0
  %1863 = vmatpush2.msra.mxu0 0.0
  %1864 = vmatprep.subr.mxu0 0.0
  %1865 = vmatpush2.msra.mxu0 0.0
  %1866 = vmatprep.subr.mxu0 0.0
  %1867 = vmatpush2.msra.mxu0 0.0
  %1868 = vmatprep.subr.mxu0 0.0
  %1869 = vmatpush2.msra.mxu0 0.0
  %1870 = vmatprep.subr.mxu0 0.0
  %1871 = vmatpush2.msra.mxu0 0.0
  %1872 = vmatprep.subr.mxu0 0.0
  %1873 = vmatpush2.msra.mxu0 0.0
  %1874 = vmatprep.subr.mxu0 0.0
  %1875 = vmatpush2.msra.mxu0 0.0
  %1876 = vmatprep.subr.mxu0 0.0
  %1877 = vmatpush2.msra.mxu0 0.0
  %1878 = vmatprep.mubr.f32.mxu0 0.0
  %1879 = vmatmul.mubr.f32.gmra.mxu0 %v1600
  %v1880 = vpop.f32.mrf.mxu0
  %v1881 = vadd.f32 %v1811, %v1880
  %v1882 = vpop.f32.mrf.mxu0
  %1883 = vdwg.mxu0
  %v1886 = vrot.slane %v1597, 7
  %v1887 = vrot.slane %v1598, 7
  %v1888 = vsel %vm836, %v1886, %v1887
  %1889 = vrot.lane.b32.xlu0 %v1886, 8
  %v1890 = vpop.permute.xlu0 %1889
  %1891 = vrot.lane.b32.xlu0 %v1888, 8
  %v1892 = vpop.permute.xlu0 %1891
  %1893 = vrot.lane.b32.xlu0 %v1887, 8
  %v1894 = vpop.permute.xlu0 %1893
  %s1898 = scalar_lea.vmem [#allocation3], 48
  %1899 = vst.msk [vmem:[%s1898] sm:$0xfe] %vm849, %v1890
  %1900 = vst.msk [vmem:[%s1898 + $0x8] sm:$0xfe] %vm851, %v1890
  %1901 = vst.msk [vmem:[%s1898 + $0x10] sm:$0xff] %vm853, %v1892
  %1902 = vst.msk [vmem:[%s1898 + $0x18] sm:$0xff] %vm855, %v1892
  %1903 = vst.msk [vmem:[%s1898 + $0x20] sm:$0x1] %vm857, %v1894
  %1904 = vst.msk [vmem:[%s1898 + $0x28] sm:$0x1] %vm859, %v1894
  %1905 = vmatprep.subr.mxu0 0.0
  %1906 = vmatpush1.msra.mxu0 %v56
  %1907 = vmatprep.subr.mxu0 0.0
  %1908 = vmatpush1.msra.mxu0 %v55
  %1909 = vmatprep.subr.mxu0 0.0
  %1910 = vmatpush1.msra.mxu0 %v54
  %1911 = vmatprep.subr.mxu0 0.0
  %1912 = vmatpush1.msra.mxu0 %v53
  %1913 = vmatprep.subr.mxu0 0.0
  %1914 = vmatpush1.msra.mxu0 %v52
  %1915 = vmatprep.subr.mxu0 0.0
  %1916 = vmatpush1.msra.mxu0 %v51
  %1917 = vmatprep.subr.mxu0 0.0
  %1918 = vmatpush1.msra.mxu0 %v50
  %1919 = vmatprep.subr.mxu0 0.0
  %1920 = vmatpush1.msra.mxu0 %v49
  %1921 = vmatprep.subr.mxu0 0.0
  %1922 = vmatpush1.msra.mxu0 %v48
  %1923 = vmatprep.subr.mxu0 0.0
  %1924 = vmatpush1.msra.mxu0 %v47
  %1925 = vmatprep.subr.mxu0 0.0
  %1926 = vmatpush1.msra.mxu0 %v46
  %1927 = vmatprep.subr.mxu0 0.0
  %1928 = vmatpush1.msra.mxu0 %v45
  %1929 = vmatprep.subr.mxu0 0.0
  %1930 = vmatpush1.msra.mxu0 %v44
  %1931 = vmatprep.subr.mxu0 0.0
  %1932 = vmatpush1.msra.mxu0 %v43
  %1933 = vmatprep.subr.mxu0 0.0
  %1934 = vmatpush1.msra.mxu0 %v42
  %1935 = vmatprep.subr.mxu0 0.0
  %1936 = vmatpush1.msra.mxu0 %v41
  %1937 = vmatprep.subr.mxu0 0.0
  %1938 = vmatpush2.msra.mxu0 0.0
  %1939 = vmatprep.subr.mxu0 0.0
  %1940 = vmatpush2.msra.mxu0 0.0
  %1941 = vmatprep.subr.mxu0 0.0
  %1942 = vmatpush2.msra.mxu0 0.0
  %1943 = vmatprep.subr.mxu0 0.0
  %1944 = vmatpush2.msra.mxu0 0.0
  %1945 = vmatprep.subr.mxu0 0.0
  %1946 = vmatpush2.msra.mxu0 0.0
  %1947 = vmatprep.subr.mxu0 0.0
  %1948 = vmatpush2.msra.mxu0 0.0
  %1949 = vmatprep.subr.mxu0 0.0
  %1950 = vmatpush2.msra.mxu0 0.0
  %1951 = vmatprep.subr.mxu0 0.0
  %1952 = vmatpush2.msra.mxu0 0.0
  %1953 = vmatprep.subr.mxu0 0.0
  %1954 = vmatpush2.msra.mxu0 0.0
  %1955 = vmatprep.subr.mxu0 0.0
  %1956 = vmatpush2.msra.mxu0 0.0
  %1957 = vmatprep.subr.mxu0 0.0
  %1958 = vmatpush2.msra.mxu0 0.0
  %1959 = vmatprep.subr.mxu0 0.0
  %1960 = vmatpush2.msra.mxu0 0.0
  %1961 = vmatprep.subr.mxu0 0.0
  %1962 = vmatpush2.msra.mxu0 0.0
  %1963 = vmatprep.subr.mxu0 0.0
  %1964 = vmatpush2.msra.mxu0 0.0
  %1965 = vmatprep.subr.mxu0 0.0
  %1966 = vmatpush2.msra.mxu0 0.0
  %1967 = vmatprep.subr.mxu0 0.0
  %1968 = vmatpush2.msra.mxu0 0.0
  %1969 = vmatprep.mubr.f32.mxu0 0.0
  %1970 = vmatmul.mubr.f32.gmra.mxu0 %v1739
  %v1971 = vpop.f32.mrf.mxu0
  %v1972 = vadd.f32 0.0, %v1971
  %v1973 = vpop.f32.mrf.mxu0
  %1974 = vdwg.mxu0
  %1975 = vmatprep.subr.mxu0 0.0
  %1976 = vmatpush1.msra.mxu0 %v56
  %1977 = vmatprep.subr.mxu0 0.0
  %1978 = vmatpush1.msra.mxu0 %v55
  %1979 = vmatprep.subr.mxu0 0.0
  %1980 = vmatpush1.msra.mxu0 %v54
  %1981 = vmatprep.subr.mxu0 0.0
  %1982 = vmatpush1.msra.mxu0 %v53
  %1983 = vmatprep.subr.mxu0 0.0
  %1984 = vmatpush1.msra.mxu0 %v52
  %1985 = vmatprep.subr.mxu0 0.0
  %1986 = vmatpush1.msra.mxu0 %v51
  %1987 = vmatprep.subr.mxu0 0.0
  %1988 = vmatpush1.msra.mxu0 %v50
  %1989 = vmatprep.subr.mxu0 0.0
  %1990 = vmatpush1.msra.mxu0 %v49
  %1991 = vmatprep.subr.mxu0 0.0
  %1992 = vmatpush1.msra.mxu0 %v48
  %1993 = vmatprep.subr.mxu0 0.0
  %1994 = vmatpush1.msra.mxu0 %v47
  %1995 = vmatprep.subr.mxu0 0.0
  %1996 = vmatpush1.msra.mxu0 %v46
  %1997 = vmatprep.subr.mxu0 0.0
  %1998 = vmatpush1.msra.mxu0 %v45
  %1999 = vmatprep.subr.mxu0 0.0
  %2000 = vmatpush1.msra.mxu0 %v44
  %2001 = vmatprep.subr.mxu0 0.0
  %2002 = vmatpush1.msra.mxu0 %v43
  %2003 = vmatprep.subr.mxu0 0.0
  %2004 = vmatpush1.msra.mxu0 %v42
  %2005 = vmatprep.subr.mxu0 0.0
  %2006 = vmatpush1.msra.mxu0 %v41
  %2007 = vmatprep.subr.mxu0 0.0
  %2008 = vmatpush2.msra.mxu0 0.0
  %2009 = vmatprep.subr.mxu0 0.0
  %2010 = vmatpush2.msra.mxu0 0.0
  %2011 = vmatprep.subr.mxu0 0.0
  %2012 = vmatpush2.msra.mxu0 0.0
  %2013 = vmatprep.subr.mxu0 0.0
  %2014 = vmatpush2.msra.mxu0 0.0
  %2015 = vmatprep.subr.mxu0 0.0
  %2016 = vmatpush2.msra.mxu0 0.0
  %2017 = vmatprep.subr.mxu0 0.0
  %2018 = vmatpush2.msra.mxu0 0.0
  %2019 = vmatprep.subr.mxu0 0.0
  %2020 = vmatpush2.msra.mxu0 0.0
  %2021 = vmatprep.subr.mxu0 0.0
  %2022 = vmatpush2.msra.mxu0 0.0
  %2023 = vmatprep.subr.mxu0 0.0
  %2024 = vmatpush2.msra.mxu0 0.0
  %2025 = vmatprep.subr.mxu0 0.0
  %2026 = vmatpush2.msra.mxu0 0.0
  %2027 = vmatprep.subr.mxu0 0.0
  %2028 = vmatpush2.msra.mxu0 0.0
  %2029 = vmatprep.subr.mxu0 0.0
  %2030 = vmatpush2.msra.mxu0 0.0
  %2031 = vmatprep.subr.mxu0 0.0
  %2032 = vmatpush2.msra.mxu0 0.0
  %2033 = vmatprep.subr.mxu0 0.0
  %2034 = vmatpush2.msra.mxu0 0.0
  %2035 = vmatprep.subr.mxu0 0.0
  %2036 = vmatpush2.msra.mxu0 0.0
  %2037 = vmatprep.subr.mxu0 0.0
  %2038 = vmatpush2.msra.mxu0 0.0
  %2039 = vmatprep.mubr.f32.mxu0 0.0
  %2040 = vmatmul.mubr.f32.gmra.mxu0 %v1881
  %v2041 = vpop.f32.mrf.mxu0
  %v2042 = vadd.f32 0.0, %v2041
  %v2043 = vpop.f32.mrf.mxu0
  %2044 = vdwg.mxu0
  %v2045 = vmul.f32 %v1972, 0.001953125
  %v2046 = vmul.f32 %v2042, 0.001953125
  %v2047 = vmul.f32 %v2045, %v2045
  %v2048 = vsub.f32 %v2046, %v2047
  %v2049 = vmax.f32 %v2048, 0.0
  %v2050 = vld [vmem:[%s3] sm:$0x1]
  %v2051 = vadd.f32 %v2049, 1e-05
  %v2052 = vrsqrt.pop %v2051
  %v2053 = vmul.f32 %v2050, %v2052
  %v2054 = vld [vmem:[%s4] sm:$0x1]
  %v2055 = vmul.f32 %v2045, %v2053
  %v2056 = vsub.f32 %v2054, %v2055
  %v2058 = vsel %vm855, %v2053, 0
  %2060 = vmatprep.subr.mxu0 0.0
  %2061 = vmatpush1.msra.mxu0 0.0
  %2062 = vmatprep.subr.mxu0 0.0
  %2063 = vmatpush1.msra.mxu0 0.0
  %2064 = vmatprep.subr.mxu0 0.0
  %2065 = vmatpush1.msra.mxu0 0.0
  %2066 = vmatprep.subr.mxu0 0.0
  %2067 = vmatpush1.msra.mxu0 0.0
  %2068 = vmatprep.subr.mxu0 0.0
  %2069 = vmatpush1.msra.mxu0 0.0
  %2070 = vmatprep.subr.mxu0 0.0
  %2071 = vmatpush1.msra.mxu0 0.0
  %2072 = vmatprep.subr.mxu0 0.0
  %2073 = vmatpush1.msra.mxu0 0.0
  %2074 = vmatprep.subr.mxu0 0.0
  %2075 = vmatpush1.msra.mxu0 0.0
  %2076 = vmatprep.subr.mxu0 0.0
  %2077 = vmatpush1.msra.mxu0 0.0
  %2078 = vmatprep.subr.mxu0 0.0
  %2079 = vmatpush1.msra.mxu0 0.0
  %2080 = vmatprep.subr.mxu0 0.0
  %2081 = vmatpush1.msra.mxu0 0.0
  %2082 = vmatprep.subr.mxu0 0.0
  %2083 = vmatpush1.msra.mxu0 0.0
  %2084 = vmatprep.subr.mxu0 0.0
  %2085 = vmatpush1.msra.mxu0 0.0
  %2086 = vmatprep.subr.mxu0 0.0
  %2087 = vmatpush1.msra.mxu0 0.0
  %2088 = vmatprep.subr.mxu0 0.0
  %2089 = vmatpush1.msra.mxu0 0.0
  %2090 = vmatprep.subr.mxu0 0.0
  %2091 = vmatpush1.msra.mxu0 %v57
  %2092 = vmatprep.subr.mxu0 0.0
  %2093 = vmatpush2.msra.mxu0 0.0
  %2094 = vmatprep.subr.mxu0 0.0
  %2095 = vmatpush2.msra.mxu0 0.0
  %2096 = vmatprep.subr.mxu0 0.0
  %2097 = vmatpush2.msra.mxu0 0.0
  %2098 = vmatprep.subr.mxu0 0.0
  %2099 = vmatpush2.msra.mxu0 0.0
  %2100 = vmatprep.subr.mxu0 0.0
  %2101 = vmatpush2.msra.mxu0 0.0
  %2102 = vmatprep.subr.mxu0 0.0
  %2103 = vmatpush2.msra.mxu0 0.0
  %2104 = vmatprep.subr.mxu0 0.0
  %2105 = vmatpush2.msra.mxu0 0.0
  %2106 = vmatprep.subr.mxu0 0.0
  %2107 = vmatpush2.msra.mxu0 0.0
  %2108 = vmatprep.subr.mxu0 0.0
  %2109 = vmatpush2.msra.mxu0 0.0
  %2110 = vmatprep.subr.mxu0 0.0
  %2111 = vmatpush2.msra.mxu0 0.0
  %2112 = vmatprep.subr.mxu0 0.0
  %2113 = vmatpush2.msra.mxu0 0.0
  %2114 = vmatprep.subr.mxu0 0.0
  %2115 = vmatpush2.msra.mxu0 0.0
  %2116 = vmatprep.subr.mxu0 0.0
  %2117 = vmatpush2.msra.mxu0 0.0
  %2118 = vmatprep.subr.mxu0 0.0
  %2119 = vmatpush2.msra.mxu0 0.0
  %2120 = vmatprep.subr.mxu0 0.0
  %2121 = vmatpush2.msra.mxu0 0.0
  %2122 = vmatprep.subr.mxu0 0.0
  %2123 = vmatpush2.msra.mxu0 0.0
  %2124 = vmatprep.mubr.f32.mxu0 0.0
  %2125 = vmatmul.mubr.f32.gmra.mxu0 %v2058
  %v2126 = vpop.f32.mrf.mxu0
  %v2127 = vadd.f32 0.0, %v2126
  %v2128 = vpop.f32.mrf.mxu0
  %2129 = vdwg.mxu0
  %v2131 = vsel %vm855, %v2056, 0
  %2133 = vmatprep.subr.mxu0 0.0
  %2134 = vmatpush1.msra.mxu0 0.0
  %2135 = vmatprep.subr.mxu0 0.0
  %2136 = vmatpush1.msra.mxu0 0.0
  %2137 = vmatprep.subr.mxu0 0.0
  %2138 = vmatpush1.msra.mxu0 0.0
  %2139 = vmatprep.subr.mxu0 0.0
  %2140 = vmatpush1.msra.mxu0 0.0
  %2141 = vmatprep.subr.mxu0 0.0
  %2142 = vmatpush1.msra.mxu0 0.0
  %2143 = vmatprep.subr.mxu0 0.0
  %2144 = vmatpush1.msra.mxu0 0.0
  %2145 = vmatprep.subr.mxu0 0.0
  %2146 = vmatpush1.msra.mxu0 0.0
  %2147 = vmatprep.subr.mxu0 0.0
  %2148 = vmatpush1.msra.mxu0 0.0
  %2149 = vmatprep.subr.mxu0 0.0
  %2150 = vmatpush1.msra.mxu0 0.0
  %2151 = vmatprep.subr.mxu0 0.0
  %2152 = vmatpush1.msra.mxu0 0.0
  %2153 = vmatprep.subr.mxu0 0.0
  %2154 = vmatpush1.msra.mxu0 0.0
  %2155 = vmatprep.subr.mxu0 0.0
  %2156 = vmatpush1.msra.mxu0 0.0
  %2157 = vmatprep.subr.mxu0 0.0
  %2158 = vmatpush1.msra.mxu0 0.0
  %2159 = vmatprep.subr.mxu0 0.0
  %2160 = vmatpush1.msra.mxu0 0.0
  %2161 = vmatprep.subr.mxu0 0.0
  %2162 = vmatpush1.msra.mxu0 0.0
  %2163 = vmatprep.subr.mxu0 0.0
  %2164 = vmatpush1.msra.mxu0 %v57
  %2165 = vmatprep.subr.mxu0 0.0
  %2166 = vmatpush2.msra.mxu0 0.0
  %2167 = vmatprep.subr.mxu0 0.0
  %2168 = vmatpush2.msra.mxu0 0.0
  %2169 = vmatprep.subr.mxu0 0.0
  %2170 = vmatpush2.msra.mxu0 0.0
  %2171 = vmatprep.subr.mxu0 0.0
  %2172 = vmatpush2.msra.mxu0 0.0
  %2173 = vmatprep.subr.mxu0 0.0
  %2174 = vmatpush2.msra.mxu0 0.0
  %2175 = vmatprep.subr.mxu0 0.0
  %2176 = vmatpush2.msra.mxu0 0.0
  %2177 = vmatprep.subr.mxu0 0.0
  %2178 = vmatpush2.msra.mxu0 0.0
  %2179 = vmatprep.subr.mxu0 0.0
  %2180 = vmatpush2.msra.mxu0 0.0
  %2181 = vmatprep.subr.mxu0 0.0
  %2182 = vmatpush2.msra.mxu0 0.0
  %2183 = vmatprep.subr.mxu0 0.0
  %2184 = vmatpush2.msra.mxu0 0.0
  %2185 = vmatprep.subr.mxu0 0.0
  %2186 = vmatpush2.msra.mxu0 0.0
  %2187 = vmatprep.subr.mxu0 0.0
  %2188 = vmatpush2.msra.mxu0 0.0
  %2189 = vmatprep.subr.mxu0 0.0
  %2190 = vmatpush2.msra.mxu0 0.0
  %2191 = vmatprep.subr.mxu0 0.0
  %2192 = vmatpush2.msra.mxu0 0.0
  %2193 = vmatprep.subr.mxu0 0.0
  %2194 = vmatpush2.msra.mxu0 0.0
  %2195 = vmatprep.subr.mxu0 0.0
  %2196 = vmatpush2.msra.mxu0 0.0
  %2197 = vmatprep.mubr.f32.mxu0 0.0
  %2198 = vmatmul.mubr.f32.gmra.mxu0 %v2131
  %v2199 = vpop.f32.mrf.mxu0
  %v2200 = vadd.f32 0.0, %v2199
  %v2201 = vpop.f32.mrf.mxu0
  %2202 = vdwg.mxu0
  %v2203 = vld [vmem:[#allocation3] sm:$0xfe]
  %v2204 = vld [vmem:[#allocation3 + $0x8] sm:$0xfe]
  %v2205 = vld [vmem:[#allocation3 + $0x10] sm:$0xff]
  %v2206 = vld [vmem:[#allocation3 + $0x18] sm:$0xff]
  %v2207 = vld [vmem:[#allocation3 + $0x20] sm:$0x1]
  %v2208 = vld [vmem:[#allocation3 + $0x28] sm:$0x1]
  %v2209 = vld [vmem:[#allocation3 + $0x30] sm:$0xfe]
  %v2210 = vld [vmem:[#allocation3 + $0x38] sm:$0xfe]
  %v2211 = vld [vmem:[#allocation3 + $0x40] sm:$0xff]
  %v2212 = vld [vmem:[#allocation3 + $0x48] sm:$0xff]
  %v2213 = vld [vmem:[#allocation3 + $0x50] sm:$0x1]
  %v2214 = vld [vmem:[#allocation3 + $0x58] sm:$0x1]
  %v2215 = vlaneseq
  %v2216 = vshrl.u32 %v2215, 7
  %v2217 = vsub.s32 0, %v2216
  %v2218 = vrot.slane %v2127, %v2217
  %2220 = vrot.lane.b32.xlu0 %v2218, 8
  %v2221 = vpop.permute.xlu0 %2220
  %v2223 = vmul.f32 %v2203, %v2221
  %v2224 = vmul.f32 %v2204, %v2221
  %v2225 = vmul.f32 %v2205, %v2221
  %v2226 = vmul.f32 %v2206, %v2221
  %v2227 = vmul.f32 %v2207, %v2221
  %v2228 = vmul.f32 %v2208, %v2221
  %v2229 = vmul.f32 %v2209, %v2221
  %v2230 = vmul.f32 %v2210, %v2221
  %v2231 = vmul.f32 %v2211, %v2221
  %v2232 = vmul.f32 %v2212, %v2221
  %v2233 = vmul.f32 %v2213, %v2221
  %v2234 = vmul.f32 %v2214, %v2221
  %v2235 = vlaneseq
  %v2236 = vshrl.u32 %v2235, 7
  %v2237 = vsub.s32 0, %v2236
  %v2238 = vrot.slane %v2200, %v2237
  %2240 = vrot.lane.b32.xlu0 %v2238, 8
  %v2241 = vpop.permute.xlu0 %2240
  %v2243 = vadd.f32 %v2223, %v2241
  %v2244 = vadd.f32 %v2224, %v2241
  %v2245 = vadd.f32 %v2225, %v2241
  %v2246 = vadd.f32 %v2226, %v2241
  %v2247 = vadd.f32 %v2227, %v2241
  %v2248 = vadd.f32 %v2228, %v2241
  %v2249 = vadd.f32 %v2229, %v2241
  %v2250 = vadd.f32 %v2230, %v2241
  %v2251 = vadd.f32 %v2231, %v2241
  %v2252 = vadd.f32 %v2232, %v2241
  %v2253 = vadd.f32 %v2233, %v2241
  %v2254 = vadd.f32 %v2234, %v2241
  %v2255 = vmax.f32 %v2243, 0.0
  %v2256 = vmax.f32 %v2244, 0.0
  %v2257 = vmax.f32 %v2245, 0.0
  %v2258 = vmax.f32 %v2246, 0.0
  %v2259 = vmax.f32 %v2247, 0.0
  %v2260 = vmax.f32 %v2248, 0.0
  %v2261 = vmax.f32 %v2249, 0.0
  %v2262 = vmax.f32 %v2250, 0.0
  %v2263 = vmax.f32 %v2251, 0.0
  %v2264 = vmax.f32 %v2252, 0.0
  %v2265 = vmax.f32 %v2253, 0.0
  %v2266 = vmax.f32 %v2254, 0.0
  %2267 = vst.msk [vmem:[#allocation3] sm:$0xfe] %vm849, %v2255
  %2268 = vst.msk [vmem:[#allocation3 + $0x8] sm:$0xfe] %vm851, %v2256
  %2269 = vst.msk [vmem:[#allocation3 + $0x10] sm:$0xff] %vm853, %v2257
  %2270 = vst.msk [vmem:[#allocation3 + $0x18] sm:$0xff] %vm855, %v2258
  %2271 = vst.msk [vmem:[#allocation3 + $0x20] sm:$0x1] %vm857, %v2259
  %2272 = vst.msk [vmem:[#allocation3 + $0x28] sm:$0x1] %vm859, %v2260
  %2273 = vst.msk [vmem:[#allocation3 + $0x30] sm:$0xfe] %vm849, %v2261
  %2274 = vst.msk [vmem:[#allocation3 + $0x38] sm:$0xfe] %vm851, %v2262
  %2275 = vst.msk [vmem:[#allocation3 + $0x40] sm:$0xff] %vm853, %v2263
  %2276 = vst.msk [vmem:[#allocation3 + $0x48] sm:$0xff] %vm855, %v2264
  %2277 = vst.msk [vmem:[#allocation3 + $0x50] sm:$0x1] %vm857, %v2265
  %2278 = vst.msk [vmem:[#allocation3 + $0x58] sm:$0x1] %vm859, %v2266
  %v2279 = vld [vmem:[#allocation3] sm:$0xff]
  %v2280 = vld [vmem:[#allocation3 + $0x10] sm:$0xff]
  %v2281 = vpack.c.bf16 %v2280, %v2279
  %v2282 = vld [vmem:[%s5] sm:$0xf]
  %v2283 = vld [vmem:[%s5 + $0x4] sm:$0xf]
  %v2284 = vld [vmem:[%s5 + $0x8] sm:$0xf]
  %v2285 = vld [vmem:[%s5 + $0xc] sm:$0xf]
  %v2286 = vld [vmem:[%s5 + $0x10] sm:$0xf]
  %v2287 = vld [vmem:[%s5 + $0x14] sm:$0xf]
  %v2288 = vld [vmem:[%s5 + $0x18] sm:$0xf]
  %v2289 = vld [vmem:[%s5 + $0x1c] sm:$0xf]
  %v2290 = vld [vmem:[%s5 + $0x20] sm:$0xf]
  %v2291 = vld [vmem:[%s5 + $0x24] sm:$0xf]
  %v2292 = vld [vmem:[%s5 + $0x28] sm:$0xf]
  %v2293 = vld [vmem:[%s5 + $0x2c] sm:$0xf]
  %v2294 = vld [vmem:[%s5 + $0x30] sm:$0xf]
  %v2295 = vld [vmem:[%s5 + $0x34] sm:$0xf]
  %v2296 = vld [vmem:[%s5 + $0x38] sm:$0xf]
  %v2297 = vld [vmem:[%s5 + $0x3c] sm:$0xf]
  %v2298 = vld [vmem:[#allocation3 + $0x8] sm:$0xff]
  %v2299 = vld [vmem:[#allocation3 + $0x18] sm:$0xff]
  %v2300 = vpack.c.bf16 %v2299, %v2298
  %s2301 = scalar_lea.vmem %s5, 64
  %v2302 = vld [vmem:[%s2301] sm:$0xf]
  %v2303 = vld [vmem:[%s2301 + $0x4] sm:$0xf]
  %v2304 = vld [vmem:[%s2301 + $0x8] sm:$0xf]
  %v2305 = vld [vmem:[%s2301 + $0xc] sm:$0xf]
  %v2306 = vld [vmem:[%s2301 + $0x10] sm:$0xf]
  %v2307 = vld [vmem:[%s2301 + $0x14] sm:$0xf]
  %v2308 = vld [vmem:[%s2301 + $0x18] sm:$0xf]
  %v2309 = vld [vmem:[%s2301 + $0x1c] sm:$0xf]
  %v2310 = vld [vmem:[%s2301 + $0x20] sm:$0xf]
  %v2311 = vld [vmem:[%s2301 + $0x24] sm:$0xf]
  %v2312 = vld [vmem:[%s2301 + $0x28] sm:$0xf]
  %v2313 = vld [vmem:[%s2301 + $0x2c] sm:$0xf]
  %v2314 = vld [vmem:[%s2301 + $0x30] sm:$0xf]
  %v2315 = vld [vmem:[%s2301 + $0x34] sm:$0xf]
  %v2316 = vld [vmem:[%s2301 + $0x38] sm:$0xf]
  %v2317 = vld [vmem:[%s2301 + $0x3c] sm:$0xf]
  %2320 = vrot.lane.b32.xlu0 %v2281, 120
  %v2321 = vpop.permute.xlu0 %2320
  %2322 = vrot.lane.b32.xlu0 %v2300, 120
  %v2323 = vpop.permute.xlu0 %2322
  %vm2324 = vcmask 982016
  %v2325 = vsel %vm2324, %v2321, %v2323
  %v2343 = vunpack.c.l.b16 %v2302
  %v2344 = vunpack.c.l.b16 %v2303
  %v2345 = vunpack.c.l.b16 %v2304
  %v2346 = vunpack.c.l.b16 %v2305
  %v2347 = vunpack.c.l.b16 %v2306
  %v2348 = vunpack.c.l.b16 %v2307
  %v2349 = vunpack.c.l.b16 %v2308
  %v2350 = vunpack.c.l.b16 %v2309
  %v2351 = vunpack.c.l.b16 %v2310
  %v2352 = vunpack.c.l.b16 %v2311
  %v2353 = vunpack.c.l.b16 %v2312
  %v2354 = vunpack.c.l.b16 %v2313
  %v2355 = vunpack.c.l.b16 %v2314
  %v2356 = vunpack.c.l.b16 %v2315
  %v2357 = vunpack.c.l.b16 %v2316
  %v2358 = vunpack.c.l.b16 %v2317
  %v2359 = vpack.c.b16 %v2344, %v2343
  %v2360 = vpack.c.b16 %v2346, %v2345
  %v2361 = vpack.c.b16 %v2348, %v2347
  %v2362 = vpack.c.b16 %v2350, %v2349
  %v2363 = vpack.c.b16 %v2352, %v2351
  %v2364 = vpack.c.b16 %v2354, %v2353
  %v2365 = vpack.c.b16 %v2356, %v2355
  %v2366 = vpack.c.b16 %v2358, %v2357
  %2375 = vmatprep.subr.bf16.mxu0 0
  %2376 = vmatpush1.bf16.msra.mxu0 %v2366
  %2377 = vmatprep.subr.bf16.mxu0 0
  %2378 = vmatpush1.bf16.msra.mxu0 %v2365
  %2379 = vmatprep.subr.bf16.mxu0 0
  %2380 = vmatpush1.bf16.msra.mxu0 %v2364
  %2381 = vmatprep.subr.bf16.mxu0 0
  %2382 = vmatpush1.bf16.msra.mxu0 %v2363
  %2383 = vmatprep.subr.bf16.mxu0 0
  %2384 = vmatpush1.bf16.msra.mxu0 %v2362
  %2385 = vmatprep.subr.bf16.mxu0 0
  %2386 = vmatpush1.bf16.msra.mxu0 %v2361
  %2387 = vmatprep.subr.bf16.mxu0 0
  %2388 = vmatpush1.bf16.msra.mxu0 %v2360
  %2389 = vmatprep.subr.bf16.mxu0 0
  %2390 = vmatpush1.bf16.msra.mxu0 %v2359
  %2391 = vmatprep.subr.bf16.mxu0 0
  %2392 = vmatpush2.bf16.msra.mxu0 0
  %2393 = vmatprep.subr.bf16.mxu0 0
  %2394 = vmatpush2.bf16.msra.mxu0 0
  %2395 = vmatprep.subr.bf16.mxu0 0
  %2396 = vmatpush2.bf16.msra.mxu0 0
  %2397 = vmatprep.subr.bf16.mxu0 0
  %2398 = vmatpush2.bf16.msra.mxu0 0
  %2399 = vmatprep.subr.bf16.mxu0 0
  %2400 = vmatpush2.bf16.msra.mxu0 0
  %2401 = vmatprep.subr.bf16.mxu0 0
  %2402 = vmatpush2.bf16.msra.mxu0 0
  %2403 = vmatprep.subr.bf16.mxu0 0
  %2404 = vmatpush2.bf16.msra.mxu0 0
  %2405 = vmatprep.subr.bf16.mxu0 0
  %2406 = vmatpush2.bf16.msra.mxu0 0
  %2407 = vmatprep.mubr.bf16.mxu0 0
  %2408 = vmatmul.mubr.bf16.gmra.mxu0 %v2325
  %v2409 = vpop.f32.mrf.mxu0
  %v2410 = vadd.f32 0.0, %v2409
  %v2411 = vpop.f32.mrf.mxu0
  %v2412 = vpop.f32.mrf.mxu0
  %v2413 = vadd.f32 0.0, %v2412
  %v2414 = vpop.f32.mrf.mxu0
  %2415 = vdwg.mxu0
  %v2432 = vunpack.c.l.b16 %v2282
  %v2433 = vunpack.c.l.b16 %v2283
  %v2434 = vunpack.c.l.b16 %v2284
  %v2435 = vunpack.c.l.b16 %v2285
  %v2436 = vunpack.c.l.b16 %v2286
  %v2437 = vunpack.c.l.b16 %v2287
  %v2438 = vunpack.c.l.b16 %v2288
  %v2439 = vunpack.c.l.b16 %v2289
  %v2440 = vunpack.c.l.b16 %v2290
  %v2441 = vunpack.c.l.b16 %v2291
  %v2442 = vunpack.c.l.b16 %v2292
  %v2443 = vunpack.c.l.b16 %v2293
  %v2444 = vunpack.c.l.b16 %v2294
  %v2445 = vunpack.c.l.b16 %v2295
  %v2446 = vunpack.c.l.b16 %v2296
  %v2447 = vunpack.c.l.b16 %v2297
  %v2448 = vpack.c.b16 %v2433, %v2432
  %v2449 = vpack.c.b16 %v2435, %v2434
  %v2450 = vpack.c.b16 %v2437, %v2436
  %v2451 = vpack.c.b16 %v2439, %v2438
  %v2452 = vpack.c.b16 %v2441, %v2440
  %v2453 = vpack.c.b16 %v2443, %v2442
  %v2454 = vpack.c.b16 %v2445, %v2444
  %v2455 = vpack.c.b16 %v2447, %v2446
  %2464 = vmatprep.subr.bf16.mxu0 0
  %2465 = vmatpush1.bf16.msra.mxu0 %v2455
  %2466 = vmatprep.subr.bf16.mxu0 0
  %2467 = vmatpush1.bf16.msra.mxu0 %v2454
  %2468 = vmatprep.subr.bf16.mxu0 0
  %2469 = vmatpush1.bf16.msra.mxu0 %v2453
  %2470 = vmatprep.subr.bf16.mxu0 0
  %2471 = vmatpush1.bf16.msra.mxu0 %v2452
  %2472 = vmatprep.subr.bf16.mxu0 0
  %2473 = vmatpush1.bf16.msra.mxu0 %v2451
  %2474 = vmatprep.subr.bf16.mxu0 0
  %2475 = vmatpush1.bf16.msra.mxu0 %v2450
  %2476 = vmatprep.subr.bf16.mxu0 0
  %2477 = vmatpush1.bf16.msra.mxu0 %v2449
  %2478 = vmatprep.subr.bf16.mxu0 0
  %2479 = vmatpush1.bf16.msra.mxu0 %v2448
  %2480 = vmatprep.subr.bf16.mxu0 0
  %2481 = vmatpush2.bf16.msra.mxu0 0
  %2482 = vmatprep.subr.bf16.mxu0 0
  %2483 = vmatpush2.bf16.msra.mxu0 0
  %2484 = vmatprep.subr.bf16.mxu0 0
  %2485 = vmatpush2.bf16.msra.mxu0 0
  %2486 = vmatprep.subr.bf16.mxu0 0
  %2487 = vmatpush2.bf16.msra.mxu0 0
  %2488 = vmatprep.subr.bf16.mxu0 0
  %2489 = vmatpush2.bf16.msra.mxu0 0
  %2490 = vmatprep.subr.bf16.mxu0 0
  %2491 = vmatpush2.bf16.msra.mxu0 0
  %2492 = vmatprep.subr.bf16.mxu0 0
  %2493 = vmatpush2.bf16.msra.mxu0 0
  %2494 = vmatprep.subr.bf16.mxu0 0
  %2495 = vmatpush2.bf16.msra.mxu0 0
  %2496 = vmatprep.mubr.bf16.mxu0 0
  %2497 = vmatmul.mubr.bf16.gmra.mxu0 %v2281
  %v2498 = vpop.f32.mrf.mxu0
  %v2499 = vadd.f32 %v2410, %v2498
  %v2500 = vpop.f32.mrf.mxu0
  %v2501 = vpop.f32.mrf.mxu0
  %v2502 = vadd.f32 %v2413, %v2501
  %v2503 = vpop.f32.mrf.mxu0
  %2504 = vdwg.mxu0
  %s2505 = scalar_lea.vmem %s5, 128
  %v2506 = vld [vmem:[%s2505] sm:$0xf]
  %v2507 = vld [vmem:[%s2505 + $0x4] sm:$0xf]
  %v2508 = vld [vmem:[%s2505 + $0x8] sm:$0xf]
  %v2509 = vld [vmem:[%s2505 + $0xc] sm:$0xf]
  %v2510 = vld [vmem:[%s2505 + $0x10] sm:$0xf]
  %v2511 = vld [vmem:[%s2505 + $0x14] sm:$0xf]
  %v2512 = vld [vmem:[%s2505 + $0x18] sm:$0xf]
  %v2513 = vld [vmem:[%s2505 + $0x1c] sm:$0xf]
  %v2514 = vld [vmem:[%s2505 + $0x20] sm:$0xf]
  %v2515 = vld [vmem:[%s2505 + $0x24] sm:$0xf]
  %v2516 = vld [vmem:[%s2505 + $0x28] sm:$0xf]
  %v2517 = vld [vmem:[%s2505 + $0x2c] sm:$0xf]
  %v2518 = vld [vmem:[%s2505 + $0x30] sm:$0xf]
  %v2519 = vld [vmem:[%s2505 + $0x34] sm:$0xf]
  %v2520 = vld [vmem:[%s2505 + $0x38] sm:$0xf]
  %v2521 = vld [vmem:[%s2505 + $0x3c] sm:$0xf]
  %2522 = vrot.lane.b32.xlu0 %v2281, 112
  %v2523 = vpop.permute.xlu0 %2522
  %2524 = vrot.lane.b32.xlu0 %v2300, 112
  %v2525 = vpop.permute.xlu0 %2524
  %vm2526 = vcmask 916480
  %v2527 = vsel %vm2526, %v2523, %v2525
  %v2545 = vunpack.c.l.b16 %v2506
  %v2546 = vunpack.c.l.b16 %v2507
  %v2547 = vunpack.c.l.b16 %v2508
  %v2548 = vunpack.c.l.b16 %v2509
  %v2549 = vunpack.c.l.b16 %v2510
  %v2550 = vunpack.c.l.b16 %v2511
  %v2551 = vunpack.c.l.b16 %v2512
  %v2552 = vunpack.c.l.b16 %v2513
  %v2553 = vunpack.c.l.b16 %v2514
  %v2554 = vunpack.c.l.b16 %v2515
  %v2555 = vunpack.c.l.b16 %v2516
  %v2556 = vunpack.c.l.b16 %v2517
  %v2557 = vunpack.c.l.b16 %v2518
  %v2558 = vunpack.c.l.b16 %v2519
  %v2559 = vunpack.c.l.b16 %v2520
  %v2560 = vunpack.c.l.b16 %v2521
  %v2561 = vpack.c.b16 %v2546, %v2545
  %v2562 = vpack.c.b16 %v2548, %v2547
  %v2563 = vpack.c.b16 %v2550, %v2549
  %v2564 = vpack.c.b16 %v2552, %v2551
  %v2565 = vpack.c.b16 %v2554, %v2553
  %v2566 = vpack.c.b16 %v2556, %v2555
  %v2567 = vpack.c.b16 %v2558, %v2557
  %v2568 = vpack.c.b16 %v2560, %v2559
  %2577 = vmatprep.subr.bf16.mxu0 0
  %2578 = vmatpush1.bf16.msra.mxu0 %v2568
  %2579 = vmatprep.subr.bf16.mxu0 0
  %2580 = vmatpush1.bf16.msra.mxu0 %v2567
  %2581 = vmatprep.subr.bf16.mxu0 0
  %2582 = vmatpush1.bf16.msra.mxu0 %v2566
  %2583 = vmatprep.subr.bf16.mxu0 0
  %2584 = vmatpush1.bf16.msra.mxu0 %v2565
  %2585 = vmatprep.subr.bf16.mxu0 0
  %2586 = vmatpush1.bf16.msra.mxu0 %v2564
  %2587 = vmatprep.subr.bf16.mxu0 0
  %2588 = vmatpush1.bf16.msra.mxu0 %v2563
  %2589 = vmatprep.subr.bf16.mxu0 0
  %2590 = vmatpush1.bf16.msra.mxu0 %v2562
  %2591 = vmatprep.subr.bf16.mxu0 0
  %2592 = vmatpush1.bf16.msra.mxu0 %v2561
  %2593 = vmatprep.subr.bf16.mxu0 0
  %2594 = vmatpush2.bf16.msra.mxu0 0
  %2595 = vmatprep.subr.bf16.mxu0 0
  %2596 = vmatpush2.bf16.msra.mxu0 0
  %2597 = vmatprep.subr.bf16.mxu0 0
  %2598 = vmatpush2.bf16.msra.mxu0 0
  %2599 = vmatprep.subr.bf16.mxu0 0
  %2600 = vmatpush2.bf16.msra.mxu0 0
  %2601 = vmatprep.subr.bf16.mxu0 0
  %2602 = vmatpush2.bf16.msra.mxu0 0
  %2603 = vmatprep.subr.bf16.mxu0 0
  %2604 = vmatpush2.bf16.msra.mxu0 0
  %2605 = vmatprep.subr.bf16.mxu0 0
  %2606 = vmatpush2.bf16.msra.mxu0 0
  %2607 = vmatprep.subr.bf16.mxu0 0
  %2608 = vmatpush2.bf16.msra.mxu0 0
  %2609 = vmatprep.mubr.bf16.mxu0 0
  %2610 = vmatmul.mubr.bf16.gmra.mxu0 %v2527
  %v2611 = vpop.f32.mrf.mxu0
  %v2612 = vadd.f32 0.0, %v2611
  %v2613 = vpop.f32.mrf.mxu0
  %v2614 = vpop.f32.mrf.mxu0
  %v2615 = vadd.f32 0.0, %v2614
  %v2616 = vpop.f32.mrf.mxu0
  %2617 = vdwg.mxu0
  %v2618 = vadd.f32 %v2499, %v2612
  %v2619 = vadd.f32 %v2502, %v2615
  %v2620 = vld [vmem:[#allocation3] sm:$0xfe]
  %v2621 = vld [vmem:[#allocation3 + $0x10] sm:$0xff]
  %v2622 = vld [vmem:[#allocation3 + $0x20] sm:$0x1]
  %v2623 = vpack.c.bf16 %v2621, %v2620
  %v2624 = vpack.c.bf16 %v2622, %v2622
  %s2625 = scalar_lea.vmem %s5, 192
  %v2626 = vld [vmem:[%s2625] sm:$0xf]
  %v2627 = vld [vmem:[%s2625 + $0x4] sm:$0xf]
  %v2628 = vld [vmem:[%s2625 + $0x8] sm:$0xf]
  %v2629 = vld [vmem:[%s2625 + $0xc] sm:$0xf]
  %v2630 = vld [vmem:[%s2625 + $0x10] sm:$0xf]
  %v2631 = vld [vmem:[%s2625 + $0x14] sm:$0xf]
  %v2632 = vld [vmem:[%s2625 + $0x18] sm:$0xf]
  %v2633 = vld [vmem:[%s2625 + $0x1c] sm:$0xf]
  %v2634 = vld [vmem:[%s2625 + $0x20] sm:$0xf]
  %v2635 = vld [vmem:[%s2625 + $0x24] sm:$0xf]
  %v2636 = vld [vmem:[%s2625 + $0x28] sm:$0xf]
  %v2637 = vld [vmem:[%s2625 + $0x2c] sm:$0xf]
  %v2638 = vld [vmem:[%s2625 + $0x30] sm:$0xf]
  %v2639 = vld [vmem:[%s2625 + $0x34] sm:$0xf]
  %v2640 = vld [vmem:[%s2625 + $0x38] sm:$0xf]
  %v2641 = vld [vmem:[%s2625 + $0x3c] sm:$0xf]
  %vm2642 = vsmask.f32 7424
  %v2644 = vshrl.u32 %v2623, 16
  %v2646 = vshll.u32 %v2623, 16
  %v2648 = vrot.slane %v2646, 1
  %v2649 = vor.u32 %v2644, %v2648
  %v2651 = vshll.u32 %v2624, 16
  %v2653 = vrot.slane %v2651, 1
  %v2654 = vsel %vm2642, %v2649, %v2653
  %v2672 = vunpack.c.l.b16 %v2626
  %v2673 = vunpack.c.l.b16 %v2627
  %v2674 = vunpack.c.l.b16 %v2628
  %v2675 = vunpack.c.l.b16 %v2629
  %v2676 = vunpack.c.l.b16 %v2630
  %v2677 = vunpack.c.l.b16 %v2631
  %v2678 = vunpack.c.l.b16 %v2632
  %v2679 = vunpack.c.l.b16 %v2633
  %v2680 = vunpack.c.l.b16 %v2634
  %v2681 = vunpack.c.l.b16 %v2635
  %v2682 = vunpack.c.l.b16 %v2636
  %v2683 = vunpack.c.l.b16 %v2637
  %v2684 = vunpack.c.l.b16 %v2638
  %v2685 = vunpack.c.l.b16 %v2639
  %v2686 = vunpack.c.l.b16 %v2640
  %v2687 = vunpack.c.l.b16 %v2641
  %v2688 = vpack.c.b16 %v2673, %v2672
  %v2689 = vpack.c.b16 %v2675, %v2674
  %v2690 = vpack.c.b16 %v2677, %v2676
  %v2691 = vpack.c.b16 %v2679, %v2678
  %v2692 = vpack.c.b16 %v2681, %v2680
  %v2693 = vpack.c.b16 %v2683, %v2682
  %v2694 = vpack.c.b16 %v2685, %v2684
  %v2695 = vpack.c.b16 %v2687, %v2686
  %2704 = vmatprep.subr.bf16.mxu0 0
  %2705 = vmatpush1.bf16.msra.mxu0 %v2695
  %2706 = vmatprep.subr.bf16.mxu0 0
  %2707 = vmatpush1.bf16.msra.mxu0 %v2694
  %2708 = vmatprep.subr.bf16.mxu0 0
  %2709 = vmatpush1.bf16.msra.mxu0 %v2693
  %2710 = vmatprep.subr.bf16.mxu0 0
  %2711 = vmatpush1.bf16.msra.mxu0 %v2692
  %2712 = vmatprep.subr.bf16.mxu0 0
  %2713 = vmatpush1.bf16.msra.mxu0 %v2691
  %2714 = vmatprep.subr.bf16.mxu0 0
  %2715 = vmatpush1.bf16.msra.mxu0 %v2690
  %2716 = vmatprep.subr.bf16.mxu0 0
  %2717 = vmatpush1.bf16.msra.mxu0 %v2689
  %2718 = vmatprep.subr.bf16.mxu0 0
  %2719 = vmatpush1.bf16.msra.mxu0 %v2688
  %2720 = vmatprep.subr.bf16.mxu0 0
  %2721 = vmatpush2.bf16.msra.mxu0 0
  %2722 = vmatprep.subr.bf16.mxu0 0
  %2723 = vmatpush2.bf16.msra.mxu0 0
  %2724 = vmatprep.subr.bf16.mxu0 0
  %2725 = vmatpush2.bf16.msra.mxu0 0
  %2726 = vmatprep.subr.bf16.mxu0 0
  %2727 = vmatpush2.bf16.msra.mxu0 0
  %2728 = vmatprep.subr.bf16.mxu0 0
  %2729 = vmatpush2.bf16.msra.mxu0 0
  %2730 = vmatprep.subr.bf16.mxu0 0
  %2731 = vmatpush2.bf16.msra.mxu0 0
  %2732 = vmatprep.subr.bf16.mxu0 0
  %2733 = vmatpush2.bf16.msra.mxu0 0
  %2734 = vmatprep.subr.bf16.mxu0 0
  %2735 = vmatpush2.bf16.msra.mxu0 0
  %2736 = vmatprep.mubr.bf16.mxu0 0
  %2737 = vmatmul.mubr.bf16.gmra.mxu0 %v2654
  %v2738 = vpop.f32.mrf.mxu0
  %v2739 = vadd.f32 0.0, %v2738
  %v2740 = vpop.f32.mrf.mxu0
  %v2741 = vpop.f32.mrf.mxu0
  %v2742 = vadd.f32 0.0, %v2741
  %v2743 = vpop.f32.mrf.mxu0
  %2744 = vdwg.mxu0
  %v2745 = vadd.f32 %v2618, %v2739
  %v2746 = vadd.f32 %v2619, %v2742
  %v2747 = vld [vmem:[#allocation3] sm:$0xfe]
  %v2748 = vld [vmem:[#allocation3 + $0x8] sm:$0xfe]
  %v2749 = vld [vmem:[#allocation3 + $0x10] sm:$0xff]
  %v2750 = vld [vmem:[#allocation3 + $0x18] sm:$0xff]
  %v2751 = vld [vmem:[#allocation3 + $0x20] sm:$0x1]
  %v2752 = vld [vmem:[#allocation3 + $0x28] sm:$0x1]
  %v2753 = vpack.c.bf16 %v2749, %v2747
  %v2754 = vpack.c.bf16 %v2750, %v2748
  %v2755 = vpack.c.bf16 %v2751, %v2751
  %v2756 = vpack.c.bf16 %v2752, %v2752
  %s2757 = scalar_lea.vmem %s5, 256
  %v2758 = vld [vmem:[%s2757] sm:$0xf]
  %v2759 = vld [vmem:[%s2757 + $0x4] sm:$0xf]
  %v2760 = vld [vmem:[%s2757 + $0x8] sm:$0xf]
  %v2761 = vld [vmem:[%s2757 + $0xc] sm:$0xf]
  %v2762 = vld [vmem:[%s2757 + $0x10] sm:$0xf]
  %v2763 = vld [vmem:[%s2757 + $0x14] sm:$0xf]
  %v2764 = vld [vmem:[%s2757 + $0x18] sm:$0xf]
  %v2765 = vld [vmem:[%s2757 + $0x1c] sm:$0xf]
  %v2766 = vld [vmem:[%s2757 + $0x20] sm:$0xf]
  %v2767 = vld [vmem:[%s2757 + $0x24] sm:$0xf]
  %v2768 = vld [vmem:[%s2757 + $0x28] sm:$0xf]
  %v2769 = vld [vmem:[%s2757 + $0x2c] sm:$0xf]
  %v2770 = vld [vmem:[%s2757 + $0x30] sm:$0xf]
  %v2771 = vld [vmem:[%s2757 + $0x34] sm:$0xf]
  %v2772 = vld [vmem:[%s2757 + $0x38] sm:$0xf]
  %v2773 = vld [vmem:[%s2757 + $0x3c] sm:$0xf]
  %v2775 = vshrl.u32 %v2753, 16
  %v2777 = vshll.u32 %v2753, 16
  %v2779 = vrot.slane %v2777, 1
  %v2780 = vor.u32 %v2775, %v2779
  %v2782 = vshll.u32 %v2755, 16
  %v2784 = vrot.slane %v2782, 1
  %v2785 = vsel %vm2642, %v2780, %v2784
  %v2787 = vshrl.u32 %v2754, 16
  %v2789 = vshll.u32 %v2754, 16
  %v2791 = vrot.slane %v2789, 1
  %v2792 = vor.u32 %v2787, %v2791
  %v2794 = vshll.u32 %v2756, 16
  %v2796 = vrot.slane %v2794, 1
  %v2797 = vsel %vm2642, %v2792, %v2796
  %2798 = vrot.lane.b32.xlu0 %v2785, 120
  %v2799 = vpop.permute.xlu0 %2798
  %2800 = vrot.lane.b32.xlu0 %v2797, 120
  %v2801 = vpop.permute.xlu0 %2800
  %v2802 = vsel %vm2324, %v2799, %v2801
  %v2820 = vunpack.c.l.b16 %v2758
  %v2821 = vunpack.c.l.b16 %v2759
  %v2822 = vunpack.c.l.b16 %v2760
  %v2823 = vunpack.c.l.b16 %v2761
  %v2824 = vunpack.c.l.b16 %v2762
  %v2825 = vunpack.c.l.b16 %v2763
  %v2826 = vunpack.c.l.b16 %v2764
  %v2827 = vunpack.c.l.b16 %v2765
  %v2828 = vunpack.c.l.b16 %v2766
  %v2829 = vunpack.c.l.b16 %v2767
  %v2830 = vunpack.c.l.b16 %v2768
  %v2831 = vunpack.c.l.b16 %v2769
  %v2832 = vunpack.c.l.b16 %v2770
  %v2833 = vunpack.c.l.b16 %v2771
  %v2834 = vunpack.c.l.b16 %v2772
  %v2835 = vunpack.c.l.b16 %v2773
  %v2836 = vpack.c.b16 %v2821, %v2820
  %v2837 = vpack.c.b16 %v2823, %v2822
  %v2838 = vpack.c.b16 %v2825, %v2824
  %v2839 = vpack.c.b16 %v2827, %v2826
  %v2840 = vpack.c.b16 %v2829, %v2828
  %v2841 = vpack.c.b16 %v2831, %v2830
  %v2842 = vpack.c.b16 %v2833, %v2832
  %v2843 = vpack.c.b16 %v2835, %v2834
  %2852 = vmatprep.subr.bf16.mxu0 0
  %2853 = vmatpush1.bf16.msra.mxu0 %v2843
  %2854 = vmatprep.subr.bf16.mxu0 0
  %2855 = vmatpush1.bf16.msra.mxu0 %v2842
  %2856 = vmatprep.subr.bf16.mxu0 0
  %2857 = vmatpush1.bf16.msra.mxu0 %v2841
  %2858 = vmatprep.subr.bf16.mxu0 0
  %2859 = vmatpush1.bf16.msra.mxu0 %v2840
  %2860 = vmatprep.subr.bf16.mxu0 0
  %2861 = vmatpush1.bf16.msra.mxu0 %v2839
  %2862 = vmatprep.subr.bf16.mxu0 0
  %2863 = vmatpush1.bf16.msra.mxu0 %v2838
  %2864 = vmatprep.subr.bf16.mxu0 0
  %2865 = vmatpush1.bf16.msra.mxu0 %v2837
  %2866 = vmatprep.subr.bf16.mxu0 0
  %2867 = vmatpush1.bf16.msra.mxu0 %v2836
  %2868 = vmatprep.subr.bf16.mxu0 0
  %2869 = vmatpush2.bf16.msra.mxu0 0
  %2870 = vmatprep.subr.bf16.mxu0 0
  %2871 = vmatpush2.bf16.msra.mxu0 0
  %2872 = vmatprep.subr.bf16.mxu0 0
  %2873 = vmatpush2.bf16.msra.mxu0 0
  %2874 = vmatprep.subr.bf16.mxu0 0
  %2875 = vmatpush2.bf16.msra.mxu0 0
  %2876 = vmatprep.subr.bf16.mxu0 0
  %2877 = vmatpush2.bf16.msra.mxu0 0
  %2878 = vmatprep.subr.bf16.mxu0 0
  %2879 = vmatpush2.bf16.msra.mxu0 0
  %2880 = vmatprep.subr.bf16.mxu0 0
  %2881 = vmatpush2.bf16.msra.mxu0 0
  %2882 = vmatprep.subr.bf16.mxu0 0
  %2883 = vmatpush2.bf16.msra.mxu0 0
  %2884 = vmatprep.mubr.bf16.mxu0 0
  %2885 = vmatmul.mubr.bf16.gmra.mxu0 %v2802
  %v2886 = vpop.f32.mrf.mxu0
  %v2887 = vadd.f32 0.0, %v2886
  %v2888 = vpop.f32.mrf.mxu0
  %v2889 = vpop.f32.mrf.mxu0
  %v2890 = vadd.f32 0.0, %v2889
  %v2891 = vpop.f32.mrf.mxu0
  %2892 = vdwg.mxu0
  %v2893 = vadd.f32 %v2745, %v2887
  %v2894 = vadd.f32 %v2746, %v2890
  %s2895 = scalar_lea.vmem %s5, 320
  %v2896 = vld [vmem:[%s2895] sm:$0xf]
  %v2897 = vld [vmem:[%s2895 + $0x4] sm:$0xf]
  %v2898 = vld [vmem:[%s2895 + $0x8] sm:$0xf]
  %v2899 = vld [vmem:[%s2895 + $0xc] sm:$0xf]
  %v2900 = vld [vmem:[%s2895 + $0x10] sm:$0xf]
  %v2901 = vld [vmem:[%s2895 + $0x14] sm:$0xf]
  %v2902 = vld [vmem:[%s2895 + $0x18] sm:$0xf]
  %v2903 = vld [vmem:[%s2895 + $0x1c] sm:$0xf]
  %v2904 = vld [vmem:[%s2895 + $0x20] sm:$0xf]
  %v2905 = vld [vmem:[%s2895 + $0x24] sm:$0xf]
  %v2906 = vld [vmem:[%s2895 + $0x28] sm:$0xf]
  %v2907 = vld [vmem:[%s2895 + $0x2c] sm:$0xf]
  %v2908 = vld [vmem:[%s2895 + $0x30] sm:$0xf]
  %v2909 = vld [vmem:[%s2895 + $0x34] sm:$0xf]
  %v2910 = vld [vmem:[%s2895 + $0x38] sm:$0xf]
  %v2911 = vld [vmem:[%s2895 + $0x3c] sm:$0xf]
  %2912 = vrot.lane.b32.xlu0 %v2785, 112
  %v2913 = vpop.permute.xlu0 %2912
  %2914 = vrot.lane.b32.xlu0 %v2797, 112
  %v2915 = vpop.permute.xlu0 %2914
  %v2916 = vsel %vm2526, %v2913, %v2915
  %v2934 = vunpack.c.l.b16 %v2896
  %v2935 = vunpack.c.l.b16 %v2897
  %v2936 = vunpack.c.l.b16 %v2898
  %v2937 = vunpack.c.l.b16 %v2899
  %v2938 = vunpack.c.l.b16 %v2900
  %v2939 = vunpack.c.l.b16 %v2901
  %v2940 = vunpack.c.l.b16 %v2902
  %v2941 = vunpack.c.l.b16 %v2903
  %v2942 = vunpack.c.l.b16 %v2904
  %v2943 = vunpack.c.l.b16 %v2905
  %v2944 = vunpack.c.l.b16 %v2906
  %v2945 = vunpack.c.l.b16 %v2907
  %v2946 = vunpack.c.l.b16 %v2908
  %v2947 = vunpack.c.l.b16 %v2909
  %v2948 = vunpack.c.l.b16 %v2910
  %v2949 = vunpack.c.l.b16 %v2911
  %v2950 = vpack.c.b16 %v2935, %v2934
  %v2951 = vpack.c.b16 %v2937, %v2936
  %v2952 = vpack.c.b16 %v2939, %v2938
  %v2953 = vpack.c.b16 %v2941, %v2940
  %v2954 = vpack.c.b16 %v2943, %v2942
  %v2955 = vpack.c.b16 %v2945, %v2944
  %v2956 = vpack.c.b16 %v2947, %v2946
  %v2957 = vpack.c.b16 %v2949, %v2948
  %2966 = vmatprep.subr.bf16.mxu0 0
  %2967 = vmatpush1.bf16.msra.mxu0 %v2957
  %2968 = vmatprep.subr.bf16.mxu0 0
  %2969 = vmatpush1.bf16.msra.mxu0 %v2956
  %2970 = vmatprep.subr.bf16.mxu0 0
  %2971 = vmatpush1.bf16.msra.mxu0 %v2955
  %2972 = vmatprep.subr.bf16.mxu0 0
  %2973 = vmatpush1.bf16.msra.mxu0 %v2954
  %2974 = vmatprep.subr.bf16.mxu0 0
  %2975 = vmatpush1.bf16.msra.mxu0 %v2953
  %2976 = vmatprep.subr.bf16.mxu0 0
  %2977 = vmatpush1.bf16.msra.mxu0 %v2952
  %2978 = vmatprep.subr.bf16.mxu0 0
  %2979 = vmatpush1.bf16.msra.mxu0 %v2951
  %2980 = vmatprep.subr.bf16.mxu0 0
  %2981 = vmatpush1.bf16.msra.mxu0 %v2950
  %2982 = vmatprep.subr.bf16.mxu0 0
  %2983 = vmatpush2.bf16.msra.mxu0 0
  %2984 = vmatprep.subr.bf16.mxu0 0
  %2985 = vmatpush2.bf16.msra.mxu0 0
  %2986 = vmatprep.subr.bf16.mxu0 0
  %2987 = vmatpush2.bf16.msra.mxu0 0
  %2988 = vmatprep.subr.bf16.mxu0 0
  %2989 = vmatpush2.bf16.msra.mxu0 0
  %2990 = vmatprep.subr.bf16.mxu0 0
  %2991 = vmatpush2.bf16.msra.mxu0 0
  %2992 = vmatprep.subr.bf16.mxu0 0
  %2993 = vmatpush2.bf16.msra.mxu0 0
  %2994 = vmatprep.subr.bf16.mxu0 0
  %2995 = vmatpush2.bf16.msra.mxu0 0
  %2996 = vmatprep.subr.bf16.mxu0 0
  %2997 = vmatpush2.bf16.msra.mxu0 0
  %2998 = vmatprep.mubr.bf16.mxu0 0
  %2999 = vmatmul.mubr.bf16.gmra.mxu0 %v2916
  %v3000 = vpop.f32.mrf.mxu0
  %v3001 = vadd.f32 0.0, %v3000
  %v3002 = vpop.f32.mrf.mxu0
  %v3003 = vpop.f32.mrf.mxu0
  %v3004 = vadd.f32 0.0, %v3003
  %v3005 = vpop.f32.mrf.mxu0
  %3006 = vdwg.mxu0
  %v3007 = vadd.f32 %v2893, %v3001
  %v3008 = vadd.f32 %v2894, %v3004
  %v3009 = vld [vmem:[#allocation3] sm:$0xfc]
  %v3010 = vld [vmem:[#allocation3 + $0x20] sm:$0x3]
  %v3011 = vpack.c.bf16 %v2621, %v3009
  %v3012 = vpack.c.bf16 %v3010, %v3010
  %s3013 = scalar_lea.vmem %s5, 384
  %v3014 = vld [vmem:[%s3013] sm:$0xf]
  %v3015 = vld [vmem:[%s3013 + $0x4] sm:$0xf]
  %v3016 = vld [vmem:[%s3013 + $0x8] sm:$0xf]
  %v3017 = vld [vmem:[%s3013 + $0xc] sm:$0xf]
  %v3018 = vld [vmem:[%s3013 + $0x10] sm:$0xf]
  %v3019 = vld [vmem:[%s3013 + $0x14] sm:$0xf]
  %v3020 = vld [vmem:[%s3013 + $0x18] sm:$0xf]
  %v3021 = vld [vmem:[%s3013 + $0x1c] sm:$0xf]
  %v3022 = vld [vmem:[%s3013 + $0x20] sm:$0xf]
  %v3023 = vld [vmem:[%s3013 + $0x24] sm:$0xf]
  %v3024 = vld [vmem:[%s3013 + $0x28] sm:$0xf]
  %v3025 = vld [vmem:[%s3013 + $0x2c] sm:$0xf]
  %v3026 = vld [vmem:[%s3013 + $0x30] sm:$0xf]
  %v3027 = vld [vmem:[%s3013 + $0x34] sm:$0xf]
  %v3028 = vld [vmem:[%s3013 + $0x38] sm:$0xf]
  %v3029 = vld [vmem:[%s3013 + $0x3c] sm:$0xf]
  %vm3032 = vcmask 1046528
  %v3033 = vrot.slane %v3011, 1
  %v3034 = vrot.slane %v3012, 1
  %v3035 = vsel %vm3032, %v3033, %v3034
  %v3053 = vunpack.c.l.b16 %v3014
  %v3054 = vunpack.c.l.b16 %v3015
  %v3055 = vunpack.c.l.b16 %v3016
  %v3056 = vunpack.c.l.b16 %v3017
  %v3057 = vunpack.c.l.b16 %v3018
  %v3058 = vunpack.c.l.b16 %v3019
  %v3059 = vunpack.c.l.b16 %v3020
  %v3060 = vunpack.c.l.b16 %v3021
  %v3061 = vunpack.c.l.b16 %v3022
  %v3062 = vunpack.c.l.b16 %v3023
  %v3063 = vunpack.c.l.b16 %v3024
  %v3064 = vunpack.c.l.b16 %v3025
  %v3065 = vunpack.c.l.b16 %v3026
  %v3066 = vunpack.c.l.b16 %v3027
  %v3067 = vunpack.c.l.b16 %v3028
  %v3068 = vunpack.c.l.b16 %v3029
  %v3069 = vpack.c.b16 %v3054, %v3053
  %v3070 = vpack.c.b16 %v3056, %v3055
  %v3071 = vpack.c.b16 %v3058, %v3057
  %v3072 = vpack.c.b16 %v3060, %v3059
  %v3073 = vpack.c.b16 %v3062, %v3061
  %v3074 = vpack.c.b16 %v3064, %v3063
  %v3075 = vpack.c.b16 %v3066, %v3065
  %v3076 = vpack.c.b16 %v3068, %v3067
  %3085 = vmatprep.subr.bf16.mxu0 0
  %3086 = vmatpush1.bf16.msra.mxu0 %v3076
  %3087 = vmatprep.subr.bf16.mxu0 0
  %3088 = vmatpush1.bf16.msra.mxu0 %v3075
  %3089 = vmatprep.subr.bf16.mxu0 0
  %3090 = vmatpush1.bf16.msra.mxu0 %v3074
  %3091 = vmatprep.subr.bf16.mxu0 0
  %3092 = vmatpush1.bf16.msra.mxu0 %v3073
  %3093 = vmatprep.subr.bf16.mxu0 0
  %3094 = vmatpush1.bf16.msra.mxu0 %v3072
  %3095 = vmatprep.subr.bf16.mxu0 0
  %3096 = vmatpush1.bf16.msra.mxu0 %v3071
  %3097 = vmatprep.subr.bf16.mxu0 0
  %3098 = vmatpush1.bf16.msra.mxu0 %v3070
  %3099 = vmatprep.subr.bf16.mxu0 0
  %3100 = vmatpush1.bf16.msra.mxu0 %v3069
  %3101 = vmatprep.subr.bf16.mxu0 0
  %3102 = vmatpush2.bf16.msra.mxu0 0
  %3103 = vmatprep.subr.bf16.mxu0 0
  %3104 = vmatpush2.bf16.msra.mxu0 0
  %3105 = vmatprep.subr.bf16.mxu0 0
  %3106 = vmatpush2.bf16.msra.mxu0 0
  %3107 = vmatprep.subr.bf16.mxu0 0
  %3108 = vmatpush2.bf16.msra.mxu0 0
  %3109 = vmatprep.subr.bf16.mxu0 0
  %3110 = vmatpush2.bf16.msra.mxu0 0
  %3111 = vmatprep.subr.bf16.mxu0 0
  %3112 = vmatpush2.bf16.msra.mxu0 0
  %3113 = vmatprep.subr.bf16.mxu0 0
  %3114 = vmatpush2.bf16.msra.mxu0 0
  %3115 = vmatprep.subr.bf16.mxu0 0
  %3116 = vmatpush2.bf16.msra.mxu0 0
  %3117 = vmatprep.mubr.bf16.mxu0 0
  %3118 = vmatmul.mubr.bf16.gmra.mxu0 %v3035
  %v3119 = vpop.f32.mrf.mxu0
  %v3120 = vadd.f32 0.0, %v3119
  %v3121 = vpop.f32.mrf.mxu0
  %v3122 = vpop.f32.mrf.mxu0
  %v3123 = vadd.f32 0.0, %v3122
  %v3124 = vpop.f32.mrf.mxu0
  %3125 = vdwg.mxu0
  %v3126 = vadd.f32 %v3007, %v3120
  %v3127 = vadd.f32 %v3008, %v3123
  %v3128 = vld [vmem:[#allocation3] sm:$0xfc]
  %v3129 = vld [vmem:[#allocation3 + $0x8] sm:$0xfc]
  %v3130 = vld [vmem:[#allocation3 + $0x20] sm:$0x3]
  %v3131 = vld [vmem:[#allocation3 + $0x28] sm:$0x3]
  %v3132 = vpack.c.bf16 %v2749, %v3128
  %v3133 = vpack.c.bf16 %v2750, %v3129
  %v3134 = vpack.c.bf16 %v3130, %v3130
  %v3135 = vpack.c.bf16 %v3131, %v3131
  %s3136 = scalar_lea.vmem %s5, 448
  %v3137 = vld [vmem:[%s3136] sm:$0xf]
  %v3138 = vld [vmem:[%s3136 + $0x4] sm:$0xf]
  %v3139 = vld [vmem:[%s3136 + $0x8] sm:$0xf]
  %v3140 = vld [vmem:[%s3136 + $0xc] sm:$0xf]
  %v3141 = vld [vmem:[%s3136 + $0x10] sm:$0xf]
  %v3142 = vld [vmem:[%s3136 + $0x14] sm:$0xf]
  %v3143 = vld [vmem:[%s3136 + $0x18] sm:$0xf]
  %v3144 = vld [vmem:[%s3136 + $0x1c] sm:$0xf]
  %v3145 = vld [vmem:[%s3136 + $0x20] sm:$0xf]
  %v3146 = vld [vmem:[%s3136 + $0x24] sm:$0xf]
  %v3147 = vld [vmem:[%s3136 + $0x28] sm:$0xf]
  %v3148 = vld [vmem:[%s3136 + $0x2c] sm:$0xf]
  %v3149 = vld [vmem:[%s3136 + $0x30] sm:$0xf]
  %v3150 = vld [vmem:[%s3136 + $0x34] sm:$0xf]
  %v3151 = vld [vmem:[%s3136 + $0x38] sm:$0xf]
  %v3152 = vld [vmem:[%s3136 + $0x3c] sm:$0xf]
  %v3157 = vrot.slane %v3132, 1
  %v3158 = vrot.slane %v3134, 1
  %v3159 = vsel %vm3032, %v3157, %v3158
  %v3160 = vrot.slane %v3133, 1
  %v3161 = vrot.slane %v3135, 1
  %v3162 = vsel %vm3032, %v3160, %v3161
  %3163 = vrot.lane.b32.xlu0 %v3159, 120
  %v3164 = vpop.permute.xlu0 %3163
  %3165 = vrot.lane.b32.xlu0 %v3162, 120
  %v3166 = vpop.permute.xlu0 %3165
  %v3167 = vsel %vm2324, %v3164, %v3166
  %v3185 = vunpack.c.l.b16 %v3137
  %v3186 = vunpack.c.l.b16 %v3138
  %v3187 = vunpack.c.l.b16 %v3139
  %v3188 = vunpack.c.l.b16 %v3140
  %v3189 = vunpack.c.l.b16 %v3141
  %v3190 = vunpack.c.l.b16 %v3142
  %v3191 = vunpack.c.l.b16 %v3143
  %v3192 = vunpack.c.l.b16 %v3144
  %v3193 = vunpack.c.l.b16 %v3145
  %v3194 = vunpack.c.l.b16 %v3146
  %v3195 = vunpack.c.l.b16 %v3147
  %v3196 = vunpack.c.l.b16 %v3148
  %v3197 = vunpack.c.l.b16 %v3149
  %v3198 = vunpack.c.l.b16 %v3150
  %v3199 = vunpack.c.l.b16 %v3151
  %v3200 = vunpack.c.l.b16 %v3152
  %v3201 = vpack.c.b16 %v3186, %v3185
  %v3202 = vpack.c.b16 %v3188, %v3187
  %v3203 = vpack.c.b16 %v3190, %v3189
  %v3204 = vpack.c.b16 %v3192, %v3191
  %v3205 = vpack.c.b16 %v3194, %v3193
  %v3206 = vpack.c.b16 %v3196, %v3195
  %v3207 = vpack.c.b16 %v3198, %v3197
  %v3208 = vpack.c.b16 %v3200, %v3199
  %3217 = vmatprep.subr.bf16.mxu0 0
  %3218 = vmatpush1.bf16.msra.mxu0 %v3208
  %3219 = vmatprep.subr.bf16.mxu0 0
  %3220 = vmatpush1.bf16.msra.mxu0 %v3207
  %3221 = vmatprep.subr.bf16.mxu0 0
  %3222 = vmatpush1.bf16.msra.mxu0 %v3206
  %3223 = vmatprep.subr.bf16.mxu0 0
  %3224 = vmatpush1.bf16.msra.mxu0 %v3205
  %3225 = vmatprep.subr.bf16.mxu0 0
  %3226 = vmatpush1.bf16.msra.mxu0 %v3204
  %3227 = vmatprep.subr.bf16.mxu0 0
  %3228 = vmatpush1.bf16.msra.mxu0 %v3203
  %3229 = vmatprep.subr.bf16.mxu0 0
  %3230 = vmatpush1.bf16.msra.mxu0 %v3202
  %3231 = vmatprep.subr.bf16.mxu0 0
  %3232 = vmatpush1.bf16.msra.mxu0 %v3201
  %3233 = vmatprep.subr.bf16.mxu0 0
  %3234 = vmatpush2.bf16.msra.mxu0 0
  %3235 = vmatprep.subr.bf16.mxu0 0
  %3236 = vmatpush2.bf16.msra.mxu0 0
  %3237 = vmatprep.subr.bf16.mxu0 0
  %3238 = vmatpush2.bf16.msra.mxu0 0
  %3239 = vmatprep.subr.bf16.mxu0 0
  %3240 = vmatpush2.bf16.msra.mxu0 0
  %3241 = vmatprep.subr.bf16.mxu0 0
  %3242 = vmatpush2.bf16.msra.mxu0 0
  %3243 = vmatprep.subr.bf16.mxu0 0
  %3244 = vmatpush2.bf16.msra.mxu0 0
  %3245 = vmatprep.subr.bf16.mxu0 0
  %3246 = vmatpush2.bf16.msra.mxu0 0
  %3247 = vmatprep.subr.bf16.mxu0 0
  %3248 = vmatpush2.bf16.msra.mxu0 0
  %3249 = vmatprep.mubr.bf16.mxu0 0
  %3250 = vmatmul.mubr.bf16.gmra.mxu0 %v3167
  %v3251 = vpop.f32.mrf.mxu0
  %v3252 = vadd.f32 0.0, %v3251
  %v3253 = vpop.f32.mrf.mxu0
  %v3254 = vpop.f32.mrf.mxu0
  %v3255 = vadd.f32 0.0, %v3254
  %v3256 = vpop.f32.mrf.mxu0
  %3257 = vdwg.mxu0
  %v3258 = vadd.f32 %v3126, %v3252
  %v3259 = vadd.f32 %v3127, %v3255
  %s3260 = scalar_lea.vmem %s5, 512
  %v3261 = vld [vmem:[%s3260] sm:$0xf]
  %v3262 = vld [vmem:[%s3260 + $0x4] sm:$0xf]
  %v3263 = vld [vmem:[%s3260 + $0x8] sm:$0xf]
  %v3264 = vld [vmem:[%s3260 + $0xc] sm:$0xf]
  %v3265 = vld [vmem:[%s3260 + $0x10] sm:$0xf]
  %v3266 = vld [vmem:[%s3260 + $0x14] sm:$0xf]
  %v3267 = vld [vmem:[%s3260 + $0x18] sm:$0xf]
  %v3268 = vld [vmem:[%s3260 + $0x1c] sm:$0xf]
  %v3269 = vld [vmem:[%s3260 + $0x20] sm:$0xf]
  %v3270 = vld [vmem:[%s3260 + $0x24] sm:$0xf]
  %v3271 = vld [vmem:[%s3260 + $0x28] sm:$0xf]
  %v3272 = vld [vmem:[%s3260 + $0x2c] sm:$0xf]
  %v3273 = vld [vmem:[%s3260 + $0x30] sm:$0xf]
  %v3274 = vld [vmem:[%s3260 + $0x34] sm:$0xf]
  %v3275 = vld [vmem:[%s3260 + $0x38] sm:$0xf]
  %v3276 = vld [vmem:[%s3260 + $0x3c] sm:$0xf]
  %3277 = vrot.lane.b32.xlu0 %v3159, 112
  %v3278 = vpop.permute.xlu0 %3277
  %3279 = vrot.lane.b32.xlu0 %v3162, 112
  %v3280 = vpop.permute.xlu0 %3279
  %v3281 = vsel %vm2526, %v3278, %v3280
  %v3299 = vunpack.c.l.b16 %v3261
  %v3300 = vunpack.c.l.b16 %v3262
  %v3301 = vunpack.c.l.b16 %v3263
  %v3302 = vunpack.c.l.b16 %v3264
  %v3303 = vunpack.c.l.b16 %v3265
  %v3304 = vunpack.c.l.b16 %v3266
  %v3305 = vunpack.c.l.b16 %v3267
  %v3306 = vunpack.c.l.b16 %v3268
  %v3307 = vunpack.c.l.b16 %v3269
  %v3308 = vunpack.c.l.b16 %v3270
  %v3309 = vunpack.c.l.b16 %v3271
  %v3310 = vunpack.c.l.b16 %v3272
  %v3311 = vunpack.c.l.b16 %v3273
  %v3312 = vunpack.c.l.b16 %v3274
  %v3313 = vunpack.c.l.b16 %v3275
  %v3314 = vunpack.c.l.b16 %v3276
  %v3315 = vpack.c.b16 %v3300, %v3299
  %v3316 = vpack.c.b16 %v3302, %v3301
  %v3317 = vpack.c.b16 %v3304, %v3303
  %v3318 = vpack.c.b16 %v3306, %v3305
  %v3319 = vpack.c.b16 %v3308, %v3307
  %v3320 = vpack.c.b16 %v3310, %v3309
  %v3321 = vpack.c.b16 %v3312, %v3311
  %v3322 = vpack.c.b16 %v3314, %v3313
  %3331 = vmatprep.subr.bf16.mxu0 0
  %3332 = vmatpush1.bf16.msra.mxu0 %v3322
  %3333 = vmatprep.subr.bf16.mxu0 0
  %3334 = vmatpush1.bf16.msra.mxu0 %v3321
  %3335 = vmatprep.subr.bf16.mxu0 0
  %3336 = vmatpush1.bf16.msra.mxu0 %v3320
  %3337 = vmatprep.subr.bf16.mxu0 0
  %3338 = vmatpush1.bf16.msra.mxu0 %v3319
  %3339 = vmatprep.subr.bf16.mxu0 0
  %3340 = vmatpush1.bf16.msra.mxu0 %v3318
  %3341 = vmatprep.subr.bf16.mxu0 0
  %3342 = vmatpush1.bf16.msra.mxu0 %v3317
  %3343 = vmatprep.subr.bf16.mxu0 0
  %3344 = vmatpush1.bf16.msra.mxu0 %v3316
  %3345 = vmatprep.subr.bf16.mxu0 0
  %3346 = vmatpush1.bf16.msra.mxu0 %v3315
  %3347 = vmatprep.subr.bf16.mxu0 0
  %3348 = vmatpush2.bf16.msra.mxu0 0
  %3349 = vmatprep.subr.bf16.mxu0 0
  %3350 = vmatpush2.bf16.msra.mxu0 0
  %3351 = vmatprep.subr.bf16.mxu0 0
  %3352 = vmatpush2.bf16.msra.mxu0 0
  %3353 = vmatprep.subr.bf16.mxu0 0
  %3354 = vmatpush2.bf16.msra.mxu0 0
  %3355 = vmatprep.subr.bf16.mxu0 0
  %3356 = vmatpush2.bf16.msra.mxu0 0
  %3357 = vmatprep.subr.bf16.mxu0 0
  %3358 = vmatpush2.bf16.msra.mxu0 0
  %3359 = vmatprep.subr.bf16.mxu0 0
  %3360 = vmatpush2.bf16.msra.mxu0 0
  %3361 = vmatprep.subr.bf16.mxu0 0
  %3362 = vmatpush2.bf16.msra.mxu0 0
  %3363 = vmatprep.mubr.bf16.mxu0 0
  %3364 = vmatmul.mubr.bf16.gmra.mxu0 %v3281
  %v3365 = vpop.f32.mrf.mxu0
  %v3366 = vadd.f32 0.0, %v3365
  %v3367 = vpop.f32.mrf.mxu0
  %v3368 = vpop.f32.mrf.mxu0
  %v3369 = vadd.f32 0.0, %v3368
  %v3370 = vpop.f32.mrf.mxu0
  %3371 = vdwg.mxu0
  %v3372 = vadd.f32 %v3258, %v3366
  %v3373 = vadd.f32 %v3259, %v3369
  %v3375 = vlaneseq
  %v3376 = vshrl.u32 %v3375, 7
  %v3377 = vsub.s32 0, %v3376
  %v3378 = vrot.slane %v40, %v3377
  %v3380 = vadd.f32 %v3372, %v3378
  %v3381 = vadd.f32 %v3373, %v3378
  %v3382 = vmul.f32 %v3380, %v3380
  %v3383 = vmul.f32 %v3381, %v3381
  %3384 = vst [vmem:[%s11] sm:$0xff] %v3380
  %3385 = vst [vmem:[%s11 + $0x8] sm:$0xff] %v3381
  %v3386 = vld [vmem:[%s1898] sm:$0xff]
  %v3387 = vld [vmem:[%s1898 + $0x10] sm:$0xff]
  %v3388 = vpack.c.bf16 %v3387, %v3386
  %v3389 = vld [vmem:[%s5] sm:$0xf]
  %v3390 = vld [vmem:[%s5 + $0x4] sm:$0xf]
  %v3391 = vld [vmem:[%s5 + $0x8] sm:$0xf]
  %v3392 = vld [vmem:[%s5 + $0xc] sm:$0xf]
  %v3393 = vld [vmem:[%s5 + $0x10] sm:$0xf]
  %v3394 = vld [vmem:[%s5 + $0x14] sm:$0xf]
  %v3395 = vld [vmem:[%s5 + $0x18] sm:$0xf]
  %v3396 = vld [vmem:[%s5 + $0x1c] sm:$0xf]
  %v3397 = vld [vmem:[%s5 + $0x20] sm:$0xf]
  %v3398 = vld [vmem:[%s5 + $0x24] sm:$0xf]
  %v3399 = vld [vmem:[%s5 + $0x28] sm:$0xf]
  %v3400 = vld [vmem:[%s5 + $0x2c] sm:$0xf]
  %v3401 = vld [vmem:[%s5 + $0x30] sm:$0xf]
  %v3402 = vld [vmem:[%s5 + $0x34] sm:$0xf]
  %v3403 = vld [vmem:[%s5 + $0x38] sm:$0xf]
  %v3404 = vld [vmem:[%s5 + $0x3c] sm:$0xf]
  %v3405 = vld [vmem:[%s1898 + $0x8] sm:$0xff]
  %v3406 = vld [vmem:[%s1898 + $0x18] sm:$0xff]
  %v3407 = vpack.c.bf16 %v3406, %v3405
  %v3408 = vld [vmem:[%s2301] sm:$0xf]
  %v3409 = vld [vmem:[%s2301 + $0x4] sm:$0xf]
  %v3410 = vld [vmem:[%s2301 + $0x8] sm:$0xf]
  %v3411 = vld [vmem:[%s2301 + $0xc] sm:$0xf]
  %v3412 = vld [vmem:[%s2301 + $0x10] sm:$0xf]
  %v3413 = vld [vmem:[%s2301 + $0x14] sm:$0xf]
  %v3414 = vld [vmem:[%s2301 + $0x18] sm:$0xf]
  %v3415 = vld [vmem:[%s2301 + $0x1c] sm:$0xf]
  %v3416 = vld [vmem:[%s2301 + $0x20] sm:$0xf]
  %v3417 = vld [vmem:[%s2301 + $0x24] sm:$0xf]
  %v3418 = vld [vmem:[%s2301 + $0x28] sm:$0xf]
  %v3419 = vld [vmem:[%s2301 + $0x2c] sm:$0xf]
  %v3420 = vld [vmem:[%s2301 + $0x30] sm:$0xf]
  %v3421 = vld [vmem:[%s2301 + $0x34] sm:$0xf]
  %v3422 = vld [vmem:[%s2301 + $0x38] sm:$0xf]
  %v3423 = vld [vmem:[%s2301 + $0x3c] sm:$0xf]
  %3426 = vrot.lane.b32.xlu0 %v3388, 120
  %v3427 = vpop.permute.xlu0 %3426
  %3428 = vrot.lane.b32.xlu0 %v3407, 120
  %v3429 = vpop.permute.xlu0 %3428
  %v3430 = vsel %vm2324, %v3427, %v3429
  %v3448 = vunpack.c.l.b16 %v3408
  %v3449 = vunpack.c.l.b16 %v3409
  %v3450 = vunpack.c.l.b16 %v3410
  %v3451 = vunpack.c.l.b16 %v3411
  %v3452 = vunpack.c.l.b16 %v3412
  %v3453 = vunpack.c.l.b16 %v3413
  %v3454 = vunpack.c.l.b16 %v3414
  %v3455 = vunpack.c.l.b16 %v3415
  %v3456 = vunpack.c.l.b16 %v3416
  %v3457 = vunpack.c.l.b16 %v3417
  %v3458 = vunpack.c.l.b16 %v3418
  %v3459 = vunpack.c.l.b16 %v3419
  %v3460 = vunpack.c.l.b16 %v3420
  %v3461 = vunpack.c.l.b16 %v3421
  %v3462 = vunpack.c.l.b16 %v3422
  %v3463 = vunpack.c.l.b16 %v3423
  %v3464 = vpack.c.b16 %v3449, %v3448
  %v3465 = vpack.c.b16 %v3451, %v3450
  %v3466 = vpack.c.b16 %v3453, %v3452
  %v3467 = vpack.c.b16 %v3455, %v3454
  %v3468 = vpack.c.b16 %v3457, %v3456
  %v3469 = vpack.c.b16 %v3459, %v3458
  %v3470 = vpack.c.b16 %v3461, %v3460
  %v3471 = vpack.c.b16 %v3463, %v3462
  %3480 = vmatprep.subr.bf16.mxu0 0
  %3481 = vmatpush1.bf16.msra.mxu0 %v3471
  %3482 = vmatprep.subr.bf16.mxu0 0
  %3483 = vmatpush1.bf16.msra.mxu0 %v3470
  %3484 = vmatprep.subr.bf16.mxu0 0
  %3485 = vmatpush1.bf16.msra.mxu0 %v3469
  %3486 = vmatprep.subr.bf16.mxu0 0
  %3487 = vmatpush1.bf16.msra.mxu0 %v3468
  %3488 = vmatprep.subr.bf16.mxu0 0
  %3489 = vmatpush1.bf16.msra.mxu0 %v3467
  %3490 = vmatprep.subr.bf16.mxu0 0
  %3491 = vmatpush1.bf16.msra.mxu0 %v3466
  %3492 = vmatprep.subr.bf16.mxu0 0
  %3493 = vmatpush1.bf16.msra.mxu0 %v3465
  %3494 = vmatprep.subr.bf16.mxu0 0
  %3495 = vmatpush1.bf16.msra.mxu0 %v3464
  %3496 = vmatprep.subr.bf16.mxu0 0
  %3497 = vmatpush2.bf16.msra.mxu0 0
  %3498 = vmatprep.subr.bf16.mxu0 0
  %3499 = vmatpush2.bf16.msra.mxu0 0
  %3500 = vmatprep.subr.bf16.mxu0 0
  %3501 = vmatpush2.bf16.msra.mxu0 0
  %3502 = vmatprep.subr.bf16.mxu0 0
  %3503 = vmatpush2.bf16.msra.mxu0 0
  %3504 = vmatprep.subr.bf16.mxu0 0
  %3505 = vmatpush2.bf16.msra.mxu0 0
  %3506 = vmatprep.subr.bf16.mxu0 0
  %3507 = vmatpush2.bf16.msra.mxu0 0
  %3508 = vmatprep.subr.bf16.mxu0 0
  %3509 = vmatpush2.bf16.msra.mxu0 0
  %3510 = vmatprep.subr.bf16.mxu0 0
  %3511 = vmatpush2.bf16.msra.mxu0 0
  %3512 = vmatprep.mubr.bf16.mxu0 0
  %3513 = vmatmul.mubr.bf16.gmra.mxu0 %v3430
  %v3514 = vpop.f32.mrf.mxu0
  %v3515 = vadd.f32 0.0, %v3514
  %v3516 = vpop.f32.mrf.mxu0
  %v3517 = vpop.f32.mrf.mxu0
  %v3518 = vadd.f32 0.0, %v3517
  %v3519 = vpop.f32.mrf.mxu0
  %3520 = vdwg.mxu0
  %v3537 = vunpack.c.l.b16 %v3389
  %v3538 = vunpack.c.l.b16 %v3390
  %v3539 = vunpack.c.l.b16 %v3391
  %v3540 = vunpack.c.l.b16 %v3392
  %v3541 = vunpack.c.l.b16 %v3393
  %v3542 = vunpack.c.l.b16 %v3394
  %v3543 = vunpack.c.l.b16 %v3395
  %v3544 = vunpack.c.l.b16 %v3396
  %v3545 = vunpack.c.l.b16 %v3397
  %v3546 = vunpack.c.l.b16 %v3398
  %v3547 = vunpack.c.l.b16 %v3399
  %v3548 = vunpack.c.l.b16 %v3400
  %v3549 = vunpack.c.l.b16 %v3401
  %v3550 = vunpack.c.l.b16 %v3402
  %v3551 = vunpack.c.l.b16 %v3403
  %v3552 = vunpack.c.l.b16 %v3404
  %v3553 = vpack.c.b16 %v3538, %v3537
  %v3554 = vpack.c.b16 %v3540, %v3539
  %v3555 = vpack.c.b16 %v3542, %v3541
  %v3556 = vpack.c.b16 %v3544, %v3543
  %v3557 = vpack.c.b16 %v3546, %v3545
  %v3558 = vpack.c.b16 %v3548, %v3547
  %v3559 = vpack.c.b16 %v3550, %v3549
  %v3560 = vpack.c.b16 %v3552, %v3551
  %3569 = vmatprep.subr.bf16.mxu0 0
  %3570 = vmatpush1.bf16.msra.mxu0 %v3560
  %3571 = vmatprep.subr.bf16.mxu0 0
  %3572 = vmatpush1.bf16.msra.mxu0 %v3559
  %3573 = vmatprep.subr.bf16.mxu0 0
  %3574 = vmatpush1.bf16.msra.mxu0 %v3558
  %3575 = vmatprep.subr.bf16.mxu0 0
  %3576 = vmatpush1.bf16.msra.mxu0 %v3557
  %3577 = vmatprep.subr.bf16.mxu0 0
  %3578 = vmatpush1.bf16.msra.mxu0 %v3556
  %3579 = vmatprep.subr.bf16.mxu0 0
  %3580 = vmatpush1.bf16.msra.mxu0 %v3555
  %3581 = vmatprep.subr.bf16.mxu0 0
  %3582 = vmatpush1.bf16.msra.mxu0 %v3554
  %3583 = vmatprep.subr.bf16.mxu0 0
  %3584 = vmatpush1.bf16.msra.mxu0 %v3553
  %3585 = vmatprep.subr.bf16.mxu0 0
  %3586 = vmatpush2.bf16.msra.mxu0 0
  %3587 = vmatprep.subr.bf16.mxu0 0
  %3588 = vmatpush2.bf16.msra.mxu0 0
  %3589 = vmatprep.subr.bf16.mxu0 0
  %3590 = vmatpush2.bf16.msra.mxu0 0
  %3591 = vmatprep.subr.bf16.mxu0 0
  %3592 = vmatpush2.bf16.msra.mxu0 0
  %3593 = vmatprep.subr.bf16.mxu0 0
  %3594 = vmatpush2.bf16.msra.mxu0 0
  %3595 = vmatprep.subr.bf16.mxu0 0
  %3596 = vmatpush2.bf16.msra.mxu0 0
  %3597 = vmatprep.subr.bf16.mxu0 0
  %3598 = vmatpush2.bf16.msra.mxu0 0
  %3599 = vmatprep.subr.bf16.mxu0 0
  %3600 = vmatpush2.bf16.msra.mxu0 0
  %3601 = vmatprep.mubr.bf16.mxu0 0
  %3602 = vmatmul.mubr.bf16.gmra.mxu0 %v3388
  %v3603 = vpop.f32.mrf.mxu0
  %v3604 = vadd.f32 %v3515, %v3603
  %v3605 = vpop.f32.mrf.mxu0
  %v3606 = vpop.f32.mrf.mxu0
  %v3607 = vadd.f32 %v3518, %v3606
  %v3608 = vpop.f32.mrf.mxu0
  %3609 = vdwg.mxu0
  %v3610 = vld [vmem:[%s2505] sm:$0xf]
  %v3611 = vld [vmem:[%s2505 + $0x4] sm:$0xf]
  %v3612 = vld [vmem:[%s2505 + $0x8] sm:$0xf]
  %v3613 = vld [vmem:[%s2505 + $0xc] sm:$0xf]
  %v3614 = vld [vmem:[%s2505 + $0x10] sm:$0xf]
  %v3615 = vld [vmem:[%s2505 + $0x14] sm:$0xf]
  %v3616 = vld [vmem:[%s2505 + $0x18] sm:$0xf]
  %v3617 = vld [vmem:[%s2505 + $0x1c] sm:$0xf]
  %v3618 = vld [vmem:[%s2505 + $0x20] sm:$0xf]
  %v3619 = vld [vmem:[%s2505 + $0x24] sm:$0xf]
  %v3620 = vld [vmem:[%s2505 + $0x28] sm:$0xf]
  %v3621 = vld [vmem:[%s2505 + $0x2c] sm:$0xf]
  %v3622 = vld [vmem:[%s2505 + $0x30] sm:$0xf]
  %v3623 = vld [vmem:[%s2505 + $0x34] sm:$0xf]
  %v3624 = vld [vmem:[%s2505 + $0x38] sm:$0xf]
  %v3625 = vld [vmem:[%s2505 + $0x3c] sm:$0xf]
  %3626 = vrot.lane.b32.xlu0 %v3388, 112
  %v3627 = vpop.permute.xlu0 %3626
  %3628 = vrot.lane.b32.xlu0 %v3407, 112
  %v3629 = vpop.permute.xlu0 %3628
  %v3630 = vsel %vm2526, %v3627, %v3629
  %v3648 = vunpack.c.l.b16 %v3610
  %v3649 = vunpack.c.l.b16 %v3611
  %v3650 = vunpack.c.l.b16 %v3612
  %v3651 = vunpack.c.l.b16 %v3613
  %v3652 = vunpack.c.l.b16 %v3614
  %v3653 = vunpack.c.l.b16 %v3615
  %v3654 = vunpack.c.l.b16 %v3616
  %v3655 = vunpack.c.l.b16 %v3617
  %v3656 = vunpack.c.l.b16 %v3618
  %v3657 = vunpack.c.l.b16 %v3619
  %v3658 = vunpack.c.l.b16 %v3620
  %v3659 = vunpack.c.l.b16 %v3621
  %v3660 = vunpack.c.l.b16 %v3622
  %v3661 = vunpack.c.l.b16 %v3623
  %v3662 = vunpack.c.l.b16 %v3624
  %v3663 = vunpack.c.l.b16 %v3625
  %v3664 = vpack.c.b16 %v3649, %v3648
  %v3665 = vpack.c.b16 %v3651, %v3650
  %v3666 = vpack.c.b16 %v3653, %v3652
  %v3667 = vpack.c.b16 %v3655, %v3654
  %v3668 = vpack.c.b16 %v3657, %v3656
  %v3669 = vpack.c.b16 %v3659, %v3658
  %v3670 = vpack.c.b16 %v3661, %v3660
  %v3671 = vpack.c.b16 %v3663, %v3662
  %3680 = vmatprep.subr.bf16.mxu0 0
  %3681 = vmatpush1.bf16.msra.mxu0 %v3671
  %3682 = vmatprep.subr.bf16.mxu0 0
  %3683 = vmatpush1.bf16.msra.mxu0 %v3670
  %3684 = vmatprep.subr.bf16.mxu0 0
  %3685 = vmatpush1.bf16.msra.mxu0 %v3669
  %3686 = vmatprep.subr.bf16.mxu0 0
  %3687 = vmatpush1.bf16.msra.mxu0 %v3668
  %3688 = vmatprep.subr.bf16.mxu0 0
  %3689 = vmatpush1.bf16.msra.mxu0 %v3667
  %3690 = vmatprep.subr.bf16.mxu0 0
  %3691 = vmatpush1.bf16.msra.mxu0 %v3666
  %3692 = vmatprep.subr.bf16.mxu0 0
  %3693 = vmatpush1.bf16.msra.mxu0 %v3665
  %3694 = vmatprep.subr.bf16.mxu0 0
  %3695 = vmatpush1.bf16.msra.mxu0 %v3664
  %3696 = vmatprep.subr.bf16.mxu0 0
  %3697 = vmatpush2.bf16.msra.mxu0 0
  %3698 = vmatprep.subr.bf16.mxu0 0
  %3699 = vmatpush2.bf16.msra.mxu0 0
  %3700 = vmatprep.subr.bf16.mxu0 0
  %3701 = vmatpush2.bf16.msra.mxu0 0
  %3702 = vmatprep.subr.bf16.mxu0 0
  %3703 = vmatpush2.bf16.msra.mxu0 0
  %3704 = vmatprep.subr.bf16.mxu0 0
  %3705 = vmatpush2.bf16.msra.mxu0 0
  %3706 = vmatprep.subr.bf16.mxu0 0
  %3707 = vmatpush2.bf16.msra.mxu0 0
  %3708 = vmatprep.subr.bf16.mxu0 0
  %3709 = vmatpush2.bf16.msra.mxu0 0
  %3710 = vmatprep.subr.bf16.mxu0 0
  %3711 = vmatpush2.bf16.msra.mxu0 0
  %3712 = vmatprep.mubr.bf16.mxu0 0
  %3713 = vmatmul.mubr.bf16.gmra.mxu0 %v3630
  %v3714 = vpop.f32.mrf.mxu0
  %v3715 = vadd.f32 0.0, %v3714
  %v3716 = vpop.f32.mrf.mxu0
  %v3717 = vpop.f32.mrf.mxu0
  %v3718 = vadd.f32 0.0, %v3717
  %v3719 = vpop.f32.mrf.mxu0
  %3720 = vdwg.mxu0
  %v3721 = vadd.f32 %v3604, %v3715
  %v3722 = vadd.f32 %v3607, %v3718
  %v3723 = vld [vmem:[%s1898] sm:$0xfe]
  %v3724 = vld [vmem:[%s1898 + $0x10] sm:$0xff]
  %v3725 = vld [vmem:[%s1898 + $0x20] sm:$0x1]
  %v3726 = vpack.c.bf16 %v3724, %v3723
  %v3727 = vpack.c.bf16 %v3725, %v3725
  %v3728 = vld [vmem:[%s2625] sm:$0xf]
  %v3729 = vld [vmem:[%s2625 + $0x4] sm:$0xf]
  %v3730 = vld [vmem:[%s2625 + $0x8] sm:$0xf]
  %v3731 = vld [vmem:[%s2625 + $0xc] sm:$0xf]
  %v3732 = vld [vmem:[%s2625 + $0x10] sm:$0xf]
  %v3733 = vld [vmem:[%s2625 + $0x14] sm:$0xf]
  %v3734 = vld [vmem:[%s2625 + $0x18] sm:$0xf]
  %v3735 = vld [vmem:[%s2625 + $0x1c] sm:$0xf]
  %v3736 = vld [vmem:[%s2625 + $0x20] sm:$0xf]
  %v3737 = vld [vmem:[%s2625 + $0x24] sm:$0xf]
  %v3738 = vld [vmem:[%s2625 + $0x28] sm:$0xf]
  %v3739 = vld [vmem:[%s2625 + $0x2c] sm:$0xf]
  %v3740 = vld [vmem:[%s2625 + $0x30] sm:$0xf]
  %v3741 = vld [vmem:[%s2625 + $0x34] sm:$0xf]
  %v3742 = vld [vmem:[%s2625 + $0x38] sm:$0xf]
  %v3743 = vld [vmem:[%s2625 + $0x3c] sm:$0xf]
  %v3745 = vshrl.u32 %v3726, 16
  %v3747 = vshll.u32 %v3726, 16
  %v3749 = vrot.slane %v3747, 1
  %v3750 = vor.u32 %v3745, %v3749
  %v3752 = vshll.u32 %v3727, 16
  %v3754 = vrot.slane %v3752, 1
  %v3755 = vsel %vm2642, %v3750, %v3754
  %v3773 = vunpack.c.l.b16 %v3728
  %v3774 = vunpack.c.l.b16 %v3729
  %v3775 = vunpack.c.l.b16 %v3730
  %v3776 = vunpack.c.l.b16 %v3731
  %v3777 = vunpack.c.l.b16 %v3732
  %v3778 = vunpack.c.l.b16 %v3733
  %v3779 = vunpack.c.l.b16 %v3734
  %v3780 = vunpack.c.l.b16 %v3735
  %v3781 = vunpack.c.l.b16 %v3736
  %v3782 = vunpack.c.l.b16 %v3737
  %v3783 = vunpack.c.l.b16 %v3738
  %v3784 = vunpack.c.l.b16 %v3739
  %v3785 = vunpack.c.l.b16 %v3740
  %v3786 = vunpack.c.l.b16 %v3741
  %v3787 = vunpack.c.l.b16 %v3742
  %v3788 = vunpack.c.l.b16 %v3743
  %v3789 = vpack.c.b16 %v3774, %v3773
  %v3790 = vpack.c.b16 %v3776, %v3775
  %v3791 = vpack.c.b16 %v3778, %v3777
  %v3792 = vpack.c.b16 %v3780, %v3779
  %v3793 = vpack.c.b16 %v3782, %v3781
  %v3794 = vpack.c.b16 %v3784, %v3783
  %v3795 = vpack.c.b16 %v3786, %v3785
  %v3796 = vpack.c.b16 %v3788, %v3787
  %3805 = vmatprep.subr.bf16.mxu0 0
  %3806 = vmatpush1.bf16.msra.mxu0 %v3796
  %3807 = vmatprep.subr.bf16.mxu0 0
  %3808 = vmatpush1.bf16.msra.mxu0 %v3795
  %3809 = vmatprep.subr.bf16.mxu0 0
  %3810 = vmatpush1.bf16.msra.mxu0 %v3794
  %3811 = vmatprep.subr.bf16.mxu0 0
  %3812 = vmatpush1.bf16.msra.mxu0 %v3793
  %3813 = vmatprep.subr.bf16.mxu0 0
  %3814 = vmatpush1.bf16.msra.mxu0 %v3792
  %3815 = vmatprep.subr.bf16.mxu0 0
  %3816 = vmatpush1.bf16.msra.mxu0 %v3791
  %3817 = vmatprep.subr.bf16.mxu0 0
  %3818 = vmatpush1.bf16.msra.mxu0 %v3790
  %3819 = vmatprep.subr.bf16.mxu0 0
  %3820 = vmatpush1.bf16.msra.mxu0 %v3789
  %3821 = vmatprep.subr.bf16.mxu0 0
  %3822 = vmatpush2.bf16.msra.mxu0 0
  %3823 = vmatprep.subr.bf16.mxu0 0
  %3824 = vmatpush2.bf16.msra.mxu0 0
  %3825 = vmatprep.subr.bf16.mxu0 0
  %3826 = vmatpush2.bf16.msra.mxu0 0
  %3827 = vmatprep.subr.bf16.mxu0 0
  %3828 = vmatpush2.bf16.msra.mxu0 0
  %3829 = vmatprep.subr.bf16.mxu0 0
  %3830 = vmatpush2.bf16.msra.mxu0 0
  %3831 = vmatprep.subr.bf16.mxu0 0
  %3832 = vmatpush2.bf16.msra.mxu0 0
  %3833 = vmatprep.subr.bf16.mxu0 0
  %3834 = vmatpush2.bf16.msra.mxu0 0
  %3835 = vmatprep.subr.bf16.mxu0 0
  %3836 = vmatpush2.bf16.msra.mxu0 0
  %3837 = vmatprep.mubr.bf16.mxu0 0
  %3838 = vmatmul.mubr.bf16.gmra.mxu0 %v3755
  %v3839 = vpop.f32.mrf.mxu0
  %v3840 = vadd.f32 0.0, %v3839
  %v3841 = vpop.f32.mrf.mxu0
  %v3842 = vpop.f32.mrf.mxu0
  %v3843 = vadd.f32 0.0, %v3842
  %v3844 = vpop.f32.mrf.mxu0
  %3845 = vdwg.mxu0
  %v3846 = vadd.f32 %v3721, %v3840
  %v3847 = vadd.f32 %v3722, %v3843
  %v3848 = vld [vmem:[%s1898] sm:$0xfe]
  %v3849 = vld [vmem:[%s1898 + $0x8] sm:$0xfe]
  %v3850 = vld [vmem:[%s1898 + $0x10] sm:$0xff]
  %v3851 = vld [vmem:[%s1898 + $0x18] sm:$0xff]
  %v3852 = vld [vmem:[%s1898 + $0x20] sm:$0x1]
  %v3853 = vld [vmem:[%s1898 + $0x28] sm:$0x1]
  %v3854 = vpack.c.bf16 %v3850, %v3848
  %v3855 = vpack.c.bf16 %v3851, %v3849
  %v3856 = vpack.c.bf16 %v3852, %v3852
  %v3857 = vpack.c.bf16 %v3853, %v3853
  %v3858 = vld [vmem:[%s2757] sm:$0xf]
  %v3859 = vld [vmem:[%s2757 + $0x4] sm:$0xf]
  %v3860 = vld [vmem:[%s2757 + $0x8] sm:$0xf]
  %v3861 = vld [vmem:[%s2757 + $0xc] sm:$0xf]
  %v3862 = vld [vmem:[%s2757 + $0x10] sm:$0xf]
  %v3863 = vld [vmem:[%s2757 + $0x14] sm:$0xf]
  %v3864 = vld [vmem:[%s2757 + $0x18] sm:$0xf]
  %v3865 = vld [vmem:[%s2757 + $0x1c] sm:$0xf]
  %v3866 = vld [vmem:[%s2757 + $0x20] sm:$0xf]
  %v3867 = vld [vmem:[%s2757 + $0x24] sm:$0xf]
  %v3868 = vld [vmem:[%s2757 + $0x28] sm:$0xf]
  %v3869 = vld [vmem:[%s2757 + $0x2c] sm:$0xf]
  %v3870 = vld [vmem:[%s2757 + $0x30] sm:$0xf]
  %v3871 = vld [vmem:[%s2757 + $0x34] sm:$0xf]
  %v3872 = vld [vmem:[%s2757 + $0x38] sm:$0xf]
  %v3873 = vld [vmem:[%s2757 + $0x3c] sm:$0xf]
  %v3875 = vshrl.u32 %v3854, 16
  %v3877 = vshll.u32 %v3854, 16
  %v3879 = vrot.slane %v3877, 1
  %v3880 = vor.u32 %v3875, %v3879
  %v3882 = vshll.u32 %v3856, 16
  %v3884 = vrot.slane %v3882, 1
  %v3885 = vsel %vm2642, %v3880, %v3884
  %v3887 = vshrl.u32 %v3855, 16
  %v3889 = vshll.u32 %v3855, 16
  %v3891 = vrot.slane %v3889, 1
  %v3892 = vor.u32 %v3887, %v3891
  %v3894 = vshll.u32 %v3857, 16
  %v3896 = vrot.slane %v3894, 1
  %v3897 = vsel %vm2642, %v3892, %v3896
  %3898 = vrot.lane.b32.xlu0 %v3885, 120
  %v3899 = vpop.permute.xlu0 %3898
  %3900 = vrot.lane.b32.xlu0 %v3897, 120
  %v3901 = vpop.permute.xlu0 %3900
  %v3902 = vsel %vm2324, %v3899, %v3901
  %v3920 = vunpack.c.l.b16 %v3858
  %v3921 = vunpack.c.l.b16 %v3859
  %v3922 = vunpack.c.l.b16 %v3860
  %v3923 = vunpack.c.l.b16 %v3861
  %v3924 = vunpack.c.l.b16 %v3862
  %v3925 = vunpack.c.l.b16 %v3863
  %v3926 = vunpack.c.l.b16 %v3864
  %v3927 = vunpack.c.l.b16 %v3865
  %v3928 = vunpack.c.l.b16 %v3866
  %v3929 = vunpack.c.l.b16 %v3867
  %v3930 = vunpack.c.l.b16 %v3868
  %v3931 = vunpack.c.l.b16 %v3869
  %v3932 = vunpack.c.l.b16 %v3870
  %v3933 = vunpack.c.l.b16 %v3871
  %v3934 = vunpack.c.l.b16 %v3872
  %v3935 = vunpack.c.l.b16 %v3873
  %v3936 = vpack.c.b16 %v3921, %v3920
  %v3937 = vpack.c.b16 %v3923, %v3922
  %v3938 = vpack.c.b16 %v3925, %v3924
  %v3939 = vpack.c.b16 %v3927, %v3926
  %v3940 = vpack.c.b16 %v3929, %v3928
  %v3941 = vpack.c.b16 %v3931, %v3930
  %v3942 = vpack.c.b16 %v3933, %v3932
  %v3943 = vpack.c.b16 %v3935, %v3934
  %3952 = vmatprep.subr.bf16.mxu0 0
  %3953 = vmatpush1.bf16.msra.mxu0 %v3943
  %3954 = vmatprep.subr.bf16.mxu0 0
  %3955 = vmatpush1.bf16.msra.mxu0 %v3942
  %3956 = vmatprep.subr.bf16.mxu0 0
  %3957 = vmatpush1.bf16.msra.mxu0 %v3941
  %3958 = vmatprep.subr.bf16.mxu0 0
  %3959 = vmatpush1.bf16.msra.mxu0 %v3940
  %3960 = vmatprep.subr.bf16.mxu0 0
  %3961 = vmatpush1.bf16.msra.mxu0 %v3939
  %3962 = vmatprep.subr.bf16.mxu0 0
  %3963 = vmatpush1.bf16.msra.mxu0 %v3938
  %3964 = vmatprep.subr.bf16.mxu0 0
  %3965 = vmatpush1.bf16.msra.mxu0 %v3937
  %3966 = vmatprep.subr.bf16.mxu0 0
  %3967 = vmatpush1.bf16.msra.mxu0 %v3936
  %3968 = vmatprep.subr.bf16.mxu0 0
  %3969 = vmatpush2.bf16.msra.mxu0 0
  %3970 = vmatprep.subr.bf16.mxu0 0
  %3971 = vmatpush2.bf16.msra.mxu0 0
  %3972 = vmatprep.subr.bf16.mxu0 0
  %3973 = vmatpush2.bf16.msra.mxu0 0
  %3974 = vmatprep.subr.bf16.mxu0 0
  %3975 = vmatpush2.bf16.msra.mxu0 0
  %3976 = vmatprep.subr.bf16.mxu0 0
  %3977 = vmatpush2.bf16.msra.mxu0 0
  %3978 = vmatprep.subr.bf16.mxu0 0
  %3979 = vmatpush2.bf16.msra.mxu0 0
  %3980 = vmatprep.subr.bf16.mxu0 0
  %3981 = vmatpush2.bf16.msra.mxu0 0
  %3982 = vmatprep.subr.bf16.mxu0 0
  %3983 = vmatpush2.bf16.msra.mxu0 0
  %3984 = vmatprep.mubr.bf16.mxu0 0
  %3985 = vmatmul.mubr.bf16.gmra.mxu0 %v3902
  %v3986 = vpop.f32.mrf.mxu0
  %v3987 = vadd.f32 0.0, %v3986
  %v3988 = vpop.f32.mrf.mxu0
  %v3989 = vpop.f32.mrf.mxu0
  %v3990 = vadd.f32 0.0, %v3989
  %v3991 = vpop.f32.mrf.mxu0
  %3992 = vdwg.mxu0
  %v3993 = vadd.f32 %v3846, %v3987
  %v3994 = vadd.f32 %v3847, %v3990
  %v3995 = vld [vmem:[%s2895] sm:$0xf]
  %v3996 = vld [vmem:[%s2895 + $0x4] sm:$0xf]
  %v3997 = vld [vmem:[%s2895 + $0x8] sm:$0xf]
  %v3998 = vld [vmem:[%s2895 + $0xc] sm:$0xf]
  %v3999 = vld [vmem:[%s2895 + $0x10] sm:$0xf]
  %v4000 = vld [vmem:[%s2895 + $0x14] sm:$0xf]
  %v4001 = vld [vmem:[%s2895 + $0x18] sm:$0xf]
  %v4002 = vld [vmem:[%s2895 + $0x1c] sm:$0xf]
  %v4003 = vld [vmem:[%s2895 + $0x20] sm:$0xf]
  %v4004 = vld [vmem:[%s2895 + $0x24] sm:$0xf]
  %v4005 = vld [vmem:[%s2895 + $0x28] sm:$0xf]
  %v4006 = vld [vmem:[%s2895 + $0x2c] sm:$0xf]
  %v4007 = vld [vmem:[%s2895 + $0x30] sm:$0xf]
  %v4008 = vld [vmem:[%s2895 + $0x34] sm:$0xf]
  %v4009 = vld [vmem:[%s2895 + $0x38] sm:$0xf]
  %v4010 = vld [vmem:[%s2895 + $0x3c] sm:$0xf]
  %4011 = vrot.lane.b32.xlu0 %v3885, 112
  %v4012 = vpop.permute.xlu0 %4011
  %4013 = vrot.lane.b32.xlu0 %v3897, 112
  %v4014 = vpop.permute.xlu0 %4013
  %v4015 = vsel %vm2526, %v4012, %v4014
  %v4033 = vunpack.c.l.b16 %v3995
  %v4034 = vunpack.c.l.b16 %v3996
  %v4035 = vunpack.c.l.b16 %v3997
  %v4036 = vunpack.c.l.b16 %v3998
  %v4037 = vunpack.c.l.b16 %v3999
  %v4038 = vunpack.c.l.b16 %v4000
  %v4039 = vunpack.c.l.b16 %v4001
  %v4040 = vunpack.c.l.b16 %v4002
  %v4041 = vunpack.c.l.b16 %v4003
  %v4042 = vunpack.c.l.b16 %v4004
  %v4043 = vunpack.c.l.b16 %v4005
  %v4044 = vunpack.c.l.b16 %v4006
  %v4045 = vunpack.c.l.b16 %v4007
  %v4046 = vunpack.c.l.b16 %v4008
  %v4047 = vunpack.c.l.b16 %v4009
  %v4048 = vunpack.c.l.b16 %v4010
  %v4049 = vpack.c.b16 %v4034, %v4033
  %v4050 = vpack.c.b16 %v4036, %v4035
  %v4051 = vpack.c.b16 %v4038, %v4037
  %v4052 = vpack.c.b16 %v4040, %v4039
  %v4053 = vpack.c.b16 %v4042, %v4041
  %v4054 = vpack.c.b16 %v4044, %v4043
  %v4055 = vpack.c.b16 %v4046, %v4045
  %v4056 = vpack.c.b16 %v4048, %v4047
  %4065 = vmatprep.subr.bf16.mxu0 0
  %4066 = vmatpush1.bf16.msra.mxu0 %v4056
  %4067 = vmatprep.subr.bf16.mxu0 0
  %4068 = vmatpush1.bf16.msra.mxu0 %v4055
  %4069 = vmatprep.subr.bf16.mxu0 0
  %4070 = vmatpush1.bf16.msra.mxu0 %v4054
  %4071 = vmatprep.subr.bf16.mxu0 0
  %4072 = vmatpush1.bf16.msra.mxu0 %v4053
  %4073 = vmatprep.subr.bf16.mxu0 0
  %4074 = vmatpush1.bf16.msra.mxu0 %v4052
  %4075 = vmatprep.subr.bf16.mxu0 0
  %4076 = vmatpush1.bf16.msra.mxu0 %v4051
  %4077 = vmatprep.subr.bf16.mxu0 0
  %4078 = vmatpush1.bf16.msra.mxu0 %v4050
  %4079 = vmatprep.subr.bf16.mxu0 0
  %4080 = vmatpush1.bf16.msra.mxu0 %v4049
  %4081 = vmatprep.subr.bf16.mxu0 0
  %4082 = vmatpush2.bf16.msra.mxu0 0
  %4083 = vmatprep.subr.bf16.mxu0 0
  %4084 = vmatpush2.bf16.msra.mxu0 0
  %4085 = vmatprep.subr.bf16.mxu0 0
  %4086 = vmatpush2.bf16.msra.mxu0 0
  %4087 = vmatprep.subr.bf16.mxu0 0
  %4088 = vmatpush2.bf16.msra.mxu0 0
  %4089 = vmatprep.subr.bf16.mxu0 0
  %4090 = vmatpush2.bf16.msra.mxu0 0
  %4091 = vmatprep.subr.bf16.mxu0 0
  %4092 = vmatpush2.bf16.msra.mxu0 0
  %4093 = vmatprep.subr.bf16.mxu0 0
  %4094 = vmatpush2.bf16.msra.mxu0 0
  %4095 = vmatprep.subr.bf16.mxu0 0
  %4096 = vmatpush2.bf16.msra.mxu0 0
  %4097 = vmatprep.mubr.bf16.mxu0 0
  %4098 = vmatmul.mubr.bf16.gmra.mxu0 %v4015
  %v4099 = vpop.f32.mrf.mxu0
  %v4100 = vadd.f32 0.0, %v4099
  %v4101 = vpop.f32.mrf.mxu0
  %v4102 = vpop.f32.mrf.mxu0
  %v4103 = vadd.f32 0.0, %v4102
  %v4104 = vpop.f32.mrf.mxu0
  %4105 = vdwg.mxu0
  %v4106 = vadd.f32 %v3993, %v4100
  %v4107 = vadd.f32 %v3994, %v4103
  %v4108 = vld [vmem:[%s1898] sm:$0xfc]
  %v4109 = vld [vmem:[%s1898 + $0x20] sm:$0x3]
  %v4110 = vpack.c.bf16 %v3724, %v4108
  %v4111 = vpack.c.bf16 %v4109, %v4109
  %v4112 = vld [vmem:[%s3013] sm:$0xf]
  %v4113 = vld [vmem:[%s3013 + $0x4] sm:$0xf]
  %v4114 = vld [vmem:[%s3013 + $0x8] sm:$0xf]
  %v4115 = vld [vmem:[%s3013 + $0xc] sm:$0xf]
  %v4116 = vld [vmem:[%s3013 + $0x10] sm:$0xf]
  %v4117 = vld [vmem:[%s3013 + $0x14] sm:$0xf]
  %v4118 = vld [vmem:[%s3013 + $0x18] sm:$0xf]
  %v4119 = vld [vmem:[%s3013 + $0x1c] sm:$0xf]
  %v4120 = vld [vmem:[%s3013 + $0x20] sm:$0xf]
  %v4121 = vld [vmem:[%s3013 + $0x24] sm:$0xf]
  %v4122 = vld [vmem:[%s3013 + $0x28] sm:$0xf]
  %v4123 = vld [vmem:[%s3013 + $0x2c] sm:$0xf]
  %v4124 = vld [vmem:[%s3013 + $0x30] sm:$0xf]
  %v4125 = vld [vmem:[%s3013 + $0x34] sm:$0xf]
  %v4126 = vld [vmem:[%s3013 + $0x38] sm:$0xf]
  %v4127 = vld [vmem:[%s3013 + $0x3c] sm:$0xf]
  %v4130 = vrot.slane %v4110, 1
  %v4131 = vrot.slane %v4111, 1
  %v4132 = vsel %vm3032, %v4130, %v4131
  %v4150 = vunpack.c.l.b16 %v4112
  %v4151 = vunpack.c.l.b16 %v4113
  %v4152 = vunpack.c.l.b16 %v4114
  %v4153 = vunpack.c.l.b16 %v4115
  %v4154 = vunpack.c.l.b16 %v4116
  %v4155 = vunpack.c.l.b16 %v4117
  %v4156 = vunpack.c.l.b16 %v4118
  %v4157 = vunpack.c.l.b16 %v4119
  %v4158 = vunpack.c.l.b16 %v4120
  %v4159 = vunpack.c.l.b16 %v4121
  %v4160 = vunpack.c.l.b16 %v4122
  %v4161 = vunpack.c.l.b16 %v4123
  %v4162 = vunpack.c.l.b16 %v4124
  %v4163 = vunpack.c.l.b16 %v4125
  %v4164 = vunpack.c.l.b16 %v4126
  %v4165 = vunpack.c.l.b16 %v4127
  %v4166 = vpack.c.b16 %v4151, %v4150
  %v4167 = vpack.c.b16 %v4153, %v4152
  %v4168 = vpack.c.b16 %v4155, %v4154
  %v4169 = vpack.c.b16 %v4157, %v4156
  %v4170 = vpack.c.b16 %v4159, %v4158
  %v4171 = vpack.c.b16 %v4161, %v4160
  %v4172 = vpack.c.b16 %v4163, %v4162
  %v4173 = vpack.c.b16 %v4165, %v4164
  %4182 = vmatprep.subr.bf16.mxu0 0
  %4183 = vmatpush1.bf16.msra.mxu0 %v4173
  %4184 = vmatprep.subr.bf16.mxu0 0
  %4185 = vmatpush1.bf16.msra.mxu0 %v4172
  %4186 = vmatprep.subr.bf16.mxu0 0
  %4187 = vmatpush1.bf16.msra.mxu0 %v4171
  %4188 = vmatprep.subr.bf16.mxu0 0
  %4189 = vmatpush1.bf16.msra.mxu0 %v4170
  %4190 = vmatprep.subr.bf16.mxu0 0
  %4191 = vmatpush1.bf16.msra.mxu0 %v4169
  %4192 = vmatprep.subr.bf16.mxu0 0
  %4193 = vmatpush1.bf16.msra.mxu0 %v4168
  %4194 = vmatprep.subr.bf16.mxu0 0
  %4195 = vmatpush1.bf16.msra.mxu0 %v4167
  %4196 = vmatprep.subr.bf16.mxu0 0
  %4197 = vmatpush1.bf16.msra.mxu0 %v4166
  %4198 = vmatprep.subr.bf16.mxu0 0
  %4199 = vmatpush2.bf16.msra.mxu0 0
  %4200 = vmatprep.subr.bf16.mxu0 0
  %4201 = vmatpush2.bf16.msra.mxu0 0
  %4202 = vmatprep.subr.bf16.mxu0 0
  %4203 = vmatpush2.bf16.msra.mxu0 0
  %4204 = vmatprep.subr.bf16.mxu0 0
  %4205 = vmatpush2.bf16.msra.mxu0 0
  %4206 = vmatprep.subr.bf16.mxu0 0
  %4207 = vmatpush2.bf16.msra.mxu0 0
  %4208 = vmatprep.subr.bf16.mxu0 0
  %4209 = vmatpush2.bf16.msra.mxu0 0
  %4210 = vmatprep.subr.bf16.mxu0 0
  %4211 = vmatpush2.bf16.msra.mxu0 0
  %4212 = vmatprep.subr.bf16.mxu0 0
  %4213 = vmatpush2.bf16.msra.mxu0 0
  %4214 = vmatprep.mubr.bf16.mxu0 0
  %4215 = vmatmul.mubr.bf16.gmra.mxu0 %v4132
  %v4216 = vpop.f32.mrf.mxu0
  %v4217 = vadd.f32 0.0, %v4216
  %v4218 = vpop.f32.mrf.mxu0
  %v4219 = vpop.f32.mrf.mxu0
  %v4220 = vadd.f32 0.0, %v4219
  %v4221 = vpop.f32.mrf.mxu0
  %4222 = vdwg.mxu0
  %v4223 = vadd.f32 %v4106, %v4217
  %v4224 = vadd.f32 %v4107, %v4220
  %v4225 = vld [vmem:[%s1898] sm:$0xfc]
  %v4226 = vld [vmem:[%s1898 + $0x8] sm:$0xfc]
  %v4227 = vld [vmem:[%s1898 + $0x20] sm:$0x3]
  %v4228 = vld [vmem:[%s1898 + $0x28] sm:$0x3]
  %v4229 = vpack.c.bf16 %v3850, %v4225
  %v4230 = vpack.c.bf16 %v3851, %v4226
  %v4231 = vpack.c.bf16 %v4227, %v4227
  %v4232 = vpack.c.bf16 %v4228, %v4228
  %v4233 = vld [vmem:[%s3136] sm:$0xf]
  %v4234 = vld [vmem:[%s3136 + $0x4] sm:$0xf]
  %v4235 = vld [vmem:[%s3136 + $0x8] sm:$0xf]
  %v4236 = vld [vmem:[%s3136 + $0xc] sm:$0xf]
  %v4237 = vld [vmem:[%s3136 + $0x10] sm:$0xf]
  %v4238 = vld [vmem:[%s3136 + $0x14] sm:$0xf]
  %v4239 = vld [vmem:[%s3136 + $0x18] sm:$0xf]
  %v4240 = vld [vmem:[%s3136 + $0x1c] sm:$0xf]
  %v4241 = vld [vmem:[%s3136 + $0x20] sm:$0xf]
  %v4242 = vld [vmem:[%s3136 + $0x24] sm:$0xf]
  %v4243 = vld [vmem:[%s3136 + $0x28] sm:$0xf]
  %v4244 = vld [vmem:[%s3136 + $0x2c] sm:$0xf]
  %v4245 = vld [vmem:[%s3136 + $0x30] sm:$0xf]
  %v4246 = vld [vmem:[%s3136 + $0x34] sm:$0xf]
  %v4247 = vld [vmem:[%s3136 + $0x38] sm:$0xf]
  %v4248 = vld [vmem:[%s3136 + $0x3c] sm:$0xf]
  %v4253 = vrot.slane %v4229, 1
  %v4254 = vrot.slane %v4231, 1
  %v4255 = vsel %vm3032, %v4253, %v4254
  %v4256 = vrot.slane %v4230, 1
  %v4257 = vrot.slane %v4232, 1
  %v4258 = vsel %vm3032, %v4256, %v4257
  %4259 = vrot.lane.b32.xlu0 %v4255, 120
  %v4260 = vpop.permute.xlu0 %4259
  %4261 = vrot.lane.b32.xlu0 %v4258, 120
  %v4262 = vpop.permute.xlu0 %4261
  %v4263 = vsel %vm2324, %v4260, %v4262
  %v4281 = vunpack.c.l.b16 %v4233
  %v4282 = vunpack.c.l.b16 %v4234
  %v4283 = vunpack.c.l.b16 %v4235
  %v4284 = vunpack.c.l.b16 %v4236
  %v4285 = vunpack.c.l.b16 %v4237
  %v4286 = vunpack.c.l.b16 %v4238
  %v4287 = vunpack.c.l.b16 %v4239
  %v4288 = vunpack.c.l.b16 %v4240
  %v4289 = vunpack.c.l.b16 %v4241
  %v4290 = vunpack.c.l.b16 %v4242
  %v4291 = vunpack.c.l.b16 %v4243
  %v4292 = vunpack.c.l.b16 %v4244
  %v4293 = vunpack.c.l.b16 %v4245
  %v4294 = vunpack.c.l.b16 %v4246
  %v4295 = vunpack.c.l.b16 %v4247
  %v4296 = vunpack.c.l.b16 %v4248
  %v4297 = vpack.c.b16 %v4282, %v4281
  %v4298 = vpack.c.b16 %v4284, %v4283
  %v4299 = vpack.c.b16 %v4286, %v4285
  %v4300 = vpack.c.b16 %v4288, %v4287
  %v4301 = vpack.c.b16 %v4290, %v4289
  %v4302 = vpack.c.b16 %v4292, %v4291
  %v4303 = vpack.c.b16 %v4294, %v4293
  %v4304 = vpack.c.b16 %v4296, %v4295
  %4313 = vmatprep.subr.bf16.mxu0 0
  %4314 = vmatpush1.bf16.msra.mxu0 %v4304
  %4315 = vmatprep.subr.bf16.mxu0 0
  %4316 = vmatpush1.bf16.msra.mxu0 %v4303
  %4317 = vmatprep.subr.bf16.mxu0 0
  %4318 = vmatpush1.bf16.msra.mxu0 %v4302
  %4319 = vmatprep.subr.bf16.mxu0 0
  %4320 = vmatpush1.bf16.msra.mxu0 %v4301
  %4321 = vmatprep.subr.bf16.mxu0 0
  %4322 = vmatpush1.bf16.msra.mxu0 %v4300
  %4323 = vmatprep.subr.bf16.mxu0 0
  %4324 = vmatpush1.bf16.msra.mxu0 %v4299
  %4325 = vmatprep.subr.bf16.mxu0 0
  %4326 = vmatpush1.bf16.msra.mxu0 %v4298
  %4327 = vmatprep.subr.bf16.mxu0 0
  %4328 = vmatpush1.bf16.msra.mxu0 %v4297
  %4329 = vmatprep.subr.bf16.mxu0 0
  %4330 = vmatpush2.bf16.msra.mxu0 0
  %4331 = vmatprep.subr.bf16.mxu0 0
  %4332 = vmatpush2.bf16.msra.mxu0 0
  %4333 = vmatprep.subr.bf16.mxu0 0
  %4334 = vmatpush2.bf16.msra.mxu0 0
  %4335 = vmatprep.subr.bf16.mxu0 0
  %4336 = vmatpush2.bf16.msra.mxu0 0
  %4337 = vmatprep.subr.bf16.mxu0 0
  %4338 = vmatpush2.bf16.msra.mxu0 0
  %4339 = vmatprep.subr.bf16.mxu0 0
  %4340 = vmatpush2.bf16.msra.mxu0 0
  %4341 = vmatprep.subr.bf16.mxu0 0
  %4342 = vmatpush2.bf16.msra.mxu0 0
  %4343 = vmatprep.subr.bf16.mxu0 0
  %4344 = vmatpush2.bf16.msra.mxu0 0
  %4345 = vmatprep.mubr.bf16.mxu0 0
  %4346 = vmatmul.mubr.bf16.gmra.mxu0 %v4263
  %v4347 = vpop.f32.mrf.mxu0
  %v4348 = vadd.f32 0.0, %v4347
  %v4349 = vpop.f32.mrf.mxu0
  %v4350 = vpop.f32.mrf.mxu0
  %v4351 = vadd.f32 0.0, %v4350
  %v4352 = vpop.f32.mrf.mxu0
  %4353 = vdwg.mxu0
  %v4354 = vadd.f32 %v4223, %v4348
  %v4355 = vadd.f32 %v4224, %v4351
  %v4356 = vld [vmem:[%s3260] sm:$0xf]
  %v4357 = vld [vmem:[%s3260 + $0x4] sm:$0xf]
  %v4358 = vld [vmem:[%s3260 + $0x8] sm:$0xf]
  %v4359 = vld [vmem:[%s3260 + $0xc] sm:$0xf]
  %v4360 = vld [vmem:[%s3260 + $0x10] sm:$0xf]
  %v4361 = vld [vmem:[%s3260 + $0x14] sm:$0xf]
  %v4362 = vld [vmem:[%s3260 + $0x18] sm:$0xf]
  %v4363 = vld [vmem:[%s3260 + $0x1c] sm:$0xf]
  %v4364 = vld [vmem:[%s3260 + $0x20] sm:$0xf]
  %v4365 = vld [vmem:[%s3260 + $0x24] sm:$0xf]
  %v4366 = vld [vmem:[%s3260 + $0x28] sm:$0xf]
  %v4367 = vld [vmem:[%s3260 + $0x2c] sm:$0xf]
  %v4368 = vld [vmem:[%s3260 + $0x30] sm:$0xf]
  %v4369 = vld [vmem:[%s3260 + $0x34] sm:$0xf]
  %v4370 = vld [vmem:[%s3260 + $0x38] sm:$0xf]
  %v4371 = vld [vmem:[%s3260 + $0x3c] sm:$0xf]
  %4372 = vrot.lane.b32.xlu0 %v4255, 112
  %v4373 = vpop.permute.xlu0 %4372
  %4374 = vrot.lane.b32.xlu0 %v4258, 112
  %v4375 = vpop.permute.xlu0 %4374
  %v4376 = vsel %vm2526, %v4373, %v4375
  %v4394 = vunpack.c.l.b16 %v4356
  %v4395 = vunpack.c.l.b16 %v4357
  %v4396 = vunpack.c.l.b16 %v4358
  %v4397 = vunpack.c.l.b16 %v4359
  %v4398 = vunpack.c.l.b16 %v4360
  %v4399 = vunpack.c.l.b16 %v4361
  %v4400 = vunpack.c.l.b16 %v4362
  %v4401 = vunpack.c.l.b16 %v4363
  %v4402 = vunpack.c.l.b16 %v4364
  %v4403 = vunpack.c.l.b16 %v4365
  %v4404 = vunpack.c.l.b16 %v4366
  %v4405 = vunpack.c.l.b16 %v4367
  %v4406 = vunpack.c.l.b16 %v4368
  %v4407 = vunpack.c.l.b16 %v4369
  %v4408 = vunpack.c.l.b16 %v4370
  %v4409 = vunpack.c.l.b16 %v4371
  %v4410 = vpack.c.b16 %v4395, %v4394
  %v4411 = vpack.c.b16 %v4397, %v4396
  %v4412 = vpack.c.b16 %v4399, %v4398
  %v4413 = vpack.c.b16 %v4401, %v4400
  %v4414 = vpack.c.b16 %v4403, %v4402
  %v4415 = vpack.c.b16 %v4405, %v4404
  %v4416 = vpack.c.b16 %v4407, %v4406
  %v4417 = vpack.c.b16 %v4409, %v4408
  %4426 = vmatprep.subr.bf16.mxu0 0
  %4427 = vmatpush1.bf16.msra.mxu0 %v4417
  %4428 = vmatprep.subr.bf16.mxu0 0
  %4429 = vmatpush1.bf16.msra.mxu0 %v4416
  %4430 = vmatprep.subr.bf16.mxu0 0
  %4431 = vmatpush1.bf16.msra.mxu0 %v4415
  %4432 = vmatprep.subr.bf16.mxu0 0
  %4433 = vmatpush1.bf16.msra.mxu0 %v4414
  %4434 = vmatprep.subr.bf16.mxu0 0
  %4435 = vmatpush1.bf16.msra.mxu0 %v4413
  %4436 = vmatprep.subr.bf16.mxu0 0
  %4437 = vmatpush1.bf16.msra.mxu0 %v4412
  %4438 = vmatprep.subr.bf16.mxu0 0
  %4439 = vmatpush1.bf16.msra.mxu0 %v4411
  %4440 = vmatprep.subr.bf16.mxu0 0
  %4441 = vmatpush1.bf16.msra.mxu0 %v4410
  %4442 = vmatprep.subr.bf16.mxu0 0
  %4443 = vmatpush2.bf16.msra.mxu0 0
  %4444 = vmatprep.subr.bf16.mxu0 0
  %4445 = vmatpush2.bf16.msra.mxu0 0
  %4446 = vmatprep.subr.bf16.mxu0 0
  %4447 = vmatpush2.bf16.msra.mxu0 0
  %4448 = vmatprep.subr.bf16.mxu0 0
  %4449 = vmatpush2.bf16.msra.mxu0 0
  %4450 = vmatprep.subr.bf16.mxu0 0
  %4451 = vmatpush2.bf16.msra.mxu0 0
  %4452 = vmatprep.subr.bf16.mxu0 0
  %4453 = vmatpush2.bf16.msra.mxu0 0
  %4454 = vmatprep.subr.bf16.mxu0 0
  %4455 = vmatpush2.bf16.msra.mxu0 0
  %4456 = vmatprep.subr.bf16.mxu0 0
  %4457 = vmatpush2.bf16.msra.mxu0 0
  %4458 = vmatprep.mubr.bf16.mxu0 0
  %4459 = vmatmul.mubr.bf16.gmra.mxu0 %v4376
  %v4460 = vpop.f32.mrf.mxu0
  %v4461 = vadd.f32 0.0, %v4460
  %v4462 = vpop.f32.mrf.mxu0
  %v4463 = vpop.f32.mrf.mxu0
  %v4464 = vadd.f32 0.0, %v4463
  %v4465 = vpop.f32.mrf.mxu0
  %4466 = vdwg.mxu0
  %v4467 = vadd.f32 %v4354, %v4461
  %v4468 = vadd.f32 %v4355, %v4464
  %v4469 = vadd.f32 %v4467, %v3378
  %v4470 = vadd.f32 %v4468, %v3378
  %4471 = vmatprep.subr.mxu0 0.0
  %4472 = vmatpush1.msra.mxu0 0.0
  %4473 = vmatprep.subr.mxu0 0.0
  %4474 = vmatpush1.msra.mxu0 0.0
  %4475 = vmatprep.subr.mxu0 0.0
  %4476 = vmatpush1.msra.mxu0 0.0
  %4477 = vmatprep.subr.mxu0 0.0
  %4478 = vmatpush1.msra.mxu0 0.0
  %4479 = vmatprep.subr.mxu0 0.0
  %4480 = vmatpush1.msra.mxu0 0.0
  %4481 = vmatprep.subr.mxu0 0.0
  %4482 = vmatpush1.msra.mxu0 0.0
  %4483 = vmatprep.subr.mxu0 0.0
  %4484 = vmatpush1.msra.mxu0 0.0
  %4485 = vmatprep.subr.mxu0 0.0
  %4486 = vmatpush1.msra.mxu0 0.0
  %4487 = vmatprep.subr.mxu0 0.0
  %4488 = vmatpush1.msra.mxu0 0.0
  %4489 = vmatprep.subr.mxu0 0.0
  %4490 = vmatpush1.msra.mxu0 0.0
  %4491 = vmatprep.subr.mxu0 0.0
  %4492 = vmatpush1.msra.mxu0 0.0
  %4493 = vmatprep.subr.mxu0 0.0
  %4494 = vmatpush1.msra.mxu0 0.0
  %4495 = vmatprep.subr.mxu0 0.0
  %4496 = vmatpush1.msra.mxu0 0.0
  %4497 = vmatprep.subr.mxu0 0.0
  %4498 = vmatpush1.msra.mxu0 0.0
  %4499 = vmatprep.subr.mxu0 0.0
  %4500 = vmatpush1.msra.mxu0 %v4470
  %4501 = vmatprep.subr.mxu0 0.0
  %4502 = vmatpush1.msra.mxu0 %v4469
  %4503 = vmatprep.subr.mxu0 0.0
  %4504 = vmatpush2.msra.mxu0 0.0
  %4505 = vmatprep.subr.mxu0 0.0
  %4506 = vmatpush2.msra.mxu0 0.0
  %4507 = vmatprep.subr.mxu0 0.0
  %4508 = vmatpush2.msra.mxu0 0.0
  %4509 = vmatprep.subr.mxu0 0.0
  %4510 = vmatpush2.msra.mxu0 0.0
  %4511 = vmatprep.subr.mxu0 0.0
  %4512 = vmatpush2.msra.mxu0 0.0
  %4513 = vmatprep.subr.mxu0 0.0
  %4514 = vmatpush2.msra.mxu0 0.0
  %4515 = vmatprep.subr.mxu0 0.0
  %4516 = vmatpush2.msra.mxu0 0.0
  %4517 = vmatprep.subr.mxu0 0.0
  %4518 = vmatpush2.msra.mxu0 0.0
  %4519 = vmatprep.subr.mxu0 0.0
  %4520 = vmatpush2.msra.mxu0 0.0
  %4521 = vmatprep.subr.mxu0 0.0
  %4522 = vmatpush2.msra.mxu0 0.0
  %4523 = vmatprep.subr.mxu0 0.0
  %4524 = vmatpush2.msra.mxu0 0.0
  %4525 = vmatprep.subr.mxu0 0.0
  %4526 = vmatpush2.msra.mxu0 0.0
  %4527 = vmatprep.subr.mxu0 0.0
  %4528 = vmatpush2.msra.mxu0 0.0
  %4529 = vmatprep.subr.mxu0 0.0
  %4530 = vmatpush2.msra.mxu0 0.0
  %4531 = vmatprep.subr.mxu0 0.0
  %4532 = vmatpush2.msra.mxu0 0.0
  %4533 = vmatprep.subr.mxu0 0.0
  %4534 = vmatpush2.msra.mxu0 0.0
  %4535 = vmatprep.mubr.f32.mxu0 0.0
  %4536 = vmatmul.mubr.f32.gmra.mxu0 %v1600
  %v4537 = vpop.f32.mrf.mxu0
  %v4538 = vadd.f32 0.0, %v4537
  %v4539 = vpop.f32.mrf.mxu0
  %4540 = vdwg.mxu0
  %4541 = vmatprep.subr.mxu0 0.0
  %4542 = vmatpush1.msra.mxu0 0.0
  %4543 = vmatprep.subr.mxu0 0.0
  %4544 = vmatpush1.msra.mxu0 0.0
  %4545 = vmatprep.subr.mxu0 0.0
  %4546 = vmatpush1.msra.mxu0 0.0
  %4547 = vmatprep.subr.mxu0 0.0
  %4548 = vmatpush1.msra.mxu0 0.0
  %4549 = vmatprep.subr.mxu0 0.0
  %4550 = vmatpush1.msra.mxu0 0.0
  %4551 = vmatprep.subr.mxu0 0.0
  %4552 = vmatpush1.msra.mxu0 0.0
  %4553 = vmatprep.subr.mxu0 0.0
  %4554 = vmatpush1.msra.mxu0 0.0
  %4555 = vmatprep.subr.mxu0 0.0
  %4556 = vmatpush1.msra.mxu0 0.0
  %4557 = vmatprep.subr.mxu0 0.0
  %4558 = vmatpush1.msra.mxu0 0.0
  %4559 = vmatprep.subr.mxu0 0.0
  %4560 = vmatpush1.msra.mxu0 0.0
  %4561 = vmatprep.subr.mxu0 0.0
  %4562 = vmatpush1.msra.mxu0 0.0
  %4563 = vmatprep.subr.mxu0 0.0
  %4564 = vmatpush1.msra.mxu0 0.0
  %4565 = vmatprep.subr.mxu0 0.0
  %4566 = vmatpush1.msra.mxu0 0.0
  %4567 = vmatprep.subr.mxu0 0.0
  %4568 = vmatpush1.msra.mxu0 0.0
  %4569 = vmatprep.subr.mxu0 0.0
  %4570 = vmatpush1.msra.mxu0 %v3381
  %4571 = vmatprep.subr.mxu0 0.0
  %4572 = vmatpush1.msra.mxu0 %v3380
  %4573 = vmatprep.subr.mxu0 0.0
  %4574 = vmatpush2.msra.mxu0 0.0
  %4575 = vmatprep.subr.mxu0 0.0
  %4576 = vmatpush2.msra.mxu0 0.0
  %4577 = vmatprep.subr.mxu0 0.0
  %4578 = vmatpush2.msra.mxu0 0.0
  %4579 = vmatprep.subr.mxu0 0.0
  %4580 = vmatpush2.msra.mxu0 0.0
  %4581 = vmatprep.subr.mxu0 0.0
  %4582 = vmatpush2.msra.mxu0 0.0
  %4583 = vmatprep.subr.mxu0 0.0
  %4584 = vmatpush2.msra.mxu0 0.0
  %4585 = vmatprep.subr.mxu0 0.0
  %4586 = vmatpush2.msra.mxu0 0.0
  %4587 = vmatprep.subr.mxu0 0.0
  %4588 = vmatpush2.msra.mxu0 0.0
  %4589 = vmatprep.subr.mxu0 0.0
  %4590 = vmatpush2.msra.mxu0 0.0
  %4591 = vmatprep.subr.mxu0 0.0
  %4592 = vmatpush2.msra.mxu0 0.0
  %4593 = vmatprep.subr.mxu0 0.0
  %4594 = vmatpush2.msra.mxu0 0.0
  %4595 = vmatprep.subr.mxu0 0.0
  %4596 = vmatpush2.msra.mxu0 0.0
  %4597 = vmatprep.subr.mxu0 0.0
  %4598 = vmatpush2.msra.mxu0 0.0
  %4599 = vmatprep.subr.mxu0 0.0
  %4600 = vmatpush2.msra.mxu0 0.0
  %4601 = vmatprep.subr.mxu0 0.0
  %4602 = vmatpush2.msra.mxu0 0.0
  %4603 = vmatprep.subr.mxu0 0.0
  %4604 = vmatpush2.msra.mxu0 0.0
  %4605 = vmatprep.mubr.f32.mxu0 0.0
  %4606 = vmatmul.mubr.f32.gmra.mxu0 %v1600
  %v4607 = vpop.f32.mrf.mxu0
  %v4608 = vadd.f32 %v4538, %v4607
  %v4609 = vpop.f32.mrf.mxu0
  %4610 = vdwg.mxu0
  %v4611 = vmul.f32 %v4469, %v4469
  %v4612 = vmul.f32 %v4470, %v4470
  %4613 = vmatprep.subr.mxu0 0.0
  %4614 = vmatpush1.msra.mxu0 0.0
  %4615 = vmatprep.subr.mxu0 0.0
  %4616 = vmatpush1.msra.mxu0 0.0
  %4617 = vmatprep.subr.mxu0 0.0
  %4618 = vmatpush1.msra.mxu0 0.0
  %4619 = vmatprep.subr.mxu0 0.0
  %4620 = vmatpush1.msra.mxu0 0.0
  %4621 = vmatprep.subr.mxu0 0.0
  %4622 = vmatpush1.msra.mxu0 0.0
  %4623 = vmatprep.subr.mxu0 0.0
  %4624 = vmatpush1.msra.mxu0 0.0
  %4625 = vmatprep.subr.mxu0 0.0
  %4626 = vmatpush1.msra.mxu0 0.0
  %4627 = vmatprep.subr.mxu0 0.0
  %4628 = vmatpush1.msra.mxu0 0.0
  %4629 = vmatprep.subr.mxu0 0.0
  %4630 = vmatpush1.msra.mxu0 0.0
  %4631 = vmatprep.subr.mxu0 0.0
  %4632 = vmatpush1.msra.mxu0 0.0
  %4633 = vmatprep.subr.mxu0 0.0
  %4634 = vmatpush1.msra.mxu0 0.0
  %4635 = vmatprep.subr.mxu0 0.0
  %4636 = vmatpush1.msra.mxu0 0.0
  %4637 = vmatprep.subr.mxu0 0.0
  %4638 = vmatpush1.msra.mxu0 0.0
  %4639 = vmatprep.subr.mxu0 0.0
  %4640 = vmatpush1.msra.mxu0 0.0
  %4641 = vmatprep.subr.mxu0 0.0
  %4642 = vmatpush1.msra.mxu0 %v4612
  %4643 = vmatprep.subr.mxu0 0.0
  %4644 = vmatpush1.msra.mxu0 %v4611
  %4645 = vmatprep.subr.mxu0 0.0
  %4646 = vmatpush2.msra.mxu0 0.0
  %4647 = vmatprep.subr.mxu0 0.0
  %4648 = vmatpush2.msra.mxu0 0.0
  %4649 = vmatprep.subr.mxu0 0.0
  %4650 = vmatpush2.msra.mxu0 0.0
  %4651 = vmatprep.subr.mxu0 0.0
  %4652 = vmatpush2.msra.mxu0 0.0
  %4653 = vmatprep.subr.mxu0 0.0
  %4654 = vmatpush2.msra.mxu0 0.0
  %4655 = vmatprep.subr.mxu0 0.0
  %4656 = vmatpush2.msra.mxu0 0.0
  %4657 = vmatprep.subr.mxu0 0.0
  %4658 = vmatpush2.msra.mxu0 0.0
  %4659 = vmatprep.subr.mxu0 0.0
  %4660 = vmatpush2.msra.mxu0 0.0
  %4661 = vmatprep.subr.mxu0 0.0
  %4662 = vmatpush2.msra.mxu0 0.0
  %4663 = vmatprep.subr.mxu0 0.0
  %4664 = vmatpush2.msra.mxu0 0.0
  %4665 = vmatprep.subr.mxu0 0.0
  %4666 = vmatpush2.msra.mxu0 0.0
  %4667 = vmatprep.subr.mxu0 0.0
  %4668 = vmatpush2.msra.mxu0 0.0
  %4669 = vmatprep.subr.mxu0 0.0
  %4670 = vmatpush2.msra.mxu0 0.0
  %4671 = vmatprep.subr.mxu0 0.0
  %4672 = vmatpush2.msra.mxu0 0.0
  %4673 = vmatprep.subr.mxu0 0.0
  %4674 = vmatpush2.msra.mxu0 0.0
  %4675 = vmatprep.subr.mxu0 0.0
  %4676 = vmatpush2.msra.mxu0 0.0
  %4677 = vmatprep.mubr.f32.mxu0 0.0
  %4678 = vmatmul.mubr.f32.gmra.mxu0 %v1600
  %v4679 = vpop.f32.mrf.mxu0
  %v4680 = vadd.f32 0.0, %v4679
  %v4681 = vpop.f32.mrf.mxu0
  %4682 = vdwg.mxu0
  %4683 = vmatprep.subr.mxu0 0.0
  %4684 = vmatpush1.msra.mxu0 0.0
  %4685 = vmatprep.subr.mxu0 0.0
  %4686 = vmatpush1.msra.mxu0 0.0
  %4687 = vmatprep.subr.mxu0 0.0
  %4688 = vmatpush1.msra.mxu0 0.0
  %4689 = vmatprep.subr.mxu0 0.0
  %4690 = vmatpush1.msra.mxu0 0.0
  %4691 = vmatprep.subr.mxu0 0.0
  %4692 = vmatpush1.msra.mxu0 0.0
  %4693 = vmatprep.subr.mxu0 0.0
  %4694 = vmatpush1.msra.mxu0 0.0
  %4695 = vmatprep.subr.mxu0 0.0
  %4696 = vmatpush1.msra.mxu0 0.0
  %4697 = vmatprep.subr.mxu0 0.0
  %4698 = vmatpush1.msra.mxu0 0.0
  %4699 = vmatprep.subr.mxu0 0.0
  %4700 = vmatpush1.msra.mxu0 0.0
  %4701 = vmatprep.subr.mxu0 0.0
  %4702 = vmatpush1.msra.mxu0 0.0
  %4703 = vmatprep.subr.mxu0 0.0
  %4704 = vmatpush1.msra.mxu0 0.0
  %4705 = vmatprep.subr.mxu0 0.0
  %4706 = vmatpush1.msra.mxu0 0.0
  %4707 = vmatprep.subr.mxu0 0.0
  %4708 = vmatpush1.msra.mxu0 0.0
  %4709 = vmatprep.subr.mxu0 0.0
  %4710 = vmatpush1.msra.mxu0 0.0
  %4711 = vmatprep.subr.mxu0 0.0
  %4712 = vmatpush1.msra.mxu0 %v3383
  %4713 = vmatprep.subr.mxu0 0.0
  %4714 = vmatpush1.msra.mxu0 %v3382
  %4715 = vmatprep.subr.mxu0 0.0
  %4716 = vmatpush2.msra.mxu0 0.0
  %4717 = vmatprep.subr.mxu0 0.0
  %4718 = vmatpush2.msra.mxu0 0.0
  %4719 = vmatprep.subr.mxu0 0.0
  %4720 = vmatpush2.msra.mxu0 0.0
  %4721 = vmatprep.subr.mxu0 0.0
  %4722 = vmatpush2.msra.mxu0 0.0
  %4723 = vmatprep.subr.mxu0 0.0
  %4724 = vmatpush2.msra.mxu0 0.0
  %4725 = vmatprep.subr.mxu0 0.0
  %4726 = vmatpush2.msra.mxu0 0.0
  %4727 = vmatprep.subr.mxu0 0.0
  %4728 = vmatpush2.msra.mxu0 0.0
  %4729 = vmatprep.subr.mxu0 0.0
  %4730 = vmatpush2.msra.mxu0 0.0
  %4731 = vmatprep.subr.mxu0 0.0
  %4732 = vmatpush2.msra.mxu0 0.0
  %4733 = vmatprep.subr.mxu0 0.0
  %4734 = vmatpush2.msra.mxu0 0.0
  %4735 = vmatprep.subr.mxu0 0.0
  %4736 = vmatpush2.msra.mxu0 0.0
  %4737 = vmatprep.subr.mxu0 0.0
  %4738 = vmatpush2.msra.mxu0 0.0
  %4739 = vmatprep.subr.mxu0 0.0
  %4740 = vmatpush2.msra.mxu0 0.0
  %4741 = vmatprep.subr.mxu0 0.0
  %4742 = vmatpush2.msra.mxu0 0.0
  %4743 = vmatprep.subr.mxu0 0.0
  %4744 = vmatpush2.msra.mxu0 0.0
  %4745 = vmatprep.subr.mxu0 0.0
  %4746 = vmatpush2.msra.mxu0 0.0
  %4747 = vmatprep.mubr.f32.mxu0 0.0
  %4748 = vmatmul.mubr.f32.gmra.mxu0 %v1600
  %v4749 = vpop.f32.mrf.mxu0
  %v4750 = vadd.f32 %v4680, %v4749
  %v4751 = vpop.f32.mrf.mxu0
  %4752 = vdwg.mxu0
  %s4753 = scalar_lea.vmem %s11, 16
  %4754 = vst [vmem:[%s4753] sm:$0xff] %v4469
  %4755 = vst [vmem:[%s4753 + $0x8] sm:$0xff] %v4470
  %4756 = vmatprep.subr.mxu0 0.0
  %4757 = vmatpush1.msra.mxu0 %v56
  %4758 = vmatprep.subr.mxu0 0.0
  %4759 = vmatpush1.msra.mxu0 %v55
  %4760 = vmatprep.subr.mxu0 0.0
  %4761 = vmatpush1.msra.mxu0 %v54
  %4762 = vmatprep.subr.mxu0 0.0
  %4763 = vmatpush1.msra.mxu0 %v53
  %4764 = vmatprep.subr.mxu0 0.0
  %4765 = vmatpush1.msra.mxu0 %v52
  %4766 = vmatprep.subr.mxu0 0.0
  %4767 = vmatpush1.msra.mxu0 %v51
  %4768 = vmatprep.subr.mxu0 0.0
  %4769 = vmatpush1.msra.mxu0 %v50
  %4770 = vmatprep.subr.mxu0 0.0
  %4771 = vmatpush1.msra.mxu0 %v49
  %4772 = vmatprep.subr.mxu0 0.0
  %4773 = vmatpush1.msra.mxu0 %v48
  %4774 = vmatprep.subr.mxu0 0.0
  %4775 = vmatpush1.msra.mxu0 %v47
  %4776 = vmatprep.subr.mxu0 0.0
  %4777 = vmatpush1.msra.mxu0 %v46
  %4778 = vmatprep.subr.mxu0 0.0
  %4779 = vmatpush1.msra.mxu0 %v45
  %4780 = vmatprep.subr.mxu0 0.0
  %4781 = vmatpush1.msra.mxu0 %v44
  %4782 = vmatprep.subr.mxu0 0.0
  %4783 = vmatpush1.msra.mxu0 %v43
  %4784 = vmatprep.subr.mxu0 0.0
  %4785 = vmatpush1.msra.mxu0 %v42
  %4786 = vmatprep.subr.mxu0 0.0
  %4787 = vmatpush1.msra.mxu0 %v41
  %4788 = vmatprep.subr.mxu0 0.0
  %4789 = vmatpush2.msra.mxu0 0.0
  %4790 = vmatprep.subr.mxu0 0.0
  %4791 = vmatpush2.msra.mxu0 0.0
  %4792 = vmatprep.subr.mxu0 0.0
  %4793 = vmatpush2.msra.mxu0 0.0
  %4794 = vmatprep.subr.mxu0 0.0
  %4795 = vmatpush2.msra.mxu0 0.0
  %4796 = vmatprep.subr.mxu0 0.0
  %4797 = vmatpush2.msra.mxu0 0.0
  %4798 = vmatprep.subr.mxu0 0.0
  %4799 = vmatpush2.msra.mxu0 0.0
  %4800 = vmatprep.subr.mxu0 0.0
  %4801 = vmatpush2.msra.mxu0 0.0
  %4802 = vmatprep.subr.mxu0 0.0
  %4803 = vmatpush2.msra.mxu0 0.0
  %4804 = vmatprep.subr.mxu0 0.0
  %4805 = vmatpush2.msra.mxu0 0.0
  %4806 = vmatprep.subr.mxu0 0.0
  %4807 = vmatpush2.msra.mxu0 0.0
  %4808 = vmatprep.subr.mxu0 0.0
  %4809 = vmatpush2.msra.mxu0 0.0
  %4810 = vmatprep.subr.mxu0 0.0
  %4811 = vmatpush2.msra.mxu0 0.0
  %4812 = vmatprep.subr.mxu0 0.0
  %4813 = vmatpush2.msra.mxu0 0.0
  %4814 = vmatprep.subr.mxu0 0.0
  %4815 = vmatpush2.msra.mxu0 0.0
  %4816 = vmatprep.subr.mxu0 0.0
  %4817 = vmatpush2.msra.mxu0 0.0
  %4818 = vmatprep.subr.mxu0 0.0
  %4819 = vmatpush2.msra.mxu0 0.0
  %4820 = vmatprep.mubr.f32.mxu0 0.0
  %4821 = vmatmul.mubr.f32.gmra.mxu0 %v4608
  %v4822 = vpop.f32.mrf.mxu0
  %v4823 = vadd.f32 0.0, %v4822
  %v4824 = vpop.f32.mrf.mxu0
  %4825 = vdwg.mxu0
  %4826 = vmatprep.subr.mxu0 0.0
  %4827 = vmatpush1.msra.mxu0 %v56
  %4828 = vmatprep.subr.mxu0 0.0
  %4829 = vmatpush1.msra.mxu0 %v55
  %4830 = vmatprep.subr.mxu0 0.0
  %4831 = vmatpush1.msra.mxu0 %v54
  %4832 = vmatprep.subr.mxu0 0.0
  %4833 = vmatpush1.msra.mxu0 %v53
  %4834 = vmatprep.subr.mxu0 0.0
  %4835 = vmatpush1.msra.mxu0 %v52
  %4836 = vmatprep.subr.mxu0 0.0
  %4837 = vmatpush1.msra.mxu0 %v51
  %4838 = vmatprep.subr.mxu0 0.0
  %4839 = vmatpush1.msra.mxu0 %v50
  %4840 = vmatprep.subr.mxu0 0.0
  %4841 = vmatpush1.msra.mxu0 %v49
  %4842 = vmatprep.subr.mxu0 0.0
  %4843 = vmatpush1.msra.mxu0 %v48
  %4844 = vmatprep.subr.mxu0 0.0
  %4845 = vmatpush1.msra.mxu0 %v47
  %4846 = vmatprep.subr.mxu0 0.0
  %4847 = vmatpush1.msra.mxu0 %v46
  %4848 = vmatprep.subr.mxu0 0.0
  %4849 = vmatpush1.msra.mxu0 %v45
  %4850 = vmatprep.subr.mxu0 0.0
  %4851 = vmatpush1.msra.mxu0 %v44
  %4852 = vmatprep.subr.mxu0 0.0
  %4853 = vmatpush1.msra.mxu0 %v43
  %4854 = vmatprep.subr.mxu0 0.0
  %4855 = vmatpush1.msra.mxu0 %v42
  %4856 = vmatprep.subr.mxu0 0.0
  %4857 = vmatpush1.msra.mxu0 %v41
  %4858 = vmatprep.subr.mxu0 0.0
  %4859 = vmatpush2.msra.mxu0 0.0
  %4860 = vmatprep.subr.mxu0 0.0
  %4861 = vmatpush2.msra.mxu0 0.0
  %4862 = vmatprep.subr.mxu0 0.0
  %4863 = vmatpush2.msra.mxu0 0.0
  %4864 = vmatprep.subr.mxu0 0.0
  %4865 = vmatpush2.msra.mxu0 0.0
  %4866 = vmatprep.subr.mxu0 0.0
  %4867 = vmatpush2.msra.mxu0 0.0
  %4868 = vmatprep.subr.mxu0 0.0
  %4869 = vmatpush2.msra.mxu0 0.0
  %4870 = vmatprep.subr.mxu0 0.0
  %4871 = vmatpush2.msra.mxu0 0.0
  %4872 = vmatprep.subr.mxu0 0.0
  %4873 = vmatpush2.msra.mxu0 0.0
  %4874 = vmatprep.subr.mxu0 0.0
  %4875 = vmatpush2.msra.mxu0 0.0
  %4876 = vmatprep.subr.mxu0 0.0
  %4877 = vmatpush2.msra.mxu0 0.0
  %4878 = vmatprep.subr.mxu0 0.0
  %4879 = vmatpush2.msra.mxu0 0.0
  %4880 = vmatprep.subr.mxu0 0.0
  %4881 = vmatpush2.msra.mxu0 0.0
  %4882 = vmatprep.subr.mxu0 0.0
  %4883 = vmatpush2.msra.mxu0 0.0
  %4884 = vmatprep.subr.mxu0 0.0
  %4885 = vmatpush2.msra.mxu0 0.0
  %4886 = vmatprep.subr.mxu0 0.0
  %4887 = vmatpush2.msra.mxu0 0.0
  %4888 = vmatprep.subr.mxu0 0.0
  %4889 = vmatpush2.msra.mxu0 0.0
  %4890 = vmatprep.mubr.f32.mxu0 0.0
  %4891 = vmatmul.mubr.f32.gmra.mxu0 %v4750
  %v4892 = vpop.f32.mrf.mxu0
  %v4893 = vadd.f32 0.0, %v4892
  %v4894 = vpop.f32.mrf.mxu0
  %4895 = vdwg.mxu0
  %v4896 = vmul.f32 %v4823, 0.001953125
  %v4897 = vmul.f32 %v4893, 0.001953125
  %v4898 = vmul.f32 %v4896, %v4896
  %v4899 = vsub.f32 %v4897, %v4898
  %v4900 = vmax.f32 %v4899, 0.0
  %v4901 = vld [vmem:[%s7] sm:$0x1]
  %v4902 = vadd.f32 %v4900, 1e-05
  %v4903 = vrsqrt.pop %v4902
  %v4904 = vmul.f32 %v4901, %v4903
  %v4905 = vld [vmem:[%s8] sm:$0x1]
  %v4906 = vmul.f32 %v4896, %v4904
  %v4907 = vsub.f32 %v4905, %v4906
  %v4909 = vsel %vm855, %v4904, 0
  %4911 = vmatprep.subr.mxu0 0.0
  %4912 = vmatpush1.msra.mxu0 0.0
  %4913 = vmatprep.subr.mxu0 0.0
  %4914 = vmatpush1.msra.mxu0 0.0
  %4915 = vmatprep.subr.mxu0 0.0
  %4916 = vmatpush1.msra.mxu0 0.0
  %4917 = vmatprep.subr.mxu0 0.0
  %4918 = vmatpush1.msra.mxu0 0.0
  %4919 = vmatprep.subr.mxu0 0.0
  %4920 = vmatpush1.msra.mxu0 0.0
  %4921 = vmatprep.subr.mxu0 0.0
  %4922 = vmatpush1.msra.mxu0 0.0
  %4923 = vmatprep.subr.mxu0 0.0
  %4924 = vmatpush1.msra.mxu0 0.0
  %4925 = vmatprep.subr.mxu0 0.0
  %4926 = vmatpush1.msra.mxu0 0.0
  %4927 = vmatprep.subr.mxu0 0.0
  %4928 = vmatpush1.msra.mxu0 0.0
  %4929 = vmatprep.subr.mxu0 0.0
  %4930 = vmatpush1.msra.mxu0 0.0
  %4931 = vmatprep.subr.mxu0 0.0
  %4932 = vmatpush1.msra.mxu0 0.0
  %4933 = vmatprep.subr.mxu0 0.0
  %4934 = vmatpush1.msra.mxu0 0.0
  %4935 = vmatprep.subr.mxu0 0.0
  %4936 = vmatpush1.msra.mxu0 0.0
  %4937 = vmatprep.subr.mxu0 0.0
  %4938 = vmatpush1.msra.mxu0 0.0
  %4939 = vmatprep.subr.mxu0 0.0
  %4940 = vmatpush1.msra.mxu0 0.0
  %4941 = vmatprep.subr.mxu0 0.0
  %4942 = vmatpush1.msra.mxu0 %v57
  %4943 = vmatprep.subr.mxu0 0.0
  %4944 = vmatpush2.msra.mxu0 0.0
  %4945 = vmatprep.subr.mxu0 0.0
  %4946 = vmatpush2.msra.mxu0 0.0
  %4947 = vmatprep.subr.mxu0 0.0
  %4948 = vmatpush2.msra.mxu0 0.0
  %4949 = vmatprep.subr.mxu0 0.0
  %4950 = vmatpush2.msra.mxu0 0.0
  %4951 = vmatprep.subr.mxu0 0.0
  %4952 = vmatpush2.msra.mxu0 0.0
  %4953 = vmatprep.subr.mxu0 0.0
  %4954 = vmatpush2.msra.mxu0 0.0
  %4955 = vmatprep.subr.mxu0 0.0
  %4956 = vmatpush2.msra.mxu0 0.0
  %4957 = vmatprep.subr.mxu0 0.0
  %4958 = vmatpush2.msra.mxu0 0.0
  %4959 = vmatprep.subr.mxu0 0.0
  %4960 = vmatpush2.msra.mxu0 0.0
  %4961 = vmatprep.subr.mxu0 0.0
  %4962 = vmatpush2.msra.mxu0 0.0
  %4963 = vmatprep.subr.mxu0 0.0
  %4964 = vmatpush2.msra.mxu0 0.0
  %4965 = vmatprep.subr.mxu0 0.0
  %4966 = vmatpush2.msra.mxu0 0.0
  %4967 = vmatprep.subr.mxu0 0.0
  %4968 = vmatpush2.msra.mxu0 0.0
  %4969 = vmatprep.subr.mxu0 0.0
  %4970 = vmatpush2.msra.mxu0 0.0
  %4971 = vmatprep.subr.mxu0 0.0
  %4972 = vmatpush2.msra.mxu0 0.0
  %4973 = vmatprep.subr.mxu0 0.0
  %4974 = vmatpush2.msra.mxu0 0.0
  %4975 = vmatprep.mubr.f32.mxu0 0.0
  %4976 = vmatmul.mubr.f32.gmra.mxu0 %v4909
  %v4977 = vpop.f32.mrf.mxu0
  %v4978 = vadd.f32 0.0, %v4977
  %v4979 = vpop.f32.mrf.mxu0
  %4980 = vdwg.mxu0
  %v4982 = vsel %vm855, %v4907, 0
  %4984 = vmatprep.subr.mxu0 0.0
  %4985 = vmatpush1.msra.mxu0 0.0
  %4986 = vmatprep.subr.mxu0 0.0
  %4987 = vmatpush1.msra.mxu0 0.0
  %4988 = vmatprep.subr.mxu0 0.0
  %4989 = vmatpush1.msra.mxu0 0.0
  %4990 = vmatprep.subr.mxu0 0.0
  %4991 = vmatpush1.msra.mxu0 0.0
  %4992 = vmatprep.subr.mxu0 0.0
  %4993 = vmatpush1.msra.mxu0 0.0
  %4994 = vmatprep.subr.mxu0 0.0
  %4995 = vmatpush1.msra.mxu0 0.0
  %4996 = vmatprep.subr.mxu0 0.0
  %4997 = vmatpush1.msra.mxu0 0.0
  %4998 = vmatprep.subr.mxu0 0.0
  %4999 = vmatpush1.msra.mxu0 0.0
  %5000 = vmatprep.subr.mxu0 0.0
  %5001 = vmatpush1.msra.mxu0 0.0
  %5002 = vmatprep.subr.mxu0 0.0
  %5003 = vmatpush1.msra.mxu0 0.0
  %5004 = vmatprep.subr.mxu0 0.0
  %5005 = vmatpush1.msra.mxu0 0.0
  %5006 = vmatprep.subr.mxu0 0.0
  %5007 = vmatpush1.msra.mxu0 0.0
  %5008 = vmatprep.subr.mxu0 0.0
  %5009 = vmatpush1.msra.mxu0 0.0
  %5010 = vmatprep.subr.mxu0 0.0
  %5011 = vmatpush1.msra.mxu0 0.0
  %5012 = vmatprep.subr.mxu0 0.0
  %5013 = vmatpush1.msra.mxu0 0.0
  %5014 = vmatprep.subr.mxu0 0.0
  %5015 = vmatpush1.msra.mxu0 %v57
  %5016 = vmatprep.subr.mxu0 0.0
  %5017 = vmatpush2.msra.mxu0 0.0
  %5018 = vmatprep.subr.mxu0 0.0
  %5019 = vmatpush2.msra.mxu0 0.0
  %5020 = vmatprep.subr.mxu0 0.0
  %5021 = vmatpush2.msra.mxu0 0.0
  %5022 = vmatprep.subr.mxu0 0.0
  %5023 = vmatpush2.msra.mxu0 0.0
  %5024 = vmatprep.subr.mxu0 0.0
  %5025 = vmatpush2.msra.mxu0 0.0
  %5026 = vmatprep.subr.mxu0 0.0
  %5027 = vmatpush2.msra.mxu0 0.0
  %5028 = vmatprep.subr.mxu0 0.0
  %5029 = vmatpush2.msra.mxu0 0.0
  %5030 = vmatprep.subr.mxu0 0.0
  %5031 = vmatpush2.msra.mxu0 0.0
  %5032 = vmatprep.subr.mxu0 0.0
  %5033 = vmatpush2.msra.mxu0 0.0
  %5034 = vmatprep.subr.mxu0 0.0
  %5035 = vmatpush2.msra.mxu0 0.0
  %5036 = vmatprep.subr.mxu0 0.0
  %5037 = vmatpush2.msra.mxu0 0.0
  %5038 = vmatprep.subr.mxu0 0.0
  %5039 = vmatpush2.msra.mxu0 0.0
  %5040 = vmatprep.subr.mxu0 0.0
  %5041 = vmatpush2.msra.mxu0 0.0
  %5042 = vmatprep.subr.mxu0 0.0
  %5043 = vmatpush2.msra.mxu0 0.0
  %5044 = vmatprep.subr.mxu0 0.0
  %5045 = vmatpush2.msra.mxu0 0.0
  %5046 = vmatprep.subr.mxu0 0.0
  %5047 = vmatpush2.msra.mxu0 0.0
  %5048 = vmatprep.mubr.f32.mxu0 0.0
  %5049 = vmatmul.mubr.f32.gmra.mxu0 %v4982
  %v5050 = vpop.f32.mrf.mxu0
  %v5051 = vadd.f32 0.0, %v5050
  %v5052 = vpop.f32.mrf.mxu0
  %5053 = vdwg.mxu0
  %v5054 = vld [vmem:[%s11] sm:$0xff]
  %v5055 = vld [vmem:[%s11 + $0x8] sm:$0xff]
  %v5056 = vld [vmem:[%s11 + $0x10] sm:$0xff]
  %v5057 = vld [vmem:[%s11 + $0x18] sm:$0xff]
  %v5058 = vlaneseq
  %v5059 = vshrl.u32 %v5058, 7
  %v5060 = vsub.s32 0, %v5059
  %v5061 = vrot.slane %v4978, %v5060
  %v5062 = vmul.f32 %v5054, %v5061
  %v5063 = vmul.f32 %v5055, %v5061
  %v5064 = vmul.f32 %v5056, %v5061
  %v5065 = vmul.f32 %v5057, %v5061
  %v5066 = vlaneseq
  %v5067 = vshrl.u32 %v5066, 7
  %v5068 = vsub.s32 0, %v5067
  %v5069 = vrot.slane %v5051, %v5068
  %v5070 = vadd.f32 %v5062, %v5069
  %v5071 = vadd.f32 %v5063, %v5069
  %v5072 = vadd.f32 %v5064, %v5069
  %v5073 = vadd.f32 %v5065, %v5069
  %v5074 = vmax.f32 %v5070, 0.0
  %v5075 = vmax.f32 %v5071, 0.0
  %v5076 = vmax.f32 %v5072, 0.0
  %v5077 = vmax.f32 %v5073, 0.0
  %5078 = vst [vmem:[%s11] sm:$0xff] %v5074
  %5079 = vst [vmem:[%s11 + $0x8] sm:$0xff] %v5075
  %5080 = vst [vmem:[%s11 + $0x10] sm:$0xff] %v5076
  %5081 = vst [vmem:[%s11 + $0x18] sm:$0xff] %v5077
  // Predicated region
  $region46: #{conv_block_forward.1} parent=0 // pred_check
    _
  $region47: #{conv_block_forward.1} parent=0 // pred_check_branch
    %5083 = sbr.rel (0) target = $region49
  $region48: #{conv_block_forward.1} parent=0 // pred_region
    _
  $region49: #{conv_block_forward.1} parent=0 // pred_fallthru
    _
  // Predicated region
  $region50: #{conv_block_forward.1} parent=0 // pred_check
    _
  $region51: #{conv_block_forward.1} parent=0 // pred_check_branch
    %5085 = sbr.rel (0) target = $region53
  $region52: #{conv_block_forward.1} parent=0 // pred_region
    _
  $region53: #{conv_block_forward.1} parent=0 // pred_fallthru
    _

</llo_original>
